<compile_context>
chip_gen: v7x
topology: tpu7x:2x2x1
jax: 0.10.0
libtpu: 0.0.40
codegen_flags: <defaults>
</compile_context>

<pallas_src>
import functools
import math

import jax
import jax.numpy as jnp
from jax import lax
from jax.experimental import pallas as pl
from jax.experimental.pallas import tpu as pltpu


def _round_up(x, m):
    return -(-x // m) * m


def _conv3x3_chunk(buf_ref, base, rows, w_ref, b, wl, wr, W2, mxu_dtype):
    """3x3 SAME conv (+bias+ReLU) for `rows` consecutive flattened pixels.

    buf_ref holds a zero-padded, flattened (window_rows, W2) image whose window
    starts one row ABOVE this stage's first output row, so the tap (dy, dx) for
    the chunk starting at buffer row `base` lives at base + (1+dy)*W2 + dx.
    wl / wr are (rows, 1) 0/1 masks killing the row-wrap taps for dx=-1 / dx=+1.
    """
    c = buf_ref.shape[1]
    cout = w_ref.shape[1]
    c3 = 3 * c
    acc = jnp.zeros((rows, cout), jnp.float32)
    for idy in range(3):                                        # dy = idy - 1
        row0 = base + idy * W2
        left = buf_ref[pl.ds(row0 - 1, rows), :] * wl
        mid = buf_ref[pl.ds(row0, rows), :]
        right = buf_ref[pl.ds(row0 + 1, rows), :] * wr
        lhs = jnp.concatenate([left, mid, right], axis=1).astype(mxu_dtype)
        w_dy = w_ref[pl.ds(idy * c3, c3), :]                    # (3*C, Cout)
        acc = acc + jnp.dot(lhs, w_dy, preferred_element_type=jnp.float32)
    return jnp.maximum(acc + b, 0.0)


def _decoder_kernel(xup_ref, skip_ref, mask_ref, wt_ref, bt_ref,
                    w1_ref, b1_ref, w2_ref, b2_ref, out_ref,
                    a1_buf, h1_buf, *,
                    W2, BUF_S, H1_S, OUT_S, PA, ROWS, skip_mode, mxu_dtype):
    s = pl.program_id(1)
    ns = pl.num_programs(1)
    cin = xup_ref.shape[-1]
    ccat = a1_buf.shape[1]
    cmid = h1_buf.shape[1]

    # Zero the small alignment/underflow padding rows (never written below).
    # Done every step: grid axes are 'parallel', each core owns its scratch.
    a1_buf[pl.ds(0, PA), :] = jnp.zeros((PA, ccat), jnp.float32)
    a1_buf[pl.ds(PA + BUF_S, PA), :] = jnp.zeros((PA, ccat), jnp.float32)
    h1_buf[pl.ds(0, PA), :] = jnp.zeros((PA, cmid), jnp.float32)
    h1_buf[pl.ds(PA + H1_S, PA), :] = jnp.zeros((PA, cmid), jnp.float32)

    def run_chunks(size, body):
        """Fixed-size ROWS chunks with a clamped (overlapping) tail chunk."""
        n_chunks = -(-size // ROWS)
        if size % ROWS == 0:
            def step(t, carry):
                body(pl.multiple_of(t * ROWS, ROWS))
                return carry
        else:
            g = math.gcd(ROWS, size)
            def step(t, carry):
                r0 = jnp.minimum(t * ROWS, size - ROWS)
                body(pl.multiple_of(r0, g))
                return carry
        lax.fori_loop(0, n_chunks, step, 0)

    # ---- stage 1: ConvTranspose2d(k=2,s=2) + ReLU, skip merge -> a1_buf ----
    def stage1(r0):
        xs = xup_ref[0, 0, pl.ds(r0, ROWS), :]                  # (ROWS, Cin)
        # Fold the 2x2 output-parity selection with 0/1 masks (no zero-expanded
        # input in HBM); one dense matmul of depth 4*Cin.
        parts = [xs * mask_ref[pl.ds(r0, ROWS), pl.ds(k, 1)] for k in range(4)]
        lhs = jnp.concatenate(parts, axis=1).astype(mxu_dtype)  # (ROWS, 4*Cin)
        u = jnp.dot(lhs, wt_ref[...], preferred_element_type=jnp.float32)
        u = jnp.maximum(u + bt_ref[...], 0.0)                   # (ROWS, Cup)
        sk = skip_ref[0, 0, pl.ds(r0, ROWS), :]
        if skip_mode == 'cat':
            # TODO(synk): with Cup padded to a 128 multiple, split into two
            # lane-subrange stores to avoid the concat temp.
            a1 = jnp.concatenate([u, sk], axis=1)
        else:                                                   # 'sum'
            a1 = u + sk
        a1_buf[pl.ds(PA + r0, ROWS), :] = a1                    # aligned slab

    run_chunks(BUF_S, stage1)

    # Image-boundary halo rows of the merged activation are conv1's SAME zero
    # padding: they must be 0, not relu(bias).  Overwrite for edge strips.
    @pl.when(s == 0)
    def _():
        a1_buf[pl.ds(PA, 2 * W2), :] = jnp.zeros((2 * W2, ccat), jnp.float32)

    @pl.when(s == ns - 1)
    def _():
        a1_buf[pl.ds(PA + BUF_S - 2 * W2, 2 * W2), :] = (
            jnp.zeros((2 * W2, ccat), jnp.float32))

    # ---- stage 2: conv3x3 + bias + ReLU -> h1_buf --------------------------
    def stage2(r0):
        wl = mask_ref[pl.ds(r0, ROWS), pl.ds(4, 1)]
        wr = mask_ref[pl.ds(r0, ROWS), pl.ds(5, 1)]
        h1 = _conv3x3_chunk(a1_buf, PA + r0, ROWS, w1_ref, b1_ref[...],
                            wl, wr, W2, mxu_dtype)
        h1_buf[pl.ds(PA + r0, ROWS), :] = h1

    run_chunks(H1_S, stage2)

    # conv2's SAME zero padding (h1 outside the image must be 0).
    @pl.when(s == 0)
    def _():
        h1_buf[pl.ds(PA, W2), :] = jnp.zeros((W2, cmid), jnp.float32)

    @pl.when(s == ns - 1)
    def _():
        h1_buf[pl.ds(PA + H1_S - W2, W2), :] = jnp.zeros((W2, cmid), jnp.float32)

    # ---- stage 3: conv3x3 + bias + ReLU -> output strip --------------------
    def stage3(r0):
        wl = mask_ref[pl.ds(r0, ROWS), pl.ds(4, 1)]
        wr = mask_ref[pl.ds(r0, ROWS), pl.ds(5, 1)]
        h2 = _conv3x3_chunk(h1_buf, PA + r0, ROWS, w2_ref, b2_ref[...],
                            wl, wr, W2, mxu_dtype)
        out_ref[0, 0, pl.ds(r0, ROWS), :] = h2.astype(out_ref.dtype)

    run_chunks(OUT_S, stage3)


def _pick_strip_rows(h2, w2):
    """Smallest even divisor of h2 with >= ~1024 output pixels per strip."""
    best = h2
    for d in range(2, h2 + 1, 2):
        if h2 % d == 0:
            best = d
            if d * w2 >= 1024:
                return d
    return best


def _pick_rows(out_s, cout):
    tgt = 256 if cout <= 128 else 128        # v6e/v7x 2x256^2 MXU; vreg-gated
    return max(8, min(tgt, out_s))


def decoder_block(x_nchw, skip_nchw, wt, bt, w1, b1, w2, b2,
                  skip_mode='cat', mxu_dtype=None, strip_rows=None):
    """DecoderBlock forward, NCHW in / NCHW out (PyTorch semantics).

    wt: (Cin, Cup, 2, 2)   ConvTranspose2d weight (PyTorch layout), bt: (Cup,)
    w1: (3, 3, Ccat, Cmid) HWIO conv1 weight, b1: (Cmid,)
    w2: (3, 3, Cmid, Cout) HWIO conv2 weight, b2: (Cout,)
    mxu_dtype: optional dtype (e.g. jnp.bfloat16) for MXU operands only;
               activations / accumulation stay float32.
    """
    if skip_mode not in ('cat', 'sum'):
        raise ValueError('skip_mode must be one of ("cat","sum")')
    N, Cin, H, W = x_nchw.shape
    H2, W2 = 2 * H, 2 * W
    Cup = wt.shape[1]
    Cskip = skip_nchw.shape[1]
    Ccat = Cup + Cskip if skip_mode == 'cat' else Cup
    if skip_mode == 'sum':
        assert Cskip == Cup
    Cmid = w1.shape[3]
    Cout = w2.shape[3]
    assert wt.shape == (Cin, Cup, 2, 2)
    assert w1.shape == (3, 3, Ccat, Cmid)
    assert w2.shape == (3, 3, Cmid, Cout)
    sh, sw = skip_nchw.shape[2], skip_nchw.shape[3]
    assert sh >= H2 and sw >= W2
    mxu = jnp.float32 if mxu_dtype is None else jnp.dtype(mxu_dtype)

    # ----------------- wrapper-side layout prep (pure data movement) --------
    # Nearest 2x replication of X, channels-last (NO parity-zero expansion).
    x_nhwc = jnp.transpose(x_nchw, (0, 2, 3, 1)).astype(jnp.float32)
    xup = jnp.repeat(jnp.repeat(x_nhwc, 2, axis=1), 2, axis=2)   # (N,H2,W2,Cin)

    # Center-crop the skip to the upsampled size, channels-last.
    r0 = (sh - H2) // 2
    c0 = (sw - W2) // 2
    skip_c = jnp.transpose(skip_nchw[:, :, r0:r0 + H2, c0:c0 + W2],
                           (0, 2, 3, 1)).astype(jnp.float32)     # (N,H2,W2,Cskip)

    # H-strip tiling: strip = TH output rows + 2-row halo each side.
    if strip_rows is None:
        TH = _pick_strip_rows(H2, W2)
    else:
        TH = int(strip_rows)
        assert TH % 2 == 0 and H2 % TH == 0, 'strip_rows must be even and divide 2*H'
    ns = H2 // TH
    BUF_R = TH + 4
    BUF_S = BUF_R * W2              # merged-activation window (flattened pixels)
    H1_S = (TH + 2) * W2            # conv1-output window
    OUT_S = TH * W2                 # output window

    xup_p = jnp.pad(xup, ((0, 0), (2, 2), (0, 0), (0, 0)))
    skp_p = jnp.pad(skip_c, ((0, 0), (2, 2), (0, 0), (0, 0)))
    xup_s = jnp.stack([xup_p[:, t * TH:t * TH + BUF_R] for t in range(ns)],
                      axis=1).reshape(N, ns, BUF_S, Cin)
    skp_s = jnp.stack([skp_p[:, t * TH:t * TH + BUF_R] for t in range(ns)],
                      axis=1).reshape(N, ns, BUF_S, Cskip)

    # Per-strip-window mask table (identical for every strip since TH is even):
    # columns [parity0..3 | left-tap valid | right-tap valid | pad | pad].
    q = jnp.arange(BUF_S)
    gw = q % W2
    par = 2 * ((q // W2) % 2) + (gw % 2)
    mask_cols = [(par == k).astype(jnp.float32) for k in range(4)]
    mask_cols += [(gw > 0).astype(jnp.float32),
                  (gw < W2 - 1).astype(jnp.float32),
                  jnp.zeros((BUF_S,), jnp.float32),
                  jnp.zeros((BUF_S,), jnp.float32)]
    masks = jnp.stack(mask_cols, axis=1)                          # (BUF_S, 8)

    # Weights: transposed-conv weight stacked by output parity (k = 2a+b); 3x3
    # conv weights flattened (ky, kx, cin)-major to match the lane-concat taps.
    wt_stack = jnp.transpose(wt, (2, 3, 0, 1)).reshape(4 * Cin, Cup).astype(mxu)
    w1_flat = w1.reshape(9 * Ccat, Cmid).astype(mxu)
    w2_flat = w2.reshape(9 * Cmid, Cout).astype(mxu)
    bt_r = bt.reshape(1, Cup).astype(jnp.float32)
    b1_r = b1.reshape(1, Cmid).astype(jnp.float32)
    b2_r = b2.reshape(1, Cout).astype(jnp.float32)

    ROWS = _pick_rows(OUT_S, Cout)
    PA = 8                                    # aligned padding rows (top/bottom)

    # Explicit scoped-VMEM budget: scratches + double-buffered blocks + slack.
    def vbytes(rows, cols, itemsize=4):
        return _round_up(rows, 8) * _round_up(cols, 128) * itemsize
    wsz = jnp.dtype(mxu).itemsize
    need = (2 * (vbytes(BUF_S, Cin) + vbytes(BUF_S, Cskip) + vbytes(OUT_S, Cout))
            + vbytes(BUF_S, 8)
            + 2 * (vbytes(4 * Cin, Cup, wsz) + vbytes(9 * Ccat, Cmid, wsz)
                   + vbytes(9 * Cmid, Cout, wsz) + 3 * vbytes(1, 128))
            + vbytes(2 * PA + BUF_S, Ccat) + vbytes(2 * PA + H1_S, Cmid))
    vmem_limit = int(min(max(2 * need, 32 * 2 ** 20), 120 * 2 ** 20))

    kernel = functools.partial(
        _decoder_kernel, W2=W2, BUF_S=BUF_S, H1_S=H1_S, OUT_S=OUT_S, PA=PA,
        ROWS=ROWS, skip_mode=skip_mode, mxu_dtype=mxu)

    out = pl.pallas_call(
        kernel,
        grid=(N, ns),
        in_specs=[
            pl.BlockSpec((1, 1, BUF_S, Cin), lambda n, t: (n, t, 0, 0)),
            pl.BlockSpec((1, 1, BUF_S, Cskip), lambda n, t: (n, t, 0, 0)),
            pl.BlockSpec((BUF_S, 8), lambda n, t: (0, 0)),
            pl.BlockSpec((4 * Cin, Cup), lambda n, t: (0, 0)),
            pl.BlockSpec((1, Cup), lambda n, t: (0, 0)),
            pl.BlockSpec((9 * Ccat, Cmid), lambda n, t: (0, 0)),
            pl.BlockSpec((1, Cmid), lambda n, t: (0, 0)),
            pl.BlockSpec((9 * Cmid, Cout), lambda n, t: (0, 0)),
            pl.BlockSpec((1, Cout), lambda n, t: (0, 0)),
        ],
        out_specs=pl.BlockSpec((1, 1, OUT_S, Cout), lambda n, t: (n, t, 0, 0)),
        out_shape=jax.ShapeDtypeStruct((N, ns, OUT_S, Cout), jnp.float32),
        scratch_shapes=[
            pltpu.VMEM((2 * PA + BUF_S, Ccat), jnp.float32),  # merged activation
            pltpu.VMEM((2 * PA + H1_S, Cmid), jnp.float32),   # conv1 output
        ],
        compiler_params=pltpu.CompilerParams(
            dimension_semantics=("parallel", "parallel"),
            vmem_limit_bytes=vmem_limit),
    )(xup_s, skp_s, masks, wt_stack, bt_r, w1_flat, b1_r, w2_flat, b2_r)

    out = out.reshape(N, H2, W2, Cout)
    return jnp.transpose(out, (0, 3, 1, 2))


if __name__ == "__main__":
    key = jax.random.PRNGKey(0)
    ks = jax.random.split(key, 9)

    # Small shapes consistent with the module: X is a low-res feature map,
    # skip is the (larger) encoder activation, center-cropped by the block.
    N, Cin, H, W = 2, 4, 8, 8
    Cup = 8                        # convblock.out_channels (ConvTranspose2d out)
    Cskip = 8
    Hs, Ws = 18, 18                # exercises center_crop (crops to 16x16)
    Ccat = Cup + Cskip             # 'cat' skip mode
    Cmid = Cout = 8

    x = jax.random.normal(ks[0], (N, Cin, H, W), jnp.float32)
    skip = jax.random.normal(ks[1], (N, Cskip, Hs, Ws), jnp.float32)
    wt = jax.random.normal(ks[2], (Cin, Cup, 2, 2), jnp.float32) * 0.3
    bt = jax.random.normal(ks[3], (Cup,), jnp.float32) * 0.1
    w1 = jax.random.normal(ks[4], (3, 3, Ccat, Cmid), jnp.float32) * 0.2
    b1 = jax.random.normal(ks[5], (Cmid,), jnp.float32) * 0.1
    w2 = jax.random.normal(ks[6], (3, 3, Cmid, Cout), jnp.float32) * 0.2
    b2 = jax.random.normal(ks[7], (Cout,), jnp.float32) * 0.1
    w1s = jax.random.normal(ks[8], (3, 3, Cup, Cmid), jnp.float32) * 0.2

    H2, W2 = 2 * H, 2 * W

    # ----- pure-JAX reference (PyTorch semantics) -----
    def conv3x3_ref(xin, w_hwio, b):
        y_ = jax.lax.conv_general_dilated(
            xin, w_hwio, window_strides=(1, 1), padding='SAME',
            dimension_numbers=('NCHW', 'HWIO', 'NCHW'))
        return y_ + b[None, :, None, None]

    u = jnp.einsum('ncij,cdab->ndiajb', x, wt).reshape(N, Cup, H2, W2)
    u = jnp.maximum(u + bt[None, :, None, None], 0.0)
    rr, cc = (Hs - H2) // 2, (Ws - W2) // 2
    sc = skip[:, :, rr:rr + H2, cc:cc + W2]

    a_cat = jnp.concatenate([u, sc], axis=1)
    ref_cat = jnp.maximum(conv3x3_ref(a_cat, w1, b1), 0.0)
    ref_cat = jnp.maximum(conv3x3_ref(ref_cat, w2, b2), 0.0)

    a_sum = u + sc
    ref_sum = jnp.maximum(conv3x3_ref(a_sum, w1s, b1), 0.0)
    ref_sum = jnp.maximum(conv3x3_ref(ref_sum, w2, b2), 0.0)

    # ----- Pallas kernel: f32 path, multi-strip grid (2 strips per image) ---
    y_cat = decoder_block(x, skip, wt, bt, w1, b1, w2, b2, skip_mode='cat',
                          strip_rows=8)
    y_sum = decoder_block(x, skip, wt, bt, w1s, b1, w2, b2, skip_mode='sum',
                          strip_rows=8)
    # Default strip heuristic (single strip at this size).
    y_cat_full = decoder_block(x, skip, wt, bt, w1, b1, w2, b2, skip_mode='cat')
    jax.block_until_ready((y_cat, y_sum, y_cat_full))

    assert y_cat.shape == (N, Cout, H2, W2)
    err_cat = float(jnp.max(jnp.abs(y_cat - ref_cat)))
    err_sum = float(jnp.max(jnp.abs(y_sum - ref_sum)))
    err_full = float(jnp.max(jnp.abs(y_cat_full - ref_cat)))
    assert jnp.allclose(y_cat, ref_cat, atol=1e-4, rtol=1e-4), err_cat
    assert jnp.allclose(y_sum, ref_sum, atol=1e-4, rtol=1e-4), err_sum
    assert jnp.allclose(y_cat_full, ref_cat, atol=1e-4, rtol=1e-4), err_full

    # ----- bf16 MXU-operand path (f32 activations/accumulation), loose tol --
    y_bf16 = decoder_block(x, skip, wt, bt, w1, b1, w2, b2, skip_mode='cat',
                           mxu_dtype=jnp.bfloat16, strip_rows=8)
    jax.block_until_ready(y_bf16)
    err_bf16 = float(jnp.max(jnp.abs(y_bf16 - ref_cat)))
    assert jnp.allclose(y_bf16, ref_cat, atol=2e-1, rtol=2e-1), err_bf16

    print("KERNEL_OK")
</pallas_src>

<mosaic_0001>
module attributes {stable_mosaic.version = 11 : i64} {
  func.func @_decoder_kernel(%arg0: i32, %arg1: i32, %arg2: memref<1x1x192x4xf32, #tpu.memory_space<vmem>>, %arg3: memref<1x1x192x8xf32, #tpu.memory_space<vmem>>, %arg4: memref<192x8xf32, #tpu.memory_space<vmem>>, %arg5: memref<16x8xf32, #tpu.memory_space<vmem>>, %arg6: memref<1x8xf32, #tpu.memory_space<vmem>>, %arg7: memref<144x8xf32, #tpu.memory_space<vmem>>, %arg8: memref<1x8xf32, #tpu.memory_space<vmem>>, %arg9: memref<72x8xf32, #tpu.memory_space<vmem>>, %arg10: memref<1x8xf32, #tpu.memory_space<vmem>>, %arg11: memref<1x1x128x8xf32, #tpu.memory_space<vmem>>, %arg12: memref<208x16xf32, #tpu.memory_space<vmem>>, %arg13: memref<176x8xf32, #tpu.memory_space<vmem>>) attributes {dimension_semantics = [#tpu.dimension_semantics<parallel>, #tpu.dimension_semantics<parallel>], iteration_bounds = array<i64: 2, 2>, scalar_prefetch = 0 : i64, scratch_operands = 2 : i64, tpu.core_type = #tpu.core_type<tc>, window_params = [{transform_indices = @transform_0, window_bounds = array<i64: 1, 1, 192, 4>}, {transform_indices = @transform_1, window_bounds = array<i64: 1, 1, 192, 8>}, {pipeline_mode = #tpu.pipeline_mode<synchronous>, transform_indices = @transform_2, window_bounds = array<i64: 192, 8>}, {pipeline_mode = #tpu.pipeline_mode<synchronous>, transform_indices = @transform_3, window_bounds = array<i64: 16, 8>}, {pipeline_mode = #tpu.pipeline_mode<synchronous>, transform_indices = @transform_4, window_bounds = array<i64: 1, 8>}, {pipeline_mode = #tpu.pipeline_mode<synchronous>, transform_indices = @transform_5, window_bounds = array<i64: 144, 8>}, {pipeline_mode = #tpu.pipeline_mode<synchronous>, transform_indices = @transform_6, window_bounds = array<i64: 1, 8>}, {pipeline_mode = #tpu.pipeline_mode<synchronous>, transform_indices = @transform_7, window_bounds = array<i64: 72, 8>}, {pipeline_mode = #tpu.pipeline_mode<synchronous>, transform_indices = @transform_8, window_bounds = array<i64: 1, 8>}, {transform_indices = @transform_9, window_bounds = array<i64: 1, 1, 128, 8>}]} {
    %cst = arith.constant 0.000000e+00 : f32
    %0 = vector.broadcast %cst : f32 to vector<8x16xf32>
    %c0 = arith.constant 0 : index
    %c0_0 = arith.constant 0 : index
    %1 = vector.load %arg12[%c0, %c0_0] : memref<208x16xf32, #tpu.memory_space<vmem>>, vector<8x16xf32>
    tpu.vector_store %arg12[%c0, %c0_0], %0 {strides = array<i32>} : memref<208x16xf32, #tpu.memory_space<vmem>>, vector<8x16xf32>,
    %cst_1 = arith.constant 0.000000e+00 : f32
    %2 = vector.broadcast %cst_1 : f32 to vector<8x16xf32>
    %c200 = arith.constant 200 : index
    %c0_2 = arith.constant 0 : index
    %3 = vector.load %arg12[%c200, %c0_2] : memref<208x16xf32, #tpu.memory_space<vmem>>, vector<8x16xf32>
    tpu.vector_store %arg12[%c200, %c0_2], %2 {strides = array<i32>} : memref<208x16xf32, #tpu.memory_space<vmem>>, vector<8x16xf32>,
    %cst_3 = arith.constant 0.000000e+00 : f32
    %4 = vector.broadcast %cst_3 : f32 to vector<8x8xf32>
    %c0_4 = arith.constant 0 : index
    %c0_5 = arith.constant 0 : index
    %5 = vector.load %arg13[%c0_4, %c0_5] : memref<176x8xf32, #tpu.memory_space<vmem>>, vector<8x8xf32>
    tpu.vector_store %arg13[%c0_4, %c0_5], %4 {strides = array<i32>} : memref<176x8xf32, #tpu.memory_space<vmem>>, vector<8x8xf32>,
    %cst_6 = arith.constant 0.000000e+00 : f32
    %6 = vector.broadcast %cst_6 : f32 to vector<8x8xf32>
    %c168 = arith.constant 168 : index
    %c0_7 = arith.constant 0 : index
    %7 = vector.load %arg13[%c168, %c0_7] : memref<176x8xf32, #tpu.memory_space<vmem>>, vector<8x8xf32>
    tpu.vector_store %arg13[%c168, %c0_7], %6 {strides = array<i32>} : memref<176x8xf32, #tpu.memory_space<vmem>>, vector<8x8xf32>,
    %c0_i32 = arith.constant 0 : i32
    %c2_i32 = arith.constant 2 : i32
    %8 = arith.addi %c0_i32, %c2_i32 : i32
    %c1_i32 = arith.constant 1 : i32
    scf.for %arg14 = %c0_i32 to %8 step %c1_i32  : i32 {
      %c128_i32_53 = arith.constant 128 : i32
      %90 = arith.muli %arg14, %c128_i32_53 : i32
      %c64_i32 = arith.constant 64 : i32
      %91 = arith.minsi %90, %c64_i32 : i32
      %92 = tpu.assume_multiple %91, 64 : i32
      %c0_54 = arith.constant 0 : index
      %c0_55 = arith.constant 0 : index
      %93 = arith.index_cast %92 : i32 to index
      %c0_56 = arith.constant 0 : index
      %94 = vector.load %arg2[%c0_54, %c0_55, %93, %c0_56] : memref<1x1x192x4xf32, #tpu.memory_space<vmem>>, vector<1x1x128x4xf32>
      %95 = vector.shape_cast %94 : vector<1x1x128x4xf32> to vector<128x4xf32>
      %96 = arith.index_cast %92 : i32 to index
      %c0_57 = arith.constant 0 : index
      %97 = vector.load %arg4[%96, %c0_57] : memref<192x8xf32, #tpu.memory_space<vmem>>, vector<128x1xf32>
      %98 = vector.broadcast %97 : vector<128x1xf32> to vector<128x4xf32>
      %99 = arith.mulf %95, %98 : vector<128x4xf32>
      %100 = arith.index_cast %92 : i32 to index
      %c1 = arith.constant 1 : index
      %101 = vector.load %arg4[%100, %c1] : memref<192x8xf32, #tpu.memory_space<vmem>>, vector<128x1xf32>
      %102 = vector.broadcast %101 : vector<128x1xf32> to vector<128x4xf32>
      %103 = arith.mulf %95, %102 : vector<128x4xf32>
      %104 = arith.index_cast %92 : i32 to index
      %c2 = arith.constant 2 : index
      %105 = vector.load %arg4[%104, %c2] : memref<192x8xf32, #tpu.memory_space<vmem>>, vector<128x1xf32>
      %106 = vector.broadcast %105 : vector<128x1xf32> to vector<128x4xf32>
      %107 = arith.mulf %95, %106 : vector<128x4xf32>
      %108 = arith.index_cast %92 : i32 to index
      %c3 = arith.constant 3 : index
      %109 = vector.load %arg4[%108, %c3] : memref<192x8xf32, #tpu.memory_space<vmem>>, vector<128x1xf32>
      %110 = vector.broadcast %109 : vector<128x1xf32> to vector<128x4xf32>
      %111 = arith.mulf %95, %110 : vector<128x4xf32>
      %112 = tpu.concatenate %99, %103, %107, %111 in 1 : vector<128x4xf32>, vector<128x4xf32>, vector<128x4xf32>, vector<128x4xf32> -> vector<128x16xf32>
      %c0_58 = arith.constant 0 : index
      %c0_59 = arith.constant 0 : index
      %113 = vector.load %arg5[%c0_58, %c0_59] : memref<16x8xf32, #tpu.memory_space<vmem>>, vector<16x8xf32>
      %cst_60 = arith.constant dense<0.000000e+00> : vector<128x8xf32>
      %114 = tpu.matmul %112, %113, %cst_60 {dimension_numbers = #tpu.dot_dimension_numbers<[1], [0], [0], [1], [0, 0, 1, 1], [], []>} : vector<128x16xf32>, vector<16x8xf32>, vector<128x8xf32> -> vector<128x8xf32>
      %c0_61 = arith.constant 0 : index
      %c0_62 = arith.constant 0 : index
      %115 = vector.load %arg6[%c0_61, %c0_62] : memref<1x8xf32, #tpu.memory_space<vmem>>, vector<1x8xf32>
      %116 = vector.broadcast %115 : vector<1x8xf32> to vector<128x8xf32>
      %117 = arith.addf %114, %116 : vector<128x8xf32>
      %cst_63 = arith.constant 0.000000e+00 : f32
      %118 = vector.broadcast %cst_63 : f32 to vector<128x8xf32>
      %119 = arith.maximumf %117, %118 : vector<128x8xf32>
      %c0_64 = arith.constant 0 : index
      %c0_65 = arith.constant 0 : index
      %120 = arith.index_cast %92 : i32 to index
      %c0_66 = arith.constant 0 : index
      %121 = vector.load %arg3[%c0_64, %c0_65, %120, %c0_66] : memref<1x1x192x8xf32, #tpu.memory_space<vmem>>, vector<1x1x128x8xf32>
      %122 = vector.shape_cast %121 : vector<1x1x128x8xf32> to vector<128x8xf32>
      %123 = tpu.concatenate %119, %122 in 1 : vector<128x8xf32>, vector<128x8xf32> -> vector<128x16xf32>
      %c8_i32_67 = arith.constant 8 : i32
      %124 = arith.addi %c8_i32_67, %92 : i32
      %125 = arith.index_cast %124 : i32 to index
      %c0_68 = arith.constant 0 : index
      %126 = vector.load %arg12[%125, %c0_68] : memref<208x16xf32, #tpu.memory_space<vmem>>, vector<128x16xf32>
      tpu.vector_store %arg12[%125, %c0_68], %123 {strides = array<i32>} : memref<208x16xf32, #tpu.memory_space<vmem>>, vector<128x16xf32>,
    }
    %c2_i32_8 = arith.constant 2 : i32
    %c0_i32_9 = arith.constant 0 : i32
    %9 = arith.cmpi eq, %arg1, %c0_i32_9 : i32
    %10 = arith.extui %9 : i1 to i32
    %c0_i32_10 = arith.constant 0 : i32
    %11 = arith.cmpi ne, %10, %c0_i32_10 : i32
    scf.if %11 {
      %cst_53 = arith.constant 0.000000e+00 : f32
      %90 = vector.broadcast %cst_53 : f32 to vector<32x16xf32>
      %c8 = arith.constant 8 : index
      %c0_54 = arith.constant 0 : index
      %91 = vector.load %arg12[%c8, %c0_54] : memref<208x16xf32, #tpu.memory_space<vmem>>, vector<32x16xf32>
      tpu.vector_store %arg12[%c8, %c0_54], %90 {strides = array<i32>} : memref<208x16xf32, #tpu.memory_space<vmem>>, vector<32x16xf32>,
    } else {
    }
    %c1_i32_11 = arith.constant 1 : i32
    %12 = arith.cmpi eq, %arg1, %c1_i32_11 : i32
    %13 = arith.extui %12 : i1 to i32
    %c0_i32_12 = arith.constant 0 : i32
    %14 = arith.cmpi ne, %13, %c0_i32_12 : i32
    scf.if %14 {
      %cst_53 = arith.constant 0.000000e+00 : f32
      %90 = vector.broadcast %cst_53 : f32 to vector<32x16xf32>
      %c168_54 = arith.constant 168 : index
      %c0_55 = arith.constant 0 : index
      %91 = vector.load %arg12[%c168_54, %c0_55] : memref<208x16xf32, #tpu.memory_space<vmem>>, vector<32x16xf32>
      tpu.vector_store %arg12[%c168_54, %c0_55], %90 {strides = array<i32>} : memref<208x16xf32, #tpu.memory_space<vmem>>, vector<32x16xf32>,
    } else {
    }
    %c0_i32_13 = arith.constant 0 : i32
    %c2_i32_14 = arith.constant 2 : i32
    %15 = arith.addi %c0_i32_13, %c2_i32_14 : i32
    %c1_i32_15 = arith.constant 1 : i32
    scf.for %arg14 = %c0_i32_13 to %15 step %c1_i32_15  : i32 {
      %c128_i32_53 = arith.constant 128 : i32
      %90 = arith.muli %arg14, %c128_i32_53 : i32
      %c32_i32_54 = arith.constant 32 : i32
      %91 = arith.minsi %90, %c32_i32_54 : i32
      %92 = tpu.assume_multiple %91, 32 : i32
      %93 = arith.index_cast %92 : i32 to index
      %c4_55 = arith.constant 4 : index
      %94 = vector.load %arg4[%93, %c4_55] : memref<192x8xf32, #tpu.memory_space<vmem>>, vector<128x1xf32>
      %95 = arith.index_cast %92 : i32 to index
      %c5_56 = arith.constant 5 : index
      %96 = vector.load %arg4[%95, %c5_56] : memref<192x8xf32, #tpu.memory_space<vmem>>, vector<128x1xf32>
      %c8_i32_57 = arith.constant 8 : i32
      %97 = arith.addi %c8_i32_57, %92 : i32
      %c0_58 = arith.constant 0 : index
      %c0_59 = arith.constant 0 : index
      %98 = vector.load %arg8[%c0_58, %c0_59] : memref<1x8xf32, #tpu.memory_space<vmem>>, vector<1x8xf32>
      %cst_60 = arith.constant 0.000000e+00 : f32
      %99 = vector.broadcast %cst_60 : f32 to vector<128x8xf32>
      %c0_i32_61 = arith.constant 0 : i32
      %100 = arith.addi %97, %c0_i32_61 : i32
      %c1_i32_62 = arith.constant 1 : i32
      %101 = arith.subi %100, %c1_i32_62 : i32
      %102 = arith.index_cast %101 : i32 to index
      %c0_63 = arith.constant 0 : index
      %103 = vector.load %arg12[%102, %c0_63] : memref<208x16xf32, #tpu.memory_space<vmem>>, vector<128x16xf32>
      %104 = vector.broadcast %94 : vector<128x1xf32> to vector<128x16xf32>
      %105 = arith.mulf %103, %104 : vector<128x16xf32>
      %106 = arith.index_cast %100 : i32 to index
      %c0_64 = arith.constant 0 : index
      %107 = vector.load %arg12[%106, %c0_64] : memref<208x16xf32, #tpu.memory_space<vmem>>, vector<128x16xf32>
      %c1_i32_65 = arith.constant 1 : i32
      %108 = arith.addi %100, %c1_i32_65 : i32
      %109 = arith.index_cast %108 : i32 to index
      %c0_66 = arith.constant 0 : index
      %110 = vector.load %arg12[%109, %c0_66] : memref<208x16xf32, #tpu.memory_space<vmem>>, vector<128x16xf32>
      %111 = vector.broadcast %96 : vector<128x1xf32> to vector<128x16xf32>
      %112 = arith.mulf %110, %111 : vector<128x16xf32>
      %113 = tpu.concatenate %105, %107, %112 in 1 : vector<128x16xf32>, vector<128x16xf32>, vector<128x16xf32> -> vector<128x48xf32>
      %c0_67 = arith.constant 0 : index
      %c0_68 = arith.constant 0 : index
      %114 = vector.load %arg7[%c0_67, %c0_68] : memref<144x8xf32, #tpu.memory_space<vmem>>, vector<48x8xf32>
      %cst_69 = arith.constant dense<0.000000e+00> : vector<128x8xf32>
      %115 = tpu.matmul %113, %114, %cst_69 {dimension_numbers = #tpu.dot_dimension_numbers<[1], [0], [0], [1], [0, 0, 1, 1], [], []>} : vector<128x48xf32>, vector<48x8xf32>, vector<128x8xf32> -> vector<128x8xf32>
      %116 = arith.addf %99, %115 : vector<128x8xf32>
      %c16_i32_70 = arith.constant 16 : i32
      %117 = arith.addi %97, %c16_i32_70 : i32
      %c1_i32_71 = arith.constant 1 : i32
      %118 = arith.subi %117, %c1_i32_71 : i32
      %119 = arith.index_cast %118 : i32 to index
      %c0_72 = arith.constant 0 : index
      %120 = vector.load %arg12[%119, %c0_72] : memref<208x16xf32, #tpu.memory_space<vmem>>, vector<128x16xf32>
      %121 = vector.broadcast %94 : vector<128x1xf32> to vector<128x16xf32>
      %122 = arith.mulf %120, %121 : vector<128x16xf32>
      %123 = arith.index_cast %117 : i32 to index
      %c0_73 = arith.constant 0 : index
      %124 = vector.load %arg12[%123, %c0_73] : memref<208x16xf32, #tpu.memory_space<vmem>>, vector<128x16xf32>
      %c1_i32_74 = arith.constant 1 : i32
      %125 = arith.addi %117, %c1_i32_74 : i32
      %126 = arith.index_cast %125 : i32 to index
      %c0_75 = arith.constant 0 : index
      %127 = vector.load %arg12[%126, %c0_75] : memref<208x16xf32, #tpu.memory_space<vmem>>, vector<128x16xf32>
      %128 = vector.broadcast %96 : vector<128x1xf32> to vector<128x16xf32>
      %129 = arith.mulf %127, %128 : vector<128x16xf32>
      %130 = tpu.concatenate %122, %124, %129 in 1 : vector<128x16xf32>, vector<128x16xf32>, vector<128x16xf32> -> vector<128x48xf32>
      %c48_76 = arith.constant 48 : index
      %c0_77 = arith.constant 0 : index
      %131 = vector.load %arg7[%c48_76, %c0_77] : memref<144x8xf32, #tpu.memory_space<vmem>>, vector<48x8xf32>
      %cst_78 = arith.constant dense<0.000000e+00> : vector<128x8xf32>
      %132 = tpu.matmul %130, %131, %cst_78 {dimension_numbers = #tpu.dot_dimension_numbers<[1], [0], [0], [1], [0, 0, 1, 1], [], []>} : vector<128x48xf32>, vector<48x8xf32>, vector<128x8xf32> -> vector<128x8xf32>
      %133 = arith.addf %116, %132 : vector<128x8xf32>
      %c32_i32_79 = arith.constant 32 : i32
      %134 = arith.addi %97, %c32_i32_79 : i32
      %c1_i32_80 = arith.constant 1 : i32
      %135 = arith.subi %134, %c1_i32_80 : i32
      %136 = arith.index_cast %135 : i32 to index
      %c0_81 = arith.constant 0 : index
      %137 = vector.load %arg12[%136, %c0_81] : memref<208x16xf32, #tpu.memory_space<vmem>>, vector<128x16xf32>
      %138 = vector.broadcast %94 : vector<128x1xf32> to vector<128x16xf32>
      %139 = arith.mulf %137, %138 : vector<128x16xf32>
      %140 = arith.index_cast %134 : i32 to index
      %c0_82 = arith.constant 0 : index
      %141 = vector.load %arg12[%140, %c0_82] : memref<208x16xf32, #tpu.memory_space<vmem>>, vector<128x16xf32>
      %c1_i32_83 = arith.constant 1 : i32
      %142 = arith.addi %134, %c1_i32_83 : i32
      %143 = arith.index_cast %142 : i32 to index
      %c0_84 = arith.constant 0 : index
      %144 = vector.load %arg12[%143, %c0_84] : memref<208x16xf32, #tpu.memory_space<vmem>>, vector<128x16xf32>
      %145 = vector.broadcast %96 : vector<128x1xf32> to vector<128x16xf32>
      %146 = arith.mulf %144, %145 : vector<128x16xf32>
      %147 = tpu.concatenate %139, %141, %146 in 1 : vector<128x16xf32>, vector<128x16xf32>, vector<128x16xf32> -> vector<128x48xf32>
      %c96 = arith.constant 96 : index
      %c0_85 = arith.constant 0 : index
      %148 = vector.load %arg7[%c96, %c0_85] : memref<144x8xf32, #tpu.memory_space<vmem>>, vector<48x8xf32>
      %cst_86 = arith.constant dense<0.000000e+00> : vector<128x8xf32>
      %149 = tpu.matmul %147, %148, %cst_86 {dimension_numbers = #tpu.dot_dimension_numbers<[1], [0], [0], [1], [0, 0, 1, 1], [], []>} : vector<128x48xf32>, vector<48x8xf32>, vector<128x8xf32> -> vector<128x8xf32>
      %150 = arith.addf %133, %149 : vector<128x8xf32>
      %151 = vector.broadcast %98 : vector<1x8xf32> to vector<128x8xf32>
      %152 = arith.addf %150, %151 : vector<128x8xf32>
      %cst_87 = arith.constant 0.000000e+00 : f32
      %153 = vector.broadcast %cst_87 : f32 to vector<128x8xf32>
      %154 = arith.maximumf %152, %153 : vector<128x8xf32>
      %c8_i32_88 = arith.constant 8 : i32
      %155 = arith.addi %c8_i32_88, %92 : i32
      %156 = arith.index_cast %155 : i32 to index
      %c0_89 = arith.constant 0 : index
      %157 = vector.load %arg13[%156, %c0_89] : memref<176x8xf32, #tpu.memory_space<vmem>>, vector<128x8xf32>
      tpu.vector_store %arg13[%156, %c0_89], %154 {strides = array<i32>} : memref<176x8xf32, #tpu.memory_space<vmem>>, vector<128x8xf32>,
    }
    %c2_i32_16 = arith.constant 2 : i32
    %c0_i32_17 = arith.constant 0 : i32
    %16 = arith.cmpi eq, %arg1, %c0_i32_17 : i32
    %17 = arith.extui %16 : i1 to i32
    %c0_i32_18 = arith.constant 0 : i32
    %18 = arith.cmpi ne, %17, %c0_i32_18 : i32
    scf.if %18 {
      %cst_53 = arith.constant 0.000000e+00 : f32
      %90 = vector.broadcast %cst_53 : f32 to vector<16x8xf32>
      %c8 = arith.constant 8 : index
      %c0_54 = arith.constant 0 : index
      %91 = vector.load %arg13[%c8, %c0_54] : memref<176x8xf32, #tpu.memory_space<vmem>>, vector<16x8xf32>
      tpu.vector_store %arg13[%c8, %c0_54], %90 {strides = array<i32>} : memref<176x8xf32, #tpu.memory_space<vmem>>, vector<16x8xf32>,
    } else {
    }
    %c1_i32_19 = arith.constant 1 : i32
    %19 = arith.cmpi eq, %arg1, %c1_i32_19 : i32
    %20 = arith.extui %19 : i1 to i32
    %c0_i32_20 = arith.constant 0 : i32
    %21 = arith.cmpi ne, %20, %c0_i32_20 : i32
    scf.if %21 {
      %cst_53 = arith.constant 0.000000e+00 : f32
      %90 = vector.broadcast %cst_53 : f32 to vector<16x8xf32>
      %c152 = arith.constant 152 : index
      %c0_54 = arith.constant 0 : index
      %91 = vector.load %arg13[%c152, %c0_54] : memref<176x8xf32, #tpu.memory_space<vmem>>, vector<16x8xf32>
      tpu.vector_store %arg13[%c152, %c0_54], %90 {strides = array<i32>} : memref<176x8xf32, #tpu.memory_space<vmem>>, vector<16x8xf32>,
    } else {
    }
    %c0_i32_21 = arith.constant 0 : i32
    %c128_i32 = arith.constant 128 : i32
    %22 = arith.muli %c0_i32_21, %c128_i32 : i32
    %23 = tpu.assume_multiple %22, 128 : i32
    %24 = arith.index_cast %23 : i32 to index
    %c4 = arith.constant 4 : index
    %25 = vector.load %arg4[%24, %c4] : memref<192x8xf32, #tpu.memory_space<vmem>>, vector<128x1xf32>
    %26 = arith.index_cast %23 : i32 to index
    %c5 = arith.constant 5 : index
    %27 = vector.load %arg4[%26, %c5] : memref<192x8xf32, #tpu.memory_space<vmem>>, vector<128x1xf32>
    %c8_i32 = arith.constant 8 : i32
    %28 = arith.addi %c8_i32, %23 : i32
    %c0_22 = arith.constant 0 : index
    %c0_23 = arith.constant 0 : index
    %29 = vector.load %arg10[%c0_22, %c0_23] : memref<1x8xf32, #tpu.memory_space<vmem>>, vector<1x8xf32>
    %cst_24 = arith.constant 0.000000e+00 : f32
    %30 = vector.broadcast %cst_24 : f32 to vector<128x8xf32>
    %c0_i32_25 = arith.constant 0 : i32
    %31 = arith.addi %28, %c0_i32_25 : i32
    %c1_i32_26 = arith.constant 1 : i32
    %32 = arith.subi %31, %c1_i32_26 : i32
    %33 = arith.index_cast %32 : i32 to index
    %c0_27 = arith.constant 0 : index
    %34 = vector.load %arg13[%33, %c0_27] : memref<176x8xf32, #tpu.memory_space<vmem>>, vector<128x8xf32>
    %35 = vector.broadcast %25 : vector<128x1xf32> to vector<128x8xf32>
    %36 = arith.mulf %34, %35 : vector<128x8xf32>
    %37 = arith.index_cast %31 : i32 to index
    %c0_28 = arith.constant 0 : index
    %38 = vector.load %arg13[%37, %c0_28] : memref<176x8xf32, #tpu.memory_space<vmem>>, vector<128x8xf32>
    %c1_i32_29 = arith.constant 1 : i32
    %39 = arith.addi %31, %c1_i32_29 : i32
    %40 = arith.index_cast %39 : i32 to index
    %c0_30 = arith.constant 0 : index
    %41 = vector.load %arg13[%40, %c0_30] : memref<176x8xf32, #tpu.memory_space<vmem>>, vector<128x8xf32>
    %42 = vector.broadcast %27 : vector<128x1xf32> to vector<128x8xf32>
    %43 = arith.mulf %41, %42 : vector<128x8xf32>
    %44 = tpu.concatenate %36, %38, %43 in 1 : vector<128x8xf32>, vector<128x8xf32>, vector<128x8xf32> -> vector<128x24xf32>
    %c0_31 = arith.constant 0 : index
    %c0_32 = arith.constant 0 : index
    %45 = vector.load %arg9[%c0_31, %c0_32] : memref<72x8xf32, #tpu.memory_space<vmem>>, vector<24x8xf32>
    %cst_33 = arith.constant dense<0.000000e+00> : vector<128x8xf32>
    %46 = tpu.matmul %44, %45, %cst_33 {dimension_numbers = #tpu.dot_dimension_numbers<[1], [0], [0], [1], [0, 0, 1, 1], [], []>} : vector<128x24xf32>, vector<24x8xf32>, vector<128x8xf32> -> vector<128x8xf32>
    %47 = arith.addf %30, %46 : vector<128x8xf32>
    %c16_i32 = arith.constant 16 : i32
    %48 = arith.addi %28, %c16_i32 : i32
    %c1_i32_34 = arith.constant 1 : i32
    %49 = arith.subi %48, %c1_i32_34 : i32
    %50 = arith.index_cast %49 : i32 to index
    %c0_35 = arith.constant 0 : index
    %51 = vector.load %arg13[%50, %c0_35] : memref<176x8xf32, #tpu.memory_space<vmem>>, vector<128x8xf32>
    %52 = vector.broadcast %25 : vector<128x1xf32> to vector<128x8xf32>
    %53 = arith.mulf %51, %52 : vector<128x8xf32>
    %54 = arith.index_cast %48 : i32 to index
    %c0_36 = arith.constant 0 : index
    %55 = vector.load %arg13[%54, %c0_36] : memref<176x8xf32, #tpu.memory_space<vmem>>, vector<128x8xf32>
    %c1_i32_37 = arith.constant 1 : i32
    %56 = arith.addi %48, %c1_i32_37 : i32
    %57 = arith.index_cast %56 : i32 to index
    %c0_38 = arith.constant 0 : index
    %58 = vector.load %arg13[%57, %c0_38] : memref<176x8xf32, #tpu.memory_space<vmem>>, vector<128x8xf32>
    %59 = vector.broadcast %27 : vector<128x1xf32> to vector<128x8xf32>
    %60 = arith.mulf %58, %59 : vector<128x8xf32>
    %61 = tpu.concatenate %53, %55, %60 in 1 : vector<128x8xf32>, vector<128x8xf32>, vector<128x8xf32> -> vector<128x24xf32>
    %c24 = arith.constant 24 : index
    %c0_39 = arith.constant 0 : index
    %62 = vector.load %arg9[%c24, %c0_39] : memref<72x8xf32, #tpu.memory_space<vmem>>, vector<24x8xf32>
    %cst_40 = arith.constant dense<0.000000e+00> : vector<128x8xf32>
    %63 = tpu.matmul %61, %62, %cst_40 {dimension_numbers = #tpu.dot_dimension_numbers<[1], [0], [0], [1], [0, 0, 1, 1], [], []>} : vector<128x24xf32>, vector<24x8xf32>, vector<128x8xf32> -> vector<128x8xf32>
    %64 = arith.addf %47, %63 : vector<128x8xf32>
    %c32_i32 = arith.constant 32 : i32
    %65 = arith.addi %28, %c32_i32 : i32
    %c1_i32_41 = arith.constant 1 : i32
    %66 = arith.subi %65, %c1_i32_41 : i32
    %67 = arith.index_cast %66 : i32 to index
    %c0_42 = arith.constant 0 : index
    %68 = vector.load %arg13[%67, %c0_42] : memref<176x8xf32, #tpu.memory_space<vmem>>, vector<128x8xf32>
    %69 = vector.broadcast %25 : vector<128x1xf32> to vector<128x8xf32>
    %70 = arith.mulf %68, %69 : vector<128x8xf32>
    %71 = arith.index_cast %65 : i32 to index
    %c0_43 = arith.constant 0 : index
    %72 = vector.load %arg13[%71, %c0_43] : memref<176x8xf32, #tpu.memory_space<vmem>>, vector<128x8xf32>
    %c1_i32_44 = arith.constant 1 : i32
    %73 = arith.addi %65, %c1_i32_44 : i32
    %74 = arith.index_cast %73 : i32 to index
    %c0_45 = arith.constant 0 : index
    %75 = vector.load %arg13[%74, %c0_45] : memref<176x8xf32, #tpu.memory_space<vmem>>, vector<128x8xf32>
    %76 = vector.broadcast %27 : vector<128x1xf32> to vector<128x8xf32>
    %77 = arith.mulf %75, %76 : vector<128x8xf32>
    %78 = tpu.concatenate %70, %72, %77 in 1 : vector<128x8xf32>, vector<128x8xf32>, vector<128x8xf32> -> vector<128x24xf32>
    %c48 = arith.constant 48 : index
    %c0_46 = arith.constant 0 : index
    %79 = vector.load %arg9[%c48, %c0_46] : memref<72x8xf32, #tpu.memory_space<vmem>>, vector<24x8xf32>
    %cst_47 = arith.constant dense<0.000000e+00> : vector<128x8xf32>
    %80 = tpu.matmul %78, %79, %cst_47 {dimension_numbers = #tpu.dot_dimension_numbers<[1], [0], [0], [1], [0, 0, 1, 1], [], []>} : vector<128x24xf32>, vector<24x8xf32>, vector<128x8xf32> -> vector<128x8xf32>
    %81 = arith.addf %64, %80 : vector<128x8xf32>
    %82 = vector.broadcast %29 : vector<1x8xf32> to vector<128x8xf32>
    %83 = arith.addf %81, %82 : vector<128x8xf32>
    %cst_48 = arith.constant 0.000000e+00 : f32
    %84 = vector.broadcast %cst_48 : f32 to vector<128x8xf32>
    %85 = arith.maximumf %83, %84 : vector<128x8xf32>
    %c0_49 = arith.constant 0 : index
    %c0_50 = arith.constant 0 : index
    %86 = arith.index_cast %23 : i32 to index
    %c0_51 = arith.constant 0 : index
    %87 = vector.load %arg11[%c0_49, %c0_50, %86, %c0_51] : memref<1x1x128x8xf32, #tpu.memory_space<vmem>>, vector<1x1x128x8xf32>
    %88 = vector.shape_cast %87 : vector<1x1x128x8xf32> to vector<128x8xf32>
    %89 = vector.shape_cast %85 : vector<128x8xf32> to vector<1x1x128x8xf32>
    tpu.vector_store %arg11[%c0_49, %c0_50, %86, %c0_51], %89 {strides = array<i32>} : memref<1x1x128x8xf32, #tpu.memory_space<vmem>>, vector<1x1x128x8xf32>,
    %c1_i32_52 = arith.constant 1 : i32
    return
  }
  func.func @transform_0(%arg0: i32, %arg1: i32) -> (i32, i32, i32, i32) {
    %c0_i32 = arith.constant 0 : i32
    %c0_i32_0 = arith.constant 0 : i32
    %c0_i32_1 = arith.constant 0 : i32
    return %arg0, %arg1, %c0_i32, %c0_i32_0 : i32, i32, i32, i32
  }
  func.func @transform_1(%arg0: i32, %arg1: i32) -> (i32, i32, i32, i32) {
    %c0_i32 = arith.constant 0 : i32
    %c0_i32_0 = arith.constant 0 : i32
    %c0_i32_1 = arith.constant 0 : i32
    return %arg0, %arg1, %c0_i32, %c0_i32_0 : i32, i32, i32, i32
  }
  func.func @transform_2(%arg0: i32, %arg1: i32) -> (i32, i32) {
    %c0_i32 = arith.constant 0 : i32
    %c0_i32_0 = arith.constant 0 : i32
    %c0_i32_1 = arith.constant 0 : i32
    return %c0_i32, %c0_i32_0 : i32, i32
  }
  func.func @transform_3(%arg0: i32, %arg1: i32) -> (i32, i32) {
    %c0_i32 = arith.constant 0 : i32
    %c0_i32_0 = arith.constant 0 : i32
    %c0_i32_1 = arith.constant 0 : i32
    return %c0_i32, %c0_i32_0 : i32, i32
  }
  func.func @transform_4(%arg0: i32, %arg1: i32) -> (i32, i32) {
    %c0_i32 = arith.constant 0 : i32
    %c0_i32_0 = arith.constant 0 : i32
    %c0_i32_1 = arith.constant 0 : i32
    return %c0_i32, %c0_i32_0 : i32, i32
  }
  func.func @transform_5(%arg0: i32, %arg1: i32) -> (i32, i32) {
    %c0_i32 = arith.constant 0 : i32
    %c0_i32_0 = arith.constant 0 : i32
    %c0_i32_1 = arith.constant 0 : i32
    return %c0_i32, %c0_i32_0 : i32, i32
  }
  func.func @transform_6(%arg0: i32, %arg1: i32) -> (i32, i32) {
    %c0_i32 = arith.constant 0 : i32
    %c0_i32_0 = arith.constant 0 : i32
    %c0_i32_1 = arith.constant 0 : i32
    return %c0_i32, %c0_i32_0 : i32, i32
  }
  func.func @transform_7(%arg0: i32, %arg1: i32) -> (i32, i32) {
    %c0_i32 = arith.constant 0 : i32
    %c0_i32_0 = arith.constant 0 : i32
    %c0_i32_1 = arith.constant 0 : i32
    return %c0_i32, %c0_i32_0 : i32, i32
  }
  func.func @transform_8(%arg0: i32, %arg1: i32) -> (i32, i32) {
    %c0_i32 = arith.constant 0 : i32
    %c0_i32_0 = arith.constant 0 : i32
    %c0_i32_1 = arith.constant 0 : i32
    return %c0_i32, %c0_i32_0 : i32, i32
  }
  func.func @transform_9(%arg0: i32, %arg1: i32) -> (i32, i32, i32, i32) {
    %c0_i32 = arith.constant 0 : i32
    %c0_i32_0 = arith.constant 0 : i32
    %c0_i32_1 = arith.constant 0 : i32
    return %arg0, %arg1, %c0_i32, %c0_i32_0 : i32, i32, i32, i32
  }
}

</mosaic_0001>

<llo_original>
// kernel: tpu_custom_call.1
$region0: #{tpu_custom_call.1}
  #allocation0 [shape = 'u32[]', space=smem, size = 0x4, offset = 0x4, fixed_abs, tag = 'smem constant byte address 0x4 - core index']
  #allocation1 [shape = 'u32[144,128]{1,0:T(1,128)}', space=vmem, size = 0x12000, scoped, tag = 'internal scratch']
  #allocation2 [shape = 'f32[208,16]{1,0:T(8,128)}', space=vmem, size = 0x1a000, scoped, tag = 'scratch operand']
  #allocation3 [shape = 'f32[176,8]{1,0:T(8,128)}', space=vmem, size = 0x16000, scoped, tag = 'scratch operand']
  %s0 = inlined_call_operand.vmem [shape: f32[2,2,192,4], index: 0, kind: input, shape index: {}]
  %s1 = inlined_call_operand.vmem [shape: f32[2,2,192,8], index: 1, kind: input, shape index: {}]
  %s2 = inlined_call_operand.vmem [shape: f32[192,8], index: 2, kind: input, shape index: {}]
  %s3 = inlined_call_operand.vmem [shape: f32[16,8], index: 3, kind: input, shape index: {}]
  %s4 = inlined_call_operand.vmem [shape: f32[1,8], index: 4, kind: input, shape index: {}]
  %s5 = inlined_call_operand.vmem [shape: f32[144,8], index: 5, kind: input, shape index: {}]
  %s6 = inlined_call_operand.vmem [shape: f32[1,8], index: 6, kind: input, shape index: {}]
  %s7 = inlined_call_operand.vmem [shape: f32[72,8], index: 7, kind: input, shape index: {}]
  %s8 = inlined_call_operand.vmem [shape: f32[1,8], index: 8, kind: input, shape index: {}]
  %s9 = inlined_call_operand.vmem [shape: f32[2,2,128,8], index: 9, kind: output, shape index: {}]
  %s10 = sld [smem:[#allocation0]]
  $region99: #{tpu_custom_call.1} parent=0
    _
  %s12 = ssub.s32 1, %s10
  %s13 = scalar_select 0, %s12, %s10
  loop: start=0, step=1, limit=6
  $region2: #{tpu_custom_call.1} parent=0 // loop_pre_header
    _
  $region3: #{tpu_custom_call.1} parent=0 // loop_header
    %s15 = sphi 0, %s19
    %p16 = scmp.ge.s32.totalorder %s15, 6
    %s22 = sphi 0, %s34
    %s23 = sphi 0, %s30
    %s24 = sphi 0, %s22
    %s25 = sphi 0, %s23
    %s26 = sphi 0, %s24
    %s27 = sphi 0, %s25
    %s39 = sphi 0, %s41
    %s42 = sphi 0, %s39
    %s43 = sphi 0, %s42
    %s59 = sphi 0, %s43
    %s67 = sphi 0, %s69
    %s70 = sphi 0, %s67
    %s71 = sphi 0, %s70
    %s87 = sphi 0, %s71
    %s91 = sphi 0, %s91
    %s93 = sphi 0, %s91
    %s94 = sphi 0, %s93
    %s108 = sphi 0, %s94
    %s112 = sphi 0, %s112
    %s114 = sphi 0, %s112
    %s115 = sphi 0, %s114
    %s129 = sphi 0, %s115
    %s133 = sphi 0, %s133
    %s135 = sphi 0, %s133
    %s136 = sphi 0, %s135
    %s150 = sphi 0, %s136
    %s154 = sphi 0, %s154
    %s156 = sphi 0, %s154
    %s157 = sphi 0, %s156
    %s171 = sphi 0, %s157
    %s175 = sphi 0, %s175
    %s177 = sphi 0, %s175
    %s178 = sphi 0, %s177
    %s192 = sphi 0, %s178
    %s196 = sphi 0, %s196
    %s198 = sphi 0, %s196
    %s199 = sphi 0, %s198
    %s213 = sphi 0, %s199
    %s217 = sphi 0, %s217
    %s219 = sphi 0, %s217
    %s220 = sphi 0, %s219
    %s234 = sphi 0, %s220
    %s242 = sphi 0, %s244
    %s245 = sphi 0, %s242
    %s246 = sphi 0, %s245
    %s262 = sphi 0, %s246
  $region4: #{tpu_custom_call.1} parent=0 // loop_header_branch
    %18 = sbr.rel (%p16) target = $region8
  $region5: #{tpu_custom_call.1} parent=0 // loop_body
    %s20 = ssub.s32 %s15, 1
    %s21 = ssub.s32 %s15, 2
    %s28 = sadd.s32 1, %s23
    %p29 = scmp.ge.s32.totalorder %s28, 2
    %s30 = scalar_select %p29, 0, %s28
    %s31 = sadd.s32 1, %s22
    %s32 = scalar_select %p29, %s31, %s22
    %p33 = scmp.ge.s32.totalorder %s32, 2
    %s34 = scalar_select %p33, 0, %s32
    %s35 = ssub.s32 %s22, %s34
    %s36 = ssub.s32 %s23, %s30
    %s37 = sor.u32 %s35, %s36
    %p38 = scmp.eq.s32.totalorder %s37, 0
    %s40 = sadd.s32 %s39, 1
    %s41 = scalar_select %p38, %s39, %s40
    %p44 = pneg %p38
    %p45 = scmp.eq.s32.totalorder %s15, 3
    %p46 = por %p44, %p45
    %p47 = scmp.ne.s32.totalorder %s39, %s42
    %p48 = scmp.eq.s32.totalorder %s15, 0
    %p49 = por %p47, %p48
    %p50 = scmp.ne.s32.totalorder %s39, %s42
    %p51 = scmp.eq.s32.totalorder %s20, 3
    %p52 = por %p50, %p51
    %p53 = scmp.ne.s32.totalorder %s42, %s43
    %p54 = scmp.eq.s32.totalorder %s20, 0
    %p55 = por %p53, %p54
    %p56 = scmp.ne.s32.totalorder %s42, %s43
    %p57 = scmp.eq.s32.totalorder %s21, 3
    %p58 = por %p56, %p57
    %p60 = scmp.ne.s32.totalorder %s43, %s59
    %p61 = scmp.eq.s32.totalorder %s21, 0
    %p62 = por %p60, %p61
    %s63 = ssub.s32 %s22, %s34
    %s64 = ssub.s32 %s23, %s30
    %s65 = sor.u32 %s63, %s64
    %p66 = scmp.eq.s32.totalorder %s65, 0
    %s68 = sadd.s32 %s67, 1
    %s69 = scalar_select %p66, %s67, %s68
    %p72 = pneg %p66
    %p73 = scmp.eq.s32.totalorder %s15, 3
    %p74 = por %p72, %p73
    %p75 = scmp.ne.s32.totalorder %s67, %s70
    %p76 = scmp.eq.s32.totalorder %s15, 0
    %p77 = por %p75, %p76
    %p78 = scmp.ne.s32.totalorder %s67, %s70
    %p79 = scmp.eq.s32.totalorder %s20, 3
    %p80 = por %p78, %p79
    %p81 = scmp.ne.s32.totalorder %s70, %s71
    %p82 = scmp.eq.s32.totalorder %s20, 0
    %p83 = por %p81, %p82
    %p84 = scmp.ne.s32.totalorder %s70, %s71
    %p85 = scmp.eq.s32.totalorder %s21, 3
    %p86 = por %p84, %p85
    %p88 = scmp.ne.s32.totalorder %s71, %s87
    %p89 = scmp.eq.s32.totalorder %s21, 0
    %p90 = por %p88, %p89
    %s92 = sadd.s32 %s91, 1
    %p95 = scmp.eq.s32.totalorder %s15, 3
    %p96 = scmp.ne.s32.totalorder %s91, %s93
    %p97 = scmp.eq.s32.totalorder %s15, 0
    %p98 = por %p96, %p97
    %p99 = scmp.ne.s32.totalorder %s91, %s93
    %p100 = scmp.eq.s32.totalorder %s20, 3
    %p101 = por %p99, %p100
    %p102 = scmp.ne.s32.totalorder %s93, %s94
    %p103 = scmp.eq.s32.totalorder %s20, 0
    %p104 = por %p102, %p103
    %p105 = scmp.ne.s32.totalorder %s93, %s94
    %p106 = scmp.eq.s32.totalorder %s21, 3
    %p107 = por %p105, %p106
    %p109 = scmp.ne.s32.totalorder %s94, %s108
    %p110 = scmp.eq.s32.totalorder %s21, 0
    %p111 = por %p109, %p110
    %s113 = sadd.s32 %s112, 1
    %p116 = scmp.eq.s32.totalorder %s15, 3
    %p117 = scmp.ne.s32.totalorder %s112, %s114
    %p118 = scmp.eq.s32.totalorder %s15, 0
    %p119 = por %p117, %p118
    %p120 = scmp.ne.s32.totalorder %s112, %s114
    %p121 = scmp.eq.s32.totalorder %s20, 3
    %p122 = por %p120, %p121
    %p123 = scmp.ne.s32.totalorder %s114, %s115
    %p124 = scmp.eq.s32.totalorder %s20, 0
    %p125 = por %p123, %p124
    %p126 = scmp.ne.s32.totalorder %s114, %s115
    %p127 = scmp.eq.s32.totalorder %s21, 3
    %p128 = por %p126, %p127
    %p130 = scmp.ne.s32.totalorder %s115, %s129
    %p131 = scmp.eq.s32.totalorder %s21, 0
    %p132 = por %p130, %p131
    %s134 = sadd.s32 %s133, 1
    %p137 = scmp.eq.s32.totalorder %s15, 3
    %p138 = scmp.ne.s32.totalorder %s133, %s135
    %p139 = scmp.eq.s32.totalorder %s15, 0
    %p140 = por %p138, %p139
    %p141 = scmp.ne.s32.totalorder %s133, %s135
    %p142 = scmp.eq.s32.totalorder %s20, 3
    %p143 = por %p141, %p142
    %p144 = scmp.ne.s32.totalorder %s135, %s136
    %p145 = scmp.eq.s32.totalorder %s20, 0
    %p146 = por %p144, %p145
    %p147 = scmp.ne.s32.totalorder %s135, %s136
    %p148 = scmp.eq.s32.totalorder %s21, 3
    %p149 = por %p147, %p148
    %p151 = scmp.ne.s32.totalorder %s136, %s150
    %p152 = scmp.eq.s32.totalorder %s21, 0
    %p153 = por %p151, %p152
    %s155 = sadd.s32 %s154, 1
    %p158 = scmp.eq.s32.totalorder %s15, 3
    %p159 = scmp.ne.s32.totalorder %s154, %s156
    %p160 = scmp.eq.s32.totalorder %s15, 0
    %p161 = por %p159, %p160
    %p162 = scmp.ne.s32.totalorder %s154, %s156
    %p163 = scmp.eq.s32.totalorder %s20, 3
    %p164 = por %p162, %p163
    %p165 = scmp.ne.s32.totalorder %s156, %s157
    %p166 = scmp.eq.s32.totalorder %s20, 0
    %p167 = por %p165, %p166
    %p168 = scmp.ne.s32.totalorder %s156, %s157
    %p169 = scmp.eq.s32.totalorder %s21, 3
    %p170 = por %p168, %p169
    %p172 = scmp.ne.s32.totalorder %s157, %s171
    %p173 = scmp.eq.s32.totalorder %s21, 0
    %p174 = por %p172, %p173
    %s176 = sadd.s32 %s175, 1
    %p179 = scmp.eq.s32.totalorder %s15, 3
    %p180 = scmp.ne.s32.totalorder %s175, %s177
    %p181 = scmp.eq.s32.totalorder %s15, 0
    %p182 = por %p180, %p181
    %p183 = scmp.ne.s32.totalorder %s175, %s177
    %p184 = scmp.eq.s32.totalorder %s20, 3
    %p185 = por %p183, %p184
    %p186 = scmp.ne.s32.totalorder %s177, %s178
    %p187 = scmp.eq.s32.totalorder %s20, 0
    %p188 = por %p186, %p187
    %p189 = scmp.ne.s32.totalorder %s177, %s178
    %p190 = scmp.eq.s32.totalorder %s21, 3
    %p191 = por %p189, %p190
    %p193 = scmp.ne.s32.totalorder %s178, %s192
    %p194 = scmp.eq.s32.totalorder %s21, 0
    %p195 = por %p193, %p194
    %s197 = sadd.s32 %s196, 1
    %p200 = scmp.eq.s32.totalorder %s15, 3
    %p201 = scmp.ne.s32.totalorder %s196, %s198
    %p202 = scmp.eq.s32.totalorder %s15, 0
    %p203 = por %p201, %p202
    %p204 = scmp.ne.s32.totalorder %s196, %s198
    %p205 = scmp.eq.s32.totalorder %s20, 3
    %p206 = por %p204, %p205
    %p207 = scmp.ne.s32.totalorder %s198, %s199
    %p208 = scmp.eq.s32.totalorder %s20, 0
    %p209 = por %p207, %p208
    %p210 = scmp.ne.s32.totalorder %s198, %s199
    %p211 = scmp.eq.s32.totalorder %s21, 3
    %p212 = por %p210, %p211
    %p214 = scmp.ne.s32.totalorder %s199, %s213
    %p215 = scmp.eq.s32.totalorder %s21, 0
    %p216 = por %p214, %p215
    %s218 = sadd.s32 %s217, 1
    %p221 = scmp.eq.s32.totalorder %s15, 3
    %p222 = scmp.ne.s32.totalorder %s217, %s219
    %p223 = scmp.eq.s32.totalorder %s15, 0
    %p224 = por %p222, %p223
    %p225 = scmp.ne.s32.totalorder %s217, %s219
    %p226 = scmp.eq.s32.totalorder %s20, 3
    %p227 = por %p225, %p226
    %p228 = scmp.ne.s32.totalorder %s219, %s220
    %p229 = scmp.eq.s32.totalorder %s20, 0
    %p230 = por %p228, %p229
    %p231 = scmp.ne.s32.totalorder %s219, %s220
    %p232 = scmp.eq.s32.totalorder %s21, 3
    %p233 = por %p231, %p232
    %p235 = scmp.ne.s32.totalorder %s220, %s234
    %p236 = scmp.eq.s32.totalorder %s21, 0
    %p237 = por %p235, %p236
    %s238 = ssub.s32 %s22, %s34
    %s239 = ssub.s32 %s23, %s30
    %s240 = sor.u32 %s238, %s239
    %p241 = scmp.eq.s32.totalorder %s240, 0
    %s243 = sadd.s32 %s242, 1
    %s244 = scalar_select %p241, %s242, %s243
    %p247 = pneg %p241
    %p248 = scmp.eq.s32.totalorder %s15, 3
    %p249 = por %p247, %p248
    %p250 = scmp.ne.s32.totalorder %s242, %s245
    %p251 = scmp.eq.s32.totalorder %s15, 0
    %p252 = por %p250, %p251
    %p253 = scmp.ne.s32.totalorder %s242, %s245
    %p254 = scmp.eq.s32.totalorder %s20, 3
    %p255 = por %p253, %p254
    %p256 = scmp.ne.s32.totalorder %s245, %s246
    %p257 = scmp.eq.s32.totalorder %s20, 0
    %p258 = por %p256, %p257
    %p259 = scmp.ne.s32.totalorder %s245, %s246
    %p260 = scmp.eq.s32.totalorder %s21, 3
    %p261 = por %p259, %p260
    %p263 = scmp.ne.s32.totalorder %s246, %s262
    %p264 = scmp.eq.s32.totalorder %s21, 0
    %p265 = por %p263, %p264
    %p266 = scmp.le.s32.totalorder 1, %s15
    %p267 = scmp.lt.s32.totalorder %s15, 5
    %p268 = pnand %p266, %p267
    %p269 = pneg %p268
    // Predicated region
    $region9: #{tpu_custom_call.1} parent=5 // pred_check
      _
    $region10: #{tpu_custom_call.1} parent=5 // pred_check_branch
      %271 = sbr.rel (%p268) target = $region12
    $region11: #{tpu_custom_call.1} parent=5 // pred_region
      %s272 = ssub.s32 %s15, 1
      // Predicated region
      $region13: #{tpu_custom_call.1} parent=11 // pred_check
        %p273 = pneg %p104
      $region14: #{tpu_custom_call.1} parent=11 // pred_check_branch
        %275 = sbr.rel (%p273) target = $region16
      $region15: #{tpu_custom_call.1} parent=11 // pred_region
        _
      $region16: #{tpu_custom_call.1} parent=11 // pred_fallthru
        _
      // Predicated region
      $region17: #{tpu_custom_call.1} parent=11 // pred_check
        %p276 = pneg %p125
      $region18: #{tpu_custom_call.1} parent=11 // pred_check_branch
        %278 = sbr.rel (%p276) target = $region20
      $region19: #{tpu_custom_call.1} parent=11 // pred_region
        _
      $region20: #{tpu_custom_call.1} parent=11 // pred_fallthru
        _
      // Predicated region
      $region21: #{tpu_custom_call.1} parent=11 // pred_check
        %p279 = pneg %p146
      $region22: #{tpu_custom_call.1} parent=11 // pred_check_branch
        %281 = sbr.rel (%p279) target = $region24
      $region23: #{tpu_custom_call.1} parent=11 // pred_region
        _
      $region24: #{tpu_custom_call.1} parent=11 // pred_fallthru
        _
      // Predicated region
      $region25: #{tpu_custom_call.1} parent=11 // pred_check
        %p282 = pneg %p167
      $region26: #{tpu_custom_call.1} parent=11 // pred_check_branch
        %284 = sbr.rel (%p282) target = $region28
      $region27: #{tpu_custom_call.1} parent=11 // pred_region
        _
      $region28: #{tpu_custom_call.1} parent=11 // pred_fallthru
        _
      // Predicated region
      $region29: #{tpu_custom_call.1} parent=11 // pred_check
        %p285 = pneg %p188
      $region30: #{tpu_custom_call.1} parent=11 // pred_check_branch
        %287 = sbr.rel (%p285) target = $region32
      $region31: #{tpu_custom_call.1} parent=11 // pred_region
        _
      $region32: #{tpu_custom_call.1} parent=11 // pred_fallthru
        _
      // Predicated region
      $region33: #{tpu_custom_call.1} parent=11 // pred_check
        %p288 = pneg %p209
      $region34: #{tpu_custom_call.1} parent=11 // pred_check_branch
        %290 = sbr.rel (%p288) target = $region36
      $region35: #{tpu_custom_call.1} parent=11 // pred_region
        _
      $region36: #{tpu_custom_call.1} parent=11 // pred_fallthru
        _
      // Predicated region
      $region37: #{tpu_custom_call.1} parent=11 // pred_check
        %p291 = pneg %p230
      $region38: #{tpu_custom_call.1} parent=11 // pred_check_branch
        %293 = sbr.rel (%p291) target = $region40
      $region39: #{tpu_custom_call.1} parent=11 // pred_region
        _
      $region40: #{tpu_custom_call.1} parent=11 // pred_fallthru
        _
    $region12: #{tpu_custom_call.1} parent=5 // pred_fallthru
      _
    %p294 = scmp.lt.s32.totalorder %s15, 4
    // Predicated region
    $region41: #{tpu_custom_call.1} parent=5 // pred_check
      %p295 = pneg %p294
    $region42: #{tpu_custom_call.1} parent=5 // pred_check_branch
      %297 = sbr.rel (%p295) target = $region44
    $region43: #{tpu_custom_call.1} parent=5 // pred_region
      // Predicated region
      $region45: #{tpu_custom_call.1} parent=43 // pred_check
        %p298 = pneg %p49
      $region46: #{tpu_custom_call.1} parent=43 // pred_check_branch
        %300 = sbr.rel (%p298) target = $region48
      $region47: #{tpu_custom_call.1} parent=43 // pred_region
        %p301 = scmp.lt.s32.totalorder %s22, 1
        %s302 = scalar_select %p301, %s22, 1
        %p303 = scmp.lt.s32.totalorder %s23, 1
        %s304 = scalar_select %p303, %s23, 1
        %s305 = smul.addr %s304, 24
        %s306 = smul.addr %s302, 48
        %s307 = sadd.s32 %s305, %s306
        %s308 = smul.addr %s307, 8
        %s309 = scalar_lea.vmem %s0, %s308
      $region48: #{tpu_custom_call.1} parent=43 // pred_fallthru
        _
      // Predicated region
      $region49: #{tpu_custom_call.1} parent=43 // pred_check
        %p310 = pneg %p77
      $region50: #{tpu_custom_call.1} parent=43 // pred_check_branch
        %312 = sbr.rel (%p310) target = $region52
      $region51: #{tpu_custom_call.1} parent=43 // pred_region
        %p313 = scmp.lt.s32.totalorder %s22, 1
        %s314 = scalar_select %p313, %s22, 1
        %p315 = scmp.lt.s32.totalorder %s23, 1
        %s316 = scalar_select %p315, %s23, 1
        %s317 = smul.addr %s316, 24
        %s318 = smul.addr %s314, 48
        %s319 = sadd.s32 %s317, %s318
        %s320 = smul.addr %s319, 8
        %s321 = scalar_lea.vmem %s1, %s320
      $region52: #{tpu_custom_call.1} parent=43 // pred_fallthru
        _
    $region44: #{tpu_custom_call.1} parent=5 // pred_fallthru
      _
    %p322 = scmp.le.s32.totalorder 1, %s15
    %p323 = scmp.lt.s32.totalorder %s15, 5
    %p324 = pnand %p322, %p323
    %p325 = pneg %p324
    // Predicated region
    $region53: #{tpu_custom_call.1} parent=5 // pred_check
      _
    $region54: #{tpu_custom_call.1} parent=5 // pred_check_branch
      %327 = sbr.rel (%p324) target = $region56
    $region55: #{tpu_custom_call.1} parent=5 // pred_region
      %s328 = ssub.s32 %s15, 1
      %p329 = scmp.lt.s32.totalorder %s24, 1
      %s330 = scalar_select %p329, %s24, 1
      %p331 = scmp.lt.s32.totalorder %s25, 1
      %s332 = scalar_select %p331, %s25, 1
      %s333 = smul.addr %s332, 24
      %s334 = smul.addr %s330, 48
      %s335 = sadd.s32 %s333, %s334
      %s336 = smul.addr %s335, 8
      %s337 = scalar_lea.vmem %s0, %s336
      %p338 = pneg %p55
      %p339 = pneg %p52
      %p340 = scmp.lt.s32.totalorder %s24, 1
      %s341 = scalar_select %p340, %s24, 1
      %p342 = scmp.lt.s32.totalorder %s25, 1
      %s343 = scalar_select %p342, %s25, 1
      %s344 = smul.addr %s343, 24
      %s345 = smul.addr %s341, 48
      %s346 = sadd.s32 %s344, %s345
      %s347 = smul.addr %s346, 8
      %s348 = scalar_lea.vmem %s1, %s347
      %p349 = pneg %p83
      %p350 = pneg %p80
      %p351 = pneg %p104
      %p352 = pneg %p101
      %p353 = pneg %p125
      %p354 = pneg %p122
      %p355 = pneg %p146
      %p356 = pneg %p143
      %p357 = pneg %p167
      %p358 = pneg %p164
      %p359 = pneg %p188
      %p360 = pneg %p185
      %p361 = pneg %p209
      %p362 = pneg %p206
      %p363 = pneg %p230
      %p364 = pneg %p227
      %p365 = pneg %p258
      %p366 = pneg %p255
      %p367 = scmp.lt.s32.totalorder %s24, 1
      %s368 = scalar_select %p367, %s24, 1
      %p369 = scmp.lt.s32.totalorder %s25, 1
      %s370 = scalar_select %p369, %s25, 1
      %s371 = smul.addr %s370, 16
      %s372 = smul.addr %s368, 32
      %s373 = sadd.s32 %s371, %s372
      %s374 = smul.addr %s373, 8
      %s375 = scalar_lea.vmem %s9, %s374
      %p376 = scmp.lt.s32.totalorder %s24, 1
      %s377 = scalar_select %p376, %s24, 1
      %p378 = scmp.lt.s32.totalorder %s25, 1
      %s379 = scalar_select %p378, %s25, 1
      %s380 = smul.addr %s379, 24
      %s381 = smul.addr %s377, 48
      %s382 = sadd.s32 %s380, %s381
      %s383 = smul.addr %s382, 8
      %s384 = scalar_lea.vmem %s0, %s383
      %p385 = scmp.lt.s32.totalorder %s24, 1
      %s386 = scalar_select %p385, %s24, 1
      %p387 = scmp.lt.s32.totalorder %s25, 1
      %s388 = scalar_select %p387, %s25, 1
      %s389 = smul.addr %s388, 24
      %s390 = smul.addr %s386, 48
      %s391 = sadd.s32 %s389, %s390
      %s392 = smul.addr %s391, 8
      %s393 = scalar_lea.vmem %s1, %s392
      %p394 = scmp.lt.s32.totalorder %s24, 1
      %s395 = scalar_select %p394, %s24, 1
      %p396 = scmp.lt.s32.totalorder %s25, 1
      %s397 = scalar_select %p396, %s25, 1
      %s398 = smul.addr %s397, 16
      %s399 = smul.addr %s395, 32
      %s400 = sadd.s32 %s398, %s399
      %s401 = smul.addr %s400, 8
      %s402 = scalar_lea.vmem %s9, %s401
      %vm403 = vcmask 130048
      %404 = vst.msk [vmem:[#allocation2] sm:$0xff] %vm403, 0.0
      %405 = vst.msk [vmem:[#allocation2 + $0xc8] sm:$0xff] %vm403, 0.0
      %vm406 = vcmask 64512
      %407 = vst.msk [vmem:[#allocation3] sm:$0xff] %vm406, 0.0
      %408 = vst.msk [vmem:[#allocation3 + $0xa8] sm:$0xff] %vm406, 0.0
      loop: start=0, step=1, limit=2
      $region57: #{tpu_custom_call.1} parent=55 // loop_pre_header
        _
      $region58: #{tpu_custom_call.1} parent=55 // loop_header
        %s410 = sphi 0, %s414
        %p411 = scmp.ge.s32.totalorder %s410, 2
      $region59: #{tpu_custom_call.1} parent=55 // loop_header_branch
        %413 = sbr.rel (%p411) target = $region63
      $region60: #{tpu_custom_call.1} parent=55 // loop_body
        %s415 = smul.u32 %s410, 128
        %p416 = scmp.lt.s32.totalorder %s415, 64
        %s417 = scalar_select %p416, %s415, 64
        %s418 = scalar_lea.vmem %s384, %s417
        %v419 = vld [vmem:[%s418] sm:$0xff]
        %v420 = vld [vmem:[%s418 + $0x8] sm:$0xff]
        %v421 = vld [vmem:[%s418 + $0x10] sm:$0xff]
        %v422 = vld [vmem:[%s418 + $0x18] sm:$0xff]
        %v423 = vld [vmem:[%s418 + $0x20] sm:$0xff]
        %v424 = vld [vmem:[%s418 + $0x28] sm:$0xff]
        %v425 = vld [vmem:[%s418 + $0x30] sm:$0xff]
        %v426 = vld [vmem:[%s418 + $0x38] sm:$0xff]
        %v427 = vld [vmem:[%s418 + $0x40] sm:$0xff]
        %v428 = vld [vmem:[%s418 + $0x48] sm:$0xff]
        %v429 = vld [vmem:[%s418 + $0x50] sm:$0xff]
        %v430 = vld [vmem:[%s418 + $0x58] sm:$0xff]
        %v431 = vld [vmem:[%s418 + $0x60] sm:$0xff]
        %v432 = vld [vmem:[%s418 + $0x68] sm:$0xff]
        %v433 = vld [vmem:[%s418 + $0x70] sm:$0xff]
        %v434 = vld [vmem:[%s418 + $0x78] sm:$0xff]
        %s435 = scalar_lea.vmem %s2, %s417
        %v436 = vld [vmem:[%s435] sm:$0xff]
        %v437 = vld [vmem:[%s435 + $0x8] sm:$0xff]
        %v438 = vld [vmem:[%s435 + $0x10] sm:$0xff]
        %v439 = vld [vmem:[%s435 + $0x18] sm:$0xff]
        %v440 = vld [vmem:[%s435 + $0x20] sm:$0xff]
        %v441 = vld [vmem:[%s435 + $0x28] sm:$0xff]
        %v442 = vld [vmem:[%s435 + $0x30] sm:$0xff]
        %v443 = vld [vmem:[%s435 + $0x38] sm:$0xff]
        %v444 = vld [vmem:[%s435 + $0x40] sm:$0xff]
        %v445 = vld [vmem:[%s435 + $0x48] sm:$0xff]
        %v446 = vld [vmem:[%s435 + $0x50] sm:$0xff]
        %v447 = vld [vmem:[%s435 + $0x58] sm:$0xff]
        %v448 = vld [vmem:[%s435 + $0x60] sm:$0xff]
        %v449 = vld [vmem:[%s435 + $0x68] sm:$0xff]
        %v450 = vld [vmem:[%s435 + $0x70] sm:$0xff]
        %v451 = vld [vmem:[%s435 + $0x78] sm:$0xff]
        %453 = vset.pattern.permute.xlu0 0
        %454 = vperm.xlu0 %453, %v436
        %v455 = vpop.permute.xlu0 %454
        %458 = vset.pattern.permute.xlu0 0
        %459 = vperm.xlu0 %458, %v437
        %v460 = vpop.permute.xlu0 %459
        %463 = vset.pattern.permute.xlu0 0
        %464 = vperm.xlu0 %463, %v438
        %v465 = vpop.permute.xlu0 %464
        %468 = vset.pattern.permute.xlu0 0
        %469 = vperm.xlu0 %468, %v439
        %v470 = vpop.permute.xlu0 %469
        %473 = vset.pattern.permute.xlu0 0
        %474 = vperm.xlu0 %473, %v440
        %v475 = vpop.permute.xlu0 %474
        %478 = vset.pattern.permute.xlu0 0
        %479 = vperm.xlu0 %478, %v441
        %v480 = vpop.permute.xlu0 %479
        %483 = vset.pattern.permute.xlu0 0
        %484 = vperm.xlu0 %483, %v442
        %v485 = vpop.permute.xlu0 %484
        %488 = vset.pattern.permute.xlu0 0
        %489 = vperm.xlu0 %488, %v443
        %v490 = vpop.permute.xlu0 %489
        %493 = vset.pattern.permute.xlu0 0
        %494 = vperm.xlu0 %493, %v444
        %v495 = vpop.permute.xlu0 %494
        %498 = vset.pattern.permute.xlu0 0
        %499 = vperm.xlu0 %498, %v445
        %v500 = vpop.permute.xlu0 %499
        %503 = vset.pattern.permute.xlu0 0
        %504 = vperm.xlu0 %503, %v446
        %v505 = vpop.permute.xlu0 %504
        %508 = vset.pattern.permute.xlu0 0
        %509 = vperm.xlu0 %508, %v447
        %v510 = vpop.permute.xlu0 %509
        %513 = vset.pattern.permute.xlu0 0
        %514 = vperm.xlu0 %513, %v448
        %v515 = vpop.permute.xlu0 %514
        %518 = vset.pattern.permute.xlu0 0
        %519 = vperm.xlu0 %518, %v449
        %v520 = vpop.permute.xlu0 %519
        %523 = vset.pattern.permute.xlu0 0
        %524 = vperm.xlu0 %523, %v450
        %v525 = vpop.permute.xlu0 %524
        %528 = vset.pattern.permute.xlu0 0
        %529 = vperm.xlu0 %528, %v451
        %v530 = vpop.permute.xlu0 %529
        %v532 = vmul.f32 %v419, %v455
        %v533 = vmul.f32 %v420, %v460
        %v534 = vmul.f32 %v421, %v465
        %v535 = vmul.f32 %v422, %v470
        %v536 = vmul.f32 %v423, %v475
        %v537 = vmul.f32 %v424, %v480
        %v538 = vmul.f32 %v425, %v485
        %v539 = vmul.f32 %v426, %v490
        %v540 = vmul.f32 %v427, %v495
        %v541 = vmul.f32 %v428, %v500
        %v542 = vmul.f32 %v429, %v505
        %v543 = vmul.f32 %v430, %v510
        %v544 = vmul.f32 %v431, %v515
        %v545 = vmul.f32 %v432, %v520
        %v546 = vmul.f32 %v433, %v525
        %v547 = vmul.f32 %v434, %v530
        %548 = vset.pattern.permute.xlu0 1
        %549 = vperm.xlu0 %548, %v436
        %v550 = vpop.permute.xlu0 %549
        %552 = vset.pattern.permute.xlu0 1
        %553 = vperm.xlu0 %552, %v437
        %v554 = vpop.permute.xlu0 %553
        %556 = vset.pattern.permute.xlu0 1
        %557 = vperm.xlu0 %556, %v438
        %v558 = vpop.permute.xlu0 %557
        %560 = vset.pattern.permute.xlu0 1
        %561 = vperm.xlu0 %560, %v439
        %v562 = vpop.permute.xlu0 %561
        %564 = vset.pattern.permute.xlu0 1
        %565 = vperm.xlu0 %564, %v440
        %v566 = vpop.permute.xlu0 %565
        %568 = vset.pattern.permute.xlu0 1
        %569 = vperm.xlu0 %568, %v441
        %v570 = vpop.permute.xlu0 %569
        %572 = vset.pattern.permute.xlu0 1
        %573 = vperm.xlu0 %572, %v442
        %v574 = vpop.permute.xlu0 %573
        %576 = vset.pattern.permute.xlu0 1
        %577 = vperm.xlu0 %576, %v443
        %v578 = vpop.permute.xlu0 %577
        %580 = vset.pattern.permute.xlu0 1
        %581 = vperm.xlu0 %580, %v444
        %v582 = vpop.permute.xlu0 %581
        %584 = vset.pattern.permute.xlu0 1
        %585 = vperm.xlu0 %584, %v445
        %v586 = vpop.permute.xlu0 %585
        %588 = vset.pattern.permute.xlu0 1
        %589 = vperm.xlu0 %588, %v446
        %v590 = vpop.permute.xlu0 %589
        %592 = vset.pattern.permute.xlu0 1
        %593 = vperm.xlu0 %592, %v447
        %v594 = vpop.permute.xlu0 %593
        %596 = vset.pattern.permute.xlu0 1
        %597 = vperm.xlu0 %596, %v448
        %v598 = vpop.permute.xlu0 %597
        %600 = vset.pattern.permute.xlu0 1
        %601 = vperm.xlu0 %600, %v449
        %v602 = vpop.permute.xlu0 %601
        %604 = vset.pattern.permute.xlu0 1
        %605 = vperm.xlu0 %604, %v450
        %v606 = vpop.permute.xlu0 %605
        %608 = vset.pattern.permute.xlu0 1
        %609 = vperm.xlu0 %608, %v451
        %v610 = vpop.permute.xlu0 %609
        %v612 = vmul.f32 %v419, %v550
        %v613 = vmul.f32 %v420, %v554
        %v614 = vmul.f32 %v421, %v558
        %v615 = vmul.f32 %v422, %v562
        %v616 = vmul.f32 %v423, %v566
        %v617 = vmul.f32 %v424, %v570
        %v618 = vmul.f32 %v425, %v574
        %v619 = vmul.f32 %v426, %v578
        %v620 = vmul.f32 %v427, %v582
        %v621 = vmul.f32 %v428, %v586
        %v622 = vmul.f32 %v429, %v590
        %v623 = vmul.f32 %v430, %v594
        %v624 = vmul.f32 %v431, %v598
        %v625 = vmul.f32 %v432, %v602
        %v626 = vmul.f32 %v433, %v606
        %v627 = vmul.f32 %v434, %v610
        %628 = vset.pattern.permute.xlu0 2
        %629 = vperm.xlu0 %628, %v436
        %v630 = vpop.permute.xlu0 %629
        %632 = vset.pattern.permute.xlu0 2
        %633 = vperm.xlu0 %632, %v437
        %v634 = vpop.permute.xlu0 %633
        %636 = vset.pattern.permute.xlu0 2
        %637 = vperm.xlu0 %636, %v438
        %v638 = vpop.permute.xlu0 %637
        %640 = vset.pattern.permute.xlu0 2
        %641 = vperm.xlu0 %640, %v439
        %v642 = vpop.permute.xlu0 %641
        %644 = vset.pattern.permute.xlu0 2
        %645 = vperm.xlu0 %644, %v440
        %v646 = vpop.permute.xlu0 %645
        %648 = vset.pattern.permute.xlu0 2
        %649 = vperm.xlu0 %648, %v441
        %v650 = vpop.permute.xlu0 %649
        %652 = vset.pattern.permute.xlu0 2
        %653 = vperm.xlu0 %652, %v442
        %v654 = vpop.permute.xlu0 %653
        %656 = vset.pattern.permute.xlu0 2
        %657 = vperm.xlu0 %656, %v443
        %v658 = vpop.permute.xlu0 %657
        %660 = vset.pattern.permute.xlu0 2
        %661 = vperm.xlu0 %660, %v444
        %v662 = vpop.permute.xlu0 %661
        %664 = vset.pattern.permute.xlu0 2
        %665 = vperm.xlu0 %664, %v445
        %v666 = vpop.permute.xlu0 %665
        %668 = vset.pattern.permute.xlu0 2
        %669 = vperm.xlu0 %668, %v446
        %v670 = vpop.permute.xlu0 %669
        %672 = vset.pattern.permute.xlu0 2
        %673 = vperm.xlu0 %672, %v447
        %v674 = vpop.permute.xlu0 %673
        %676 = vset.pattern.permute.xlu0 2
        %677 = vperm.xlu0 %676, %v448
        %v678 = vpop.permute.xlu0 %677
        %680 = vset.pattern.permute.xlu0 2
        %681 = vperm.xlu0 %680, %v449
        %v682 = vpop.permute.xlu0 %681
        %684 = vset.pattern.permute.xlu0 2
        %685 = vperm.xlu0 %684, %v450
        %v686 = vpop.permute.xlu0 %685
        %688 = vset.pattern.permute.xlu0 2
        %689 = vperm.xlu0 %688, %v451
        %v690 = vpop.permute.xlu0 %689
        %v692 = vmul.f32 %v419, %v630
        %v693 = vmul.f32 %v420, %v634
        %v694 = vmul.f32 %v421, %v638
        %v695 = vmul.f32 %v422, %v642
        %v696 = vmul.f32 %v423, %v646
        %v697 = vmul.f32 %v424, %v650
        %v698 = vmul.f32 %v425, %v654
        %v699 = vmul.f32 %v426, %v658
        %v700 = vmul.f32 %v427, %v662
        %v701 = vmul.f32 %v428, %v666
        %v702 = vmul.f32 %v429, %v670
        %v703 = vmul.f32 %v430, %v674
        %v704 = vmul.f32 %v431, %v678
        %v705 = vmul.f32 %v432, %v682
        %v706 = vmul.f32 %v433, %v686
        %v707 = vmul.f32 %v434, %v690
        %708 = vset.pattern.permute.xlu0 3
        %709 = vperm.xlu0 %708, %v436
        %v710 = vpop.permute.xlu0 %709
        %712 = vset.pattern.permute.xlu0 3
        %713 = vperm.xlu0 %712, %v437
        %v714 = vpop.permute.xlu0 %713
        %716 = vset.pattern.permute.xlu0 3
        %717 = vperm.xlu0 %716, %v438
        %v718 = vpop.permute.xlu0 %717
        %720 = vset.pattern.permute.xlu0 3
        %721 = vperm.xlu0 %720, %v439
        %v722 = vpop.permute.xlu0 %721
        %724 = vset.pattern.permute.xlu0 3
        %725 = vperm.xlu0 %724, %v440
        %v726 = vpop.permute.xlu0 %725
        %728 = vset.pattern.permute.xlu0 3
        %729 = vperm.xlu0 %728, %v441
        %v730 = vpop.permute.xlu0 %729
        %732 = vset.pattern.permute.xlu0 3
        %733 = vperm.xlu0 %732, %v442
        %v734 = vpop.permute.xlu0 %733
        %736 = vset.pattern.permute.xlu0 3
        %737 = vperm.xlu0 %736, %v443
        %v738 = vpop.permute.xlu0 %737
        %740 = vset.pattern.permute.xlu0 3
        %741 = vperm.xlu0 %740, %v444
        %v742 = vpop.permute.xlu0 %741
        %744 = vset.pattern.permute.xlu0 3
        %745 = vperm.xlu0 %744, %v445
        %v746 = vpop.permute.xlu0 %745
        %748 = vset.pattern.permute.xlu0 3
        %749 = vperm.xlu0 %748, %v446
        %v750 = vpop.permute.xlu0 %749
        %752 = vset.pattern.permute.xlu0 3
        %753 = vperm.xlu0 %752, %v447
        %v754 = vpop.permute.xlu0 %753
        %756 = vset.pattern.permute.xlu0 3
        %757 = vperm.xlu0 %756, %v448
        %v758 = vpop.permute.xlu0 %757
        %760 = vset.pattern.permute.xlu0 3
        %761 = vperm.xlu0 %760, %v449
        %v762 = vpop.permute.xlu0 %761
        %764 = vset.pattern.permute.xlu0 3
        %765 = vperm.xlu0 %764, %v450
        %v766 = vpop.permute.xlu0 %765
        %768 = vset.pattern.permute.xlu0 3
        %769 = vperm.xlu0 %768, %v451
        %v770 = vpop.permute.xlu0 %769
        %v772 = vmul.f32 %v419, %v710
        %v773 = vmul.f32 %v420, %v714
        %v774 = vmul.f32 %v421, %v718
        %v775 = vmul.f32 %v422, %v722
        %v776 = vmul.f32 %v423, %v726
        %v777 = vmul.f32 %v424, %v730
        %v778 = vmul.f32 %v425, %v734
        %v779 = vmul.f32 %v426, %v738
        %v780 = vmul.f32 %v427, %v742
        %v781 = vmul.f32 %v428, %v746
        %v782 = vmul.f32 %v429, %v750
        %v783 = vmul.f32 %v430, %v754
        %v784 = vmul.f32 %v431, %v758
        %v785 = vmul.f32 %v432, %v762
        %v786 = vmul.f32 %v433, %v766
        %v787 = vmul.f32 %v434, %v770
        %804 = vrot.lane.b32.xlu0 %v612, 4
        %v805 = vpop.permute.xlu0 %804
        %806 = vrot.lane.b32.xlu0 %v613, 4
        %v807 = vpop.permute.xlu0 %806
        %808 = vrot.lane.b32.xlu0 %v614, 4
        %v809 = vpop.permute.xlu0 %808
        %810 = vrot.lane.b32.xlu0 %v615, 4
        %v811 = vpop.permute.xlu0 %810
        %812 = vrot.lane.b32.xlu0 %v616, 4
        %v813 = vpop.permute.xlu0 %812
        %814 = vrot.lane.b32.xlu0 %v617, 4
        %v815 = vpop.permute.xlu0 %814
        %816 = vrot.lane.b32.xlu0 %v618, 4
        %v817 = vpop.permute.xlu0 %816
        %818 = vrot.lane.b32.xlu0 %v619, 4
        %v819 = vpop.permute.xlu0 %818
        %820 = vrot.lane.b32.xlu0 %v620, 4
        %v821 = vpop.permute.xlu0 %820
        %822 = vrot.lane.b32.xlu0 %v621, 4
        %v823 = vpop.permute.xlu0 %822
        %824 = vrot.lane.b32.xlu0 %v622, 4
        %v825 = vpop.permute.xlu0 %824
        %826 = vrot.lane.b32.xlu0 %v623, 4
        %v827 = vpop.permute.xlu0 %826
        %828 = vrot.lane.b32.xlu0 %v624, 4
        %v829 = vpop.permute.xlu0 %828
        %830 = vrot.lane.b32.xlu0 %v625, 4
        %v831 = vpop.permute.xlu0 %830
        %832 = vrot.lane.b32.xlu0 %v626, 4
        %v833 = vpop.permute.xlu0 %832
        %834 = vrot.lane.b32.xlu0 %v627, 4
        %v835 = vpop.permute.xlu0 %834
        %868 = vrot.lane.b32.xlu0 %v692, 8
        %v869 = vpop.permute.xlu0 %868
        %870 = vrot.lane.b32.xlu0 %v693, 8
        %v871 = vpop.permute.xlu0 %870
        %872 = vrot.lane.b32.xlu0 %v694, 8
        %v873 = vpop.permute.xlu0 %872
        %874 = vrot.lane.b32.xlu0 %v695, 8
        %v875 = vpop.permute.xlu0 %874
        %876 = vrot.lane.b32.xlu0 %v696, 8
        %v877 = vpop.permute.xlu0 %876
        %878 = vrot.lane.b32.xlu0 %v697, 8
        %v879 = vpop.permute.xlu0 %878
        %880 = vrot.lane.b32.xlu0 %v698, 8
        %v881 = vpop.permute.xlu0 %880
        %882 = vrot.lane.b32.xlu0 %v699, 8
        %v883 = vpop.permute.xlu0 %882
        %884 = vrot.lane.b32.xlu0 %v700, 8
        %v885 = vpop.permute.xlu0 %884
        %886 = vrot.lane.b32.xlu0 %v701, 8
        %v887 = vpop.permute.xlu0 %886
        %888 = vrot.lane.b32.xlu0 %v702, 8
        %v889 = vpop.permute.xlu0 %888
        %890 = vrot.lane.b32.xlu0 %v703, 8
        %v891 = vpop.permute.xlu0 %890
        %892 = vrot.lane.b32.xlu0 %v704, 8
        %v893 = vpop.permute.xlu0 %892
        %894 = vrot.lane.b32.xlu0 %v705, 8
        %v895 = vpop.permute.xlu0 %894
        %896 = vrot.lane.b32.xlu0 %v706, 8
        %v897 = vpop.permute.xlu0 %896
        %898 = vrot.lane.b32.xlu0 %v707, 8
        %v899 = vpop.permute.xlu0 %898
        %932 = vrot.lane.b32.xlu0 %v772, 12
        %v933 = vpop.permute.xlu0 %932
        %934 = vrot.lane.b32.xlu0 %v773, 12
        %v935 = vpop.permute.xlu0 %934
        %936 = vrot.lane.b32.xlu0 %v774, 12
        %v937 = vpop.permute.xlu0 %936
        %938 = vrot.lane.b32.xlu0 %v775, 12
        %v939 = vpop.permute.xlu0 %938
        %940 = vrot.lane.b32.xlu0 %v776, 12
        %v941 = vpop.permute.xlu0 %940
        %942 = vrot.lane.b32.xlu0 %v777, 12
        %v943 = vpop.permute.xlu0 %942
        %944 = vrot.lane.b32.xlu0 %v778, 12
        %v945 = vpop.permute.xlu0 %944
        %946 = vrot.lane.b32.xlu0 %v779, 12
        %v947 = vpop.permute.xlu0 %946
        %948 = vrot.lane.b32.xlu0 %v780, 12
        %v949 = vpop.permute.xlu0 %948
        %950 = vrot.lane.b32.xlu0 %v781, 12
        %v951 = vpop.permute.xlu0 %950
        %952 = vrot.lane.b32.xlu0 %v782, 12
        %v953 = vpop.permute.xlu0 %952
        %954 = vrot.lane.b32.xlu0 %v783, 12
        %v955 = vpop.permute.xlu0 %954
        %956 = vrot.lane.b32.xlu0 %v784, 12
        %v957 = vpop.permute.xlu0 %956
        %958 = vrot.lane.b32.xlu0 %v785, 12
        %v959 = vpop.permute.xlu0 %958
        %960 = vrot.lane.b32.xlu0 %v786, 12
        %v961 = vpop.permute.xlu0 %960
        %962 = vrot.lane.b32.xlu0 %v787, 12
        %v963 = vpop.permute.xlu0 %962
        %vm980 = vcmask 31744
        %v981 = vsel %vm980, %v532, %v805
        %v982 = vsel %vm980, %v533, %v807
        %v983 = vsel %vm980, %v534, %v809
        %v984 = vsel %vm980, %v535, %v811
        %v985 = vsel %vm980, %v536, %v813
        %v986 = vsel %vm980, %v537, %v815
        %v987 = vsel %vm980, %v538, %v817
        %v988 = vsel %vm980, %v539, %v819
        %v989 = vsel %vm980, %v540, %v821
        %v990 = vsel %vm980, %v541, %v823
        %v991 = vsel %vm980, %v542, %v825
        %v992 = vsel %vm980, %v543, %v827
        %v993 = vsel %vm980, %v544, %v829
        %v994 = vsel %vm980, %v545, %v831
        %v995 = vsel %vm980, %v546, %v833
        %v996 = vsel %vm980, %v547, %v835
        %v997 = vsel %vm406, %v981, %v869
        %v998 = vsel %vm406, %v982, %v871
        %v999 = vsel %vm406, %v983, %v873
        %v1000 = vsel %vm406, %v984, %v875
        %v1001 = vsel %vm406, %v985, %v877
        %v1002 = vsel %vm406, %v986, %v879
        %v1003 = vsel %vm406, %v987, %v881
        %v1004 = vsel %vm406, %v988, %v883
        %v1005 = vsel %vm406, %v989, %v885
        %v1006 = vsel %vm406, %v990, %v887
        %v1007 = vsel %vm406, %v991, %v889
        %v1008 = vsel %vm406, %v992, %v891
        %v1009 = vsel %vm406, %v993, %v893
        %v1010 = vsel %vm406, %v994, %v895
        %v1011 = vsel %vm406, %v995, %v897
        %v1012 = vsel %vm406, %v996, %v899
        %vm1013 = vcmask 97280
        %v1014 = vsel %vm1013, %v997, %v933
        %v1015 = vsel %vm1013, %v998, %v935
        %v1016 = vsel %vm1013, %v999, %v937
        %v1017 = vsel %vm1013, %v1000, %v939
        %v1018 = vsel %vm1013, %v1001, %v941
        %v1019 = vsel %vm1013, %v1002, %v943
        %v1020 = vsel %vm1013, %v1003, %v945
        %v1021 = vsel %vm1013, %v1004, %v947
        %v1022 = vsel %vm1013, %v1005, %v949
        %v1023 = vsel %vm1013, %v1006, %v951
        %v1024 = vsel %vm1013, %v1007, %v953
        %v1025 = vsel %vm1013, %v1008, %v955
        %v1026 = vsel %vm1013, %v1009, %v957
        %v1027 = vsel %vm1013, %v1010, %v959
        %v1028 = vsel %vm1013, %v1011, %v961
        %v1029 = vsel %vm1013, %v1012, %v963
        %v1030 = vld [vmem:[%s3] sm:$0xff]
        %v1031 = vld [vmem:[%s3 + $0x8] sm:$0xff]
        %v1032 = vld [vmem:[%s4] sm:$0x1]
        %v1034 = vlaneseq
        %v1035 = vshrl.u32 %v1034, 7
        %v1036 = vsub.s32 0, %v1035
        %v1037 = vrot.slane %v1032, %v1036
        %v1040 = vsel %vm403, %v1014, 0
        %v1043 = vsel %vm403, %v1015, 0
        %v1046 = vsel %vm403, %v1016, 0
        %v1049 = vsel %vm403, %v1017, 0
        %v1052 = vsel %vm403, %v1018, 0
        %v1055 = vsel %vm403, %v1019, 0
        %v1058 = vsel %vm403, %v1020, 0
        %v1061 = vsel %vm403, %v1021, 0
        %v1064 = vsel %vm403, %v1022, 0
        %v1067 = vsel %vm403, %v1023, 0
        %v1070 = vsel %vm403, %v1024, 0
        %v1073 = vsel %vm403, %v1025, 0
        %v1076 = vsel %vm403, %v1026, 0
        %v1079 = vsel %vm403, %v1027, 0
        %v1082 = vsel %vm403, %v1028, 0
        %v1085 = vsel %vm403, %v1029, 0
        %1087 = vmatprep.subr.mxu0 0.0
        %1088 = vmatpush1.msra.mxu0 %v1030
        %1089 = vmatprep.subr.mxu0 0.0
        %1090 = vmatpush1.msra.mxu0 %v1031
        %1091 = vmatprep.subr.mxu0 0.0
        %1092 = vmatpush1.msra.mxu0 0.0
        %1093 = vmatprep.subr.mxu0 0.0
        %1094 = vmatpush1.msra.mxu0 0.0
        %1095 = vmatprep.subr.mxu0 0.0
        %1096 = vmatpush1.msra.mxu0 0.0
        %1097 = vmatprep.subr.mxu0 0.0
        %1098 = vmatpush1.msra.mxu0 0.0
        %1099 = vmatprep.subr.mxu0 0.0
        %1100 = vmatpush1.msra.mxu0 0.0
        %1101 = vmatprep.subr.mxu0 0.0
        %1102 = vmatpush1.msra.mxu0 0.0
        %1103 = vmatprep.subr.mxu0 0.0
        %1104 = vmatpush1.msra.mxu0 0.0
        %1105 = vmatprep.subr.mxu0 0.0
        %1106 = vmatpush1.msra.mxu0 0.0
        %1107 = vmatprep.subr.mxu0 0.0
        %1108 = vmatpush1.msra.mxu0 0.0
        %1109 = vmatprep.subr.mxu0 0.0
        %1110 = vmatpush1.msra.mxu0 0.0
        %1111 = vmatprep.subr.mxu0 0.0
        %1112 = vmatpush1.msra.mxu0 0.0
        %1113 = vmatprep.subr.mxu0 0.0
        %1114 = vmatpush1.msra.mxu0 0.0
        %1115 = vmatprep.subr.mxu0 0.0
        %1116 = vmatpush1.msra.mxu0 0.0
        %1117 = vmatprep.subr.mxu0 0.0
        %1118 = vmatpush1.msra.mxu0 0.0
        %1119 = vmatprep.subr.mxu0 0.0
        %1120 = vmatpush1.msra.mxu0 0.0
        %1121 = vmatprep.subr.mxu0 0.0
        %1122 = vmatpush1.msra.mxu0 0.0
        %1123 = vmatprep.subr.mxu0 0.0
        %1124 = vmatpush1.msra.mxu0 0.0
        %1125 = vmatprep.subr.mxu0 0.0
        %1126 = vmatpush1.msra.mxu0 0.0
        %1127 = vmatprep.subr.mxu0 0.0
        %1128 = vmatpush1.msra.mxu0 0.0
        %1129 = vmatprep.subr.mxu0 0.0
        %1130 = vmatpush1.msra.mxu0 0.0
        %1131 = vmatprep.subr.mxu0 0.0
        %1132 = vmatpush1.msra.mxu0 0.0
        %1133 = vmatprep.subr.mxu0 0.0
        %1134 = vmatpush1.msra.mxu0 0.0
        %1135 = vmatprep.subr.mxu0 0.0
        %1136 = vmatpush1.msra.mxu0 0.0
        %1137 = vmatprep.subr.mxu0 0.0
        %1138 = vmatpush1.msra.mxu0 0.0
        %1139 = vmatprep.subr.mxu0 0.0
        %1140 = vmatpush1.msra.mxu0 0.0
        %1141 = vmatprep.subr.mxu0 0.0
        %1142 = vmatpush1.msra.mxu0 0.0
        %1143 = vmatprep.subr.mxu0 0.0
        %1144 = vmatpush1.msra.mxu0 0.0
        %1145 = vmatprep.subr.mxu0 0.0
        %1146 = vmatpush1.msra.mxu0 0.0
        %1147 = vmatprep.subr.mxu0 0.0
        %1148 = vmatpush1.msra.mxu0 0.0
        %1149 = vmatprep.subr.mxu0 0.0
        %1150 = vmatpush1.msra.mxu0 0.0
        %1151 = vmatprep.mubr.f32.mxu0 0.0
        %1152 = vmatmul.mubr.f32.gmra.mrb[0].mxu0 %v1040
        %v1153 = vpop.f32.mrb[0].mxu0
        %v1154 = vadd.f32 %v1037, %v1153
        %v1155 = vpop.f32.mrb[0].mxu0
        %1156 = vmatprep.mubr.f32.mxu0 0.0
        %1157 = vmatmul.mubr.f32.gmra.mrb[0].mxu0 %v1043
        %v1158 = vpop.f32.mrb[0].mxu0
        %v1159 = vadd.f32 %v1037, %v1158
        %v1160 = vpop.f32.mrb[0].mxu0
        %1161 = vmatprep.mubr.f32.mxu0 0.0
        %1162 = vmatmul.mubr.f32.gmra.mrb[0].mxu0 %v1046
        %v1163 = vpop.f32.mrb[0].mxu0
        %v1164 = vadd.f32 %v1037, %v1163
        %v1165 = vpop.f32.mrb[0].mxu0
        %1166 = vmatprep.mubr.f32.mxu0 0.0
        %1167 = vmatmul.mubr.f32.gmra.mrb[0].mxu0 %v1049
        %v1168 = vpop.f32.mrb[0].mxu0
        %v1169 = vadd.f32 %v1037, %v1168
        %v1170 = vpop.f32.mrb[0].mxu0
        %1171 = vmatprep.mubr.f32.mxu0 0.0
        %1172 = vmatmul.mubr.f32.gmra.mrb[0].mxu0 %v1052
        %v1173 = vpop.f32.mrb[0].mxu0
        %v1174 = vadd.f32 %v1037, %v1173
        %v1175 = vpop.f32.mrb[0].mxu0
        %1176 = vmatprep.mubr.f32.mxu0 0.0
        %1177 = vmatmul.mubr.f32.gmra.mrb[0].mxu0 %v1055
        %v1178 = vpop.f32.mrb[0].mxu0
        %v1179 = vadd.f32 %v1037, %v1178
        %v1180 = vpop.f32.mrb[0].mxu0
        %1181 = vmatprep.mubr.f32.mxu0 0.0
        %1182 = vmatmul.mubr.f32.gmra.mrb[0].mxu0 %v1058
        %v1183 = vpop.f32.mrb[0].mxu0
        %v1184 = vadd.f32 %v1037, %v1183
        %v1185 = vpop.f32.mrb[0].mxu0
        %1186 = vmatprep.mubr.f32.mxu0 0.0
        %1187 = vmatmul.mubr.f32.gmra.mrb[0].mxu0 %v1061
        %v1188 = vpop.f32.mrb[0].mxu0
        %v1189 = vadd.f32 %v1037, %v1188
        %v1190 = vpop.f32.mrb[0].mxu0
        %1191 = vmatprep.mubr.f32.mxu0 0.0
        %1192 = vmatmul.mubr.f32.gmra.mrb[0].mxu0 %v1064
        %v1193 = vpop.f32.mrb[0].mxu0
        %v1194 = vadd.f32 %v1037, %v1193
        %v1195 = vpop.f32.mrb[0].mxu0
        %1196 = vmatprep.mubr.f32.mxu0 0.0
        %1197 = vmatmul.mubr.f32.gmra.mrb[0].mxu0 %v1067
        %v1198 = vpop.f32.mrb[0].mxu0
        %v1199 = vadd.f32 %v1037, %v1198
        %v1200 = vpop.f32.mrb[0].mxu0
        %1201 = vmatprep.mubr.f32.mxu0 0.0
        %1202 = vmatmul.mubr.f32.gmra.mrb[0].mxu0 %v1070
        %v1203 = vpop.f32.mrb[0].mxu0
        %v1204 = vadd.f32 %v1037, %v1203
        %v1205 = vpop.f32.mrb[0].mxu0
        %1206 = vmatprep.mubr.f32.mxu0 0.0
        %1207 = vmatmul.mubr.f32.gmra.mrb[0].mxu0 %v1073
        %v1208 = vpop.f32.mrb[0].mxu0
        %v1209 = vadd.f32 %v1037, %v1208
        %v1210 = vpop.f32.mrb[0].mxu0
        %1211 = vmatprep.mubr.f32.mxu0 0.0
        %1212 = vmatmul.mubr.f32.gmra.mrb[0].mxu0 %v1076
        %v1213 = vpop.f32.mrb[0].mxu0
        %v1214 = vadd.f32 %v1037, %v1213
        %v1215 = vpop.f32.mrb[0].mxu0
        %1216 = vmatprep.mubr.f32.mxu0 0.0
        %1217 = vmatmul.mubr.f32.gmra.mrb[0].mxu0 %v1079
        %v1218 = vpop.f32.mrb[0].mxu0
        %v1219 = vadd.f32 %v1037, %v1218
        %v1220 = vpop.f32.mrb[0].mxu0
        %1221 = vmatprep.mubr.f32.mxu0 0.0
        %1222 = vmatmul.mubr.f32.gmra.mrb[0].mxu0 %v1082
        %v1223 = vpop.f32.mrb[0].mxu0
        %v1224 = vadd.f32 %v1037, %v1223
        %v1225 = vpop.f32.mrb[0].mxu0
        %1226 = vmatprep.mubr.f32.mxu0 0.0
        %1227 = vmatmul.mubr.f32.gmra.mrb[0].mxu0 %v1085
        %v1228 = vpop.f32.mrb[0].mxu0
        %v1229 = vadd.f32 %v1037, %v1228
        %v1230 = vpop.f32.mrb[0].mxu0
        %1231 = vdwg.mxu0
        %v1232 = vmax.f32 %v1154, 0.0
        %v1233 = vmax.f32 %v1159, 0.0
        %v1234 = vmax.f32 %v1164, 0.0
        %v1235 = vmax.f32 %v1169, 0.0
        %v1236 = vmax.f32 %v1174, 0.0
        %v1237 = vmax.f32 %v1179, 0.0
        %v1238 = vmax.f32 %v1184, 0.0
        %v1239 = vmax.f32 %v1189, 0.0
        %v1240 = vmax.f32 %v1194, 0.0
        %v1241 = vmax.f32 %v1199, 0.0
        %v1242 = vmax.f32 %v1204, 0.0
        %v1243 = vmax.f32 %v1209, 0.0
        %v1244 = vmax.f32 %v1214, 0.0
        %v1245 = vmax.f32 %v1219, 0.0
        %v1246 = vmax.f32 %v1224, 0.0
        %v1247 = vmax.f32 %v1229, 0.0
        %s1248 = scalar_lea.vmem %s393, %s417
        %v1249 = vld [vmem:[%s1248] sm:$0xff]
        %v1250 = vld [vmem:[%s1248 + $0x8] sm:$0xff]
        %v1251 = vld [vmem:[%s1248 + $0x10] sm:$0xff]
        %v1252 = vld [vmem:[%s1248 + $0x18] sm:$0xff]
        %v1253 = vld [vmem:[%s1248 + $0x20] sm:$0xff]
        %v1254 = vld [vmem:[%s1248 + $0x28] sm:$0xff]
        %v1255 = vld [vmem:[%s1248 + $0x30] sm:$0xff]
        %v1256 = vld [vmem:[%s1248 + $0x38] sm:$0xff]
        %v1257 = vld [vmem:[%s1248 + $0x40] sm:$0xff]
        %v1258 = vld [vmem:[%s1248 + $0x48] sm:$0xff]
        %v1259 = vld [vmem:[%s1248 + $0x50] sm:$0xff]
        %v1260 = vld [vmem:[%s1248 + $0x58] sm:$0xff]
        %v1261 = vld [vmem:[%s1248 + $0x60] sm:$0xff]
        %v1262 = vld [vmem:[%s1248 + $0x68] sm:$0xff]
        %v1263 = vld [vmem:[%s1248 + $0x70] sm:$0xff]
        %v1264 = vld [vmem:[%s1248 + $0x78] sm:$0xff]
        %1281 = vrot.lane.b32.xlu0 %v1249, 8
        %v1282 = vpop.permute.xlu0 %1281
        %1283 = vrot.lane.b32.xlu0 %v1250, 8
        %v1284 = vpop.permute.xlu0 %1283
        %1285 = vrot.lane.b32.xlu0 %v1251, 8
        %v1286 = vpop.permute.xlu0 %1285
        %1287 = vrot.lane.b32.xlu0 %v1252, 8
        %v1288 = vpop.permute.xlu0 %1287
        %1289 = vrot.lane.b32.xlu0 %v1253, 8
        %v1290 = vpop.permute.xlu0 %1289
        %1291 = vrot.lane.b32.xlu0 %v1254, 8
        %v1292 = vpop.permute.xlu0 %1291
        %1293 = vrot.lane.b32.xlu0 %v1255, 8
        %v1294 = vpop.permute.xlu0 %1293
        %1295 = vrot.lane.b32.xlu0 %v1256, 8
        %v1296 = vpop.permute.xlu0 %1295
        %1297 = vrot.lane.b32.xlu0 %v1257, 8
        %v1298 = vpop.permute.xlu0 %1297
        %1299 = vrot.lane.b32.xlu0 %v1258, 8
        %v1300 = vpop.permute.xlu0 %1299
        %1301 = vrot.lane.b32.xlu0 %v1259, 8
        %v1302 = vpop.permute.xlu0 %1301
        %1303 = vrot.lane.b32.xlu0 %v1260, 8
        %v1304 = vpop.permute.xlu0 %1303
        %1305 = vrot.lane.b32.xlu0 %v1261, 8
        %v1306 = vpop.permute.xlu0 %1305
        %1307 = vrot.lane.b32.xlu0 %v1262, 8
        %v1308 = vpop.permute.xlu0 %1307
        %1309 = vrot.lane.b32.xlu0 %v1263, 8
        %v1310 = vpop.permute.xlu0 %1309
        %1311 = vrot.lane.b32.xlu0 %v1264, 8
        %v1312 = vpop.permute.xlu0 %1311
        %v1329 = vsel %vm406, %v1232, %v1282
        %v1330 = vsel %vm406, %v1233, %v1284
        %v1331 = vsel %vm406, %v1234, %v1286
        %v1332 = vsel %vm406, %v1235, %v1288
        %v1333 = vsel %vm406, %v1236, %v1290
        %v1334 = vsel %vm406, %v1237, %v1292
        %v1335 = vsel %vm406, %v1238, %v1294
        %v1336 = vsel %vm406, %v1239, %v1296
        %v1337 = vsel %vm406, %v1240, %v1298
        %v1338 = vsel %vm406, %v1241, %v1300
        %v1339 = vsel %vm406, %v1242, %v1302
        %v1340 = vsel %vm406, %v1243, %v1304
        %v1341 = vsel %vm406, %v1244, %v1306
        %v1342 = vsel %vm406, %v1245, %v1308
        %v1343 = vsel %vm406, %v1246, %v1310
        %v1344 = vsel %vm406, %v1247, %v1312
        %s1345 = sadd.s32 %s417, 8
        %s1346 = scalar_lea.vmem [#allocation2], %s1345
        %1347 = vst.msk [vmem:[%s1346] sm:$0xff] %vm403, %v1329
        %1348 = vst.msk [vmem:[%s1346 + $0x8] sm:$0xff] %vm403, %v1330
        %1349 = vst.msk [vmem:[%s1346 + $0x10] sm:$0xff] %vm403, %v1331
        %1350 = vst.msk [vmem:[%s1346 + $0x18] sm:$0xff] %vm403, %v1332
        %1351 = vst.msk [vmem:[%s1346 + $0x20] sm:$0xff] %vm403, %v1333
        %1352 = vst.msk [vmem:[%s1346 + $0x28] sm:$0xff] %vm403, %v1334
        %1353 = vst.msk [vmem:[%s1346 + $0x30] sm:$0xff] %vm403, %v1335
        %1354 = vst.msk [vmem:[%s1346 + $0x38] sm:$0xff] %vm403, %v1336
        %1355 = vst.msk [vmem:[%s1346 + $0x40] sm:$0xff] %vm403, %v1337
        %1356 = vst.msk [vmem:[%s1346 + $0x48] sm:$0xff] %vm403, %v1338
        %1357 = vst.msk [vmem:[%s1346 + $0x50] sm:$0xff] %vm403, %v1339
        %1358 = vst.msk [vmem:[%s1346 + $0x58] sm:$0xff] %vm403, %v1340
        %1359 = vst.msk [vmem:[%s1346 + $0x60] sm:$0xff] %vm403, %v1341
        %1360 = vst.msk [vmem:[%s1346 + $0x68] sm:$0xff] %vm403, %v1342
        %1361 = vst.msk [vmem:[%s1346 + $0x70] sm:$0xff] %vm403, %v1343
        %1362 = vst.msk [vmem:[%s1346 + $0x78] sm:$0xff] %vm403, %v1344
      $region61: #{tpu_custom_call.1} parent=55 // loop_footer
        %s414 = sadd.s32 1, %s410
      $region62: #{tpu_custom_call.1} parent=55 // loop_footer_branch
        %409 = sbr.rel target = $region58
      $region63: #{tpu_custom_call.1} parent=55 // loop_exit
        _
      %p1363 = scmp.eq.s32.totalorder %s25, 0
      // Predicated region
      $region64: #{tpu_custom_call.1} parent=55 // pred_check
        %p1364 = pneg %p1363
      $region65: #{tpu_custom_call.1} parent=55 // pred_check_branch
        %1366 = sbr.rel (%p1364) target = $region67
      $region66: #{tpu_custom_call.1} parent=55 // pred_region
        %1367 = vst.msk [vmem:[#allocation2 + $0x8] sm:$0xff] %vm403, 0.0
        %1368 = vst.msk [vmem:[#allocation2 + $0x10] sm:$0xff] %vm403, 0.0
        %1369 = vst.msk [vmem:[#allocation2 + $0x18] sm:$0xff] %vm403, 0.0
        %1370 = vst.msk [vmem:[#allocation2 + $0x20] sm:$0xff] %vm403, 0.0
      $region67: #{tpu_custom_call.1} parent=55 // pred_fallthru
        _
      %p1371 = scmp.eq.s32.totalorder %s25, 1
      // Predicated region
      $region68: #{tpu_custom_call.1} parent=55 // pred_check
        %p1372 = pneg %p1371
      $region69: #{tpu_custom_call.1} parent=55 // pred_check_branch
        %1374 = sbr.rel (%p1372) target = $region71
      $region70: #{tpu_custom_call.1} parent=55 // pred_region
        %1375 = vst.msk [vmem:[#allocation2 + $0xa8] sm:$0xff] %vm403, 0.0
        %1376 = vst.msk [vmem:[#allocation2 + $0xb0] sm:$0xff] %vm403, 0.0
        %1377 = vst.msk [vmem:[#allocation2 + $0xb8] sm:$0xff] %vm403, 0.0
        %1378 = vst.msk [vmem:[#allocation2 + $0xc0] sm:$0xff] %vm403, 0.0
      $region71: #{tpu_custom_call.1} parent=55 // pred_fallthru
        _
      loop: start=0, step=1, limit=2
      $region72: #{tpu_custom_call.1} parent=55 // loop_pre_header
        _
      $region73: #{tpu_custom_call.1} parent=55 // loop_header
        %s1380 = sphi 0, %s1384
        %p1381 = scmp.ge.s32.totalorder %s1380, 2
      $region74: #{tpu_custom_call.1} parent=55 // loop_header_branch
        %1383 = sbr.rel (%p1381) target = $region78
      $region75: #{tpu_custom_call.1} parent=55 // loop_body
        %s1385 = smul.u32 %s1380, 128
        %p1386 = scmp.lt.s32.totalorder %s1385, 32
        %s1387 = scalar_select %p1386, %s1385, 32
        %s1388 = scalar_lea.vmem %s2, %s1387
        %v1389 = vld [vmem:[%s1388] sm:$0xff]
        %v1390 = vld [vmem:[%s1388 + $0x8] sm:$0xff]
        %v1391 = vld [vmem:[%s1388 + $0x10] sm:$0xff]
        %v1392 = vld [vmem:[%s1388 + $0x18] sm:$0xff]
        %v1393 = vld [vmem:[%s1388 + $0x20] sm:$0xff]
        %v1394 = vld [vmem:[%s1388 + $0x28] sm:$0xff]
        %v1395 = vld [vmem:[%s1388 + $0x30] sm:$0xff]
        %v1396 = vld [vmem:[%s1388 + $0x38] sm:$0xff]
        %v1397 = vld [vmem:[%s1388 + $0x40] sm:$0xff]
        %v1398 = vld [vmem:[%s1388 + $0x48] sm:$0xff]
        %v1399 = vld [vmem:[%s1388 + $0x50] sm:$0xff]
        %v1400 = vld [vmem:[%s1388 + $0x58] sm:$0xff]
        %v1401 = vld [vmem:[%s1388 + $0x60] sm:$0xff]
        %v1402 = vld [vmem:[%s1388 + $0x68] sm:$0xff]
        %v1403 = vld [vmem:[%s1388 + $0x70] sm:$0xff]
        %v1404 = vld [vmem:[%s1388 + $0x78] sm:$0xff]
        %s1405 = sadd.s32 %s1387, 8
        %v1406 = vld [vmem:[%s6] sm:$0x1]
        %s1407 = sadd.s32 %s1387, 7
        %s1408 = scalar_lea.vmem [#allocation2], %s1407
        %v1409 = vld [vmem:[%s1408] sm:$0xff]
        %v1410 = vld [vmem:[%s1408 + $0x8] sm:$0xff]
        %v1411 = vld [vmem:[%s1408 + $0x10] sm:$0xff]
        %v1412 = vld [vmem:[%s1408 + $0x18] sm:$0xff]
        %v1413 = vld [vmem:[%s1408 + $0x20] sm:$0xff]
        %v1414 = vld [vmem:[%s1408 + $0x28] sm:$0xff]
        %v1415 = vld [vmem:[%s1408 + $0x30] sm:$0xff]
        %v1416 = vld [vmem:[%s1408 + $0x38] sm:$0xff]
        %v1417 = vld [vmem:[%s1408 + $0x40] sm:$0xff]
        %v1418 = vld [vmem:[%s1408 + $0x48] sm:$0xff]
        %v1419 = vld [vmem:[%s1408 + $0x50] sm:$0xff]
        %v1420 = vld [vmem:[%s1408 + $0x58] sm:$0xff]
        %v1421 = vld [vmem:[%s1408 + $0x60] sm:$0xff]
        %v1422 = vld [vmem:[%s1408 + $0x68] sm:$0xff]
        %v1423 = vld [vmem:[%s1408 + $0x70] sm:$0xff]
        %v1424 = vld [vmem:[%s1408 + $0x78] sm:$0xff]
        %1426 = vset.pattern.permute.xlu0 4
        %1427 = vperm.xlu0 %1426, %v1389
        %v1428 = vpop.permute.xlu0 %1427
        %1431 = vset.pattern.permute.xlu0 4
        %1432 = vperm.xlu0 %1431, %v1390
        %v1433 = vpop.permute.xlu0 %1432
        %1436 = vset.pattern.permute.xlu0 4
        %1437 = vperm.xlu0 %1436, %v1391
        %v1438 = vpop.permute.xlu0 %1437
        %1441 = vset.pattern.permute.xlu0 4
        %1442 = vperm.xlu0 %1441, %v1392
        %v1443 = vpop.permute.xlu0 %1442
        %1446 = vset.pattern.permute.xlu0 4
        %1447 = vperm.xlu0 %1446, %v1393
        %v1448 = vpop.permute.xlu0 %1447
        %1451 = vset.pattern.permute.xlu0 4
        %1452 = vperm.xlu0 %1451, %v1394
        %v1453 = vpop.permute.xlu0 %1452
        %1456 = vset.pattern.permute.xlu0 4
        %1457 = vperm.xlu0 %1456, %v1395
        %v1458 = vpop.permute.xlu0 %1457
        %1461 = vset.pattern.permute.xlu0 4
        %1462 = vperm.xlu0 %1461, %v1396
        %v1463 = vpop.permute.xlu0 %1462
        %1466 = vset.pattern.permute.xlu0 4
        %1467 = vperm.xlu0 %1466, %v1397
        %v1468 = vpop.permute.xlu0 %1467
        %1471 = vset.pattern.permute.xlu0 4
        %1472 = vperm.xlu0 %1471, %v1398
        %v1473 = vpop.permute.xlu0 %1472
        %1476 = vset.pattern.permute.xlu0 4
        %1477 = vperm.xlu0 %1476, %v1399
        %v1478 = vpop.permute.xlu0 %1477
        %1481 = vset.pattern.permute.xlu0 4
        %1482 = vperm.xlu0 %1481, %v1400
        %v1483 = vpop.permute.xlu0 %1482
        %1486 = vset.pattern.permute.xlu0 4
        %1487 = vperm.xlu0 %1486, %v1401
        %v1488 = vpop.permute.xlu0 %1487
        %1491 = vset.pattern.permute.xlu0 4
        %1492 = vperm.xlu0 %1491, %v1402
        %v1493 = vpop.permute.xlu0 %1492
        %1496 = vset.pattern.permute.xlu0 4
        %1497 = vperm.xlu0 %1496, %v1403
        %v1498 = vpop.permute.xlu0 %1497
        %1501 = vset.pattern.permute.xlu0 4
        %1502 = vperm.xlu0 %1501, %v1404
        %v1503 = vpop.permute.xlu0 %1502
        %v1505 = vmul.f32 %v1409, %v1428
        %v1506 = vmul.f32 %v1410, %v1433
        %v1507 = vmul.f32 %v1411, %v1438
        %v1508 = vmul.f32 %v1412, %v1443
        %v1509 = vmul.f32 %v1413, %v1448
        %v1510 = vmul.f32 %v1414, %v1453
        %v1511 = vmul.f32 %v1415, %v1458
        %v1512 = vmul.f32 %v1416, %v1463
        %v1513 = vmul.f32 %v1417, %v1468
        %v1514 = vmul.f32 %v1418, %v1473
        %v1515 = vmul.f32 %v1419, %v1478
        %v1516 = vmul.f32 %v1420, %v1483
        %v1517 = vmul.f32 %v1421, %v1488
        %v1518 = vmul.f32 %v1422, %v1493
        %v1519 = vmul.f32 %v1423, %v1498
        %v1520 = vmul.f32 %v1424, %v1503
        %s1521 = scalar_lea.vmem [#allocation2], %s1405
        %v1522 = vld [vmem:[%s1521] sm:$0xff]
        %v1523 = vld [vmem:[%s1521 + $0x8] sm:$0xff]
        %v1524 = vld [vmem:[%s1521 + $0x10] sm:$0xff]
        %v1525 = vld [vmem:[%s1521 + $0x18] sm:$0xff]
        %v1526 = vld [vmem:[%s1521 + $0x20] sm:$0xff]
        %v1527 = vld [vmem:[%s1521 + $0x28] sm:$0xff]
        %v1528 = vld [vmem:[%s1521 + $0x30] sm:$0xff]
        %v1529 = vld [vmem:[%s1521 + $0x38] sm:$0xff]
        %v1530 = vld [vmem:[%s1521 + $0x40] sm:$0xff]
        %v1531 = vld [vmem:[%s1521 + $0x48] sm:$0xff]
        %v1532 = vld [vmem:[%s1521 + $0x50] sm:$0xff]
        %v1533 = vld [vmem:[%s1521 + $0x58] sm:$0xff]
        %v1534 = vld [vmem:[%s1521 + $0x60] sm:$0xff]
        %v1535 = vld [vmem:[%s1521 + $0x68] sm:$0xff]
        %v1536 = vld [vmem:[%s1521 + $0x70] sm:$0xff]
        %v1537 = vld [vmem:[%s1521 + $0x78] sm:$0xff]
        %s1538 = sadd.s32 %s1387, 9
        %s1539 = scalar_lea.vmem [#allocation2], %s1538
        %v1540 = vld [vmem:[%s1539] sm:$0xff]
        %v1541 = vld [vmem:[%s1539 + $0x8] sm:$0xff]
        %v1542 = vld [vmem:[%s1539 + $0x10] sm:$0xff]
        %v1543 = vld [vmem:[%s1539 + $0x18] sm:$0xff]
        %v1544 = vld [vmem:[%s1539 + $0x20] sm:$0xff]
        %v1545 = vld [vmem:[%s1539 + $0x28] sm:$0xff]
        %v1546 = vld [vmem:[%s1539 + $0x30] sm:$0xff]
        %v1547 = vld [vmem:[%s1539 + $0x38] sm:$0xff]
        %v1548 = vld [vmem:[%s1539 + $0x40] sm:$0xff]
        %v1549 = vld [vmem:[%s1539 + $0x48] sm:$0xff]
        %v1550 = vld [vmem:[%s1539 + $0x50] sm:$0xff]
        %v1551 = vld [vmem:[%s1539 + $0x58] sm:$0xff]
        %v1552 = vld [vmem:[%s1539 + $0x60] sm:$0xff]
        %v1553 = vld [vmem:[%s1539 + $0x68] sm:$0xff]
        %v1554 = vld [vmem:[%s1539 + $0x70] sm:$0xff]
        %v1555 = vld [vmem:[%s1539 + $0x78] sm:$0xff]
        %1556 = vset.pattern.permute.xlu0 5
        %1557 = vperm.xlu0 %1556, %v1389
        %v1558 = vpop.permute.xlu0 %1557
        %1560 = vset.pattern.permute.xlu0 5
        %1561 = vperm.xlu0 %1560, %v1390
        %v1562 = vpop.permute.xlu0 %1561
        %1564 = vset.pattern.permute.xlu0 5
        %1565 = vperm.xlu0 %1564, %v1391
        %v1566 = vpop.permute.xlu0 %1565
        %1568 = vset.pattern.permute.xlu0 5
        %1569 = vperm.xlu0 %1568, %v1392
        %v1570 = vpop.permute.xlu0 %1569
        %1572 = vset.pattern.permute.xlu0 5
        %1573 = vperm.xlu0 %1572, %v1393
        %v1574 = vpop.permute.xlu0 %1573
        %1576 = vset.pattern.permute.xlu0 5
        %1577 = vperm.xlu0 %1576, %v1394
        %v1578 = vpop.permute.xlu0 %1577
        %1580 = vset.pattern.permute.xlu0 5
        %1581 = vperm.xlu0 %1580, %v1395
        %v1582 = vpop.permute.xlu0 %1581
        %1584 = vset.pattern.permute.xlu0 5
        %1585 = vperm.xlu0 %1584, %v1396
        %v1586 = vpop.permute.xlu0 %1585
        %1588 = vset.pattern.permute.xlu0 5
        %1589 = vperm.xlu0 %1588, %v1397
        %v1590 = vpop.permute.xlu0 %1589
        %1592 = vset.pattern.permute.xlu0 5
        %1593 = vperm.xlu0 %1592, %v1398
        %v1594 = vpop.permute.xlu0 %1593
        %1596 = vset.pattern.permute.xlu0 5
        %1597 = vperm.xlu0 %1596, %v1399
        %v1598 = vpop.permute.xlu0 %1597
        %1600 = vset.pattern.permute.xlu0 5
        %1601 = vperm.xlu0 %1600, %v1400
        %v1602 = vpop.permute.xlu0 %1601
        %1604 = vset.pattern.permute.xlu0 5
        %1605 = vperm.xlu0 %1604, %v1401
        %v1606 = vpop.permute.xlu0 %1605
        %1608 = vset.pattern.permute.xlu0 5
        %1609 = vperm.xlu0 %1608, %v1402
        %v1610 = vpop.permute.xlu0 %1609
        %1612 = vset.pattern.permute.xlu0 5
        %1613 = vperm.xlu0 %1612, %v1403
        %v1614 = vpop.permute.xlu0 %1613
        %1616 = vset.pattern.permute.xlu0 5
        %1617 = vperm.xlu0 %1616, %v1404
        %v1618 = vpop.permute.xlu0 %1617
        %v1620 = vmul.f32 %v1540, %v1558
        %v1621 = vmul.f32 %v1541, %v1562
        %v1622 = vmul.f32 %v1542, %v1566
        %v1623 = vmul.f32 %v1543, %v1570
        %v1624 = vmul.f32 %v1544, %v1574
        %v1625 = vmul.f32 %v1545, %v1578
        %v1626 = vmul.f32 %v1546, %v1582
        %v1627 = vmul.f32 %v1547, %v1586
        %v1628 = vmul.f32 %v1548, %v1590
        %v1629 = vmul.f32 %v1549, %v1594
        %v1630 = vmul.f32 %v1550, %v1598
        %v1631 = vmul.f32 %v1551, %v1602
        %v1632 = vmul.f32 %v1552, %v1606
        %v1633 = vmul.f32 %v1553, %v1610
        %v1634 = vmul.f32 %v1554, %v1614
        %v1635 = vmul.f32 %v1555, %v1618
        %1652 = vrot.lane.b32.xlu0 %v1522, 16
        %v1653 = vpop.permute.xlu0 %1652
        %1654 = vrot.lane.b32.xlu0 %v1523, 16
        %v1655 = vpop.permute.xlu0 %1654
        %1656 = vrot.lane.b32.xlu0 %v1524, 16
        %v1657 = vpop.permute.xlu0 %1656
        %1658 = vrot.lane.b32.xlu0 %v1525, 16
        %v1659 = vpop.permute.xlu0 %1658
        %1660 = vrot.lane.b32.xlu0 %v1526, 16
        %v1661 = vpop.permute.xlu0 %1660
        %1662 = vrot.lane.b32.xlu0 %v1527, 16
        %v1663 = vpop.permute.xlu0 %1662
        %1664 = vrot.lane.b32.xlu0 %v1528, 16
        %v1665 = vpop.permute.xlu0 %1664
        %1666 = vrot.lane.b32.xlu0 %v1529, 16
        %v1667 = vpop.permute.xlu0 %1666
        %1668 = vrot.lane.b32.xlu0 %v1530, 16
        %v1669 = vpop.permute.xlu0 %1668
        %1670 = vrot.lane.b32.xlu0 %v1531, 16
        %v1671 = vpop.permute.xlu0 %1670
        %1672 = vrot.lane.b32.xlu0 %v1532, 16
        %v1673 = vpop.permute.xlu0 %1672
        %1674 = vrot.lane.b32.xlu0 %v1533, 16
        %v1675 = vpop.permute.xlu0 %1674
        %1676 = vrot.lane.b32.xlu0 %v1534, 16
        %v1677 = vpop.permute.xlu0 %1676
        %1678 = vrot.lane.b32.xlu0 %v1535, 16
        %v1679 = vpop.permute.xlu0 %1678
        %1680 = vrot.lane.b32.xlu0 %v1536, 16
        %v1681 = vpop.permute.xlu0 %1680
        %1682 = vrot.lane.b32.xlu0 %v1537, 16
        %v1683 = vpop.permute.xlu0 %1682
        %1716 = vrot.lane.b32.xlu0 %v1620, 32
        %v1717 = vpop.permute.xlu0 %1716
        %1718 = vrot.lane.b32.xlu0 %v1621, 32
        %v1719 = vpop.permute.xlu0 %1718
        %1720 = vrot.lane.b32.xlu0 %v1622, 32
        %v1721 = vpop.permute.xlu0 %1720
        %1722 = vrot.lane.b32.xlu0 %v1623, 32
        %v1723 = vpop.permute.xlu0 %1722
        %1724 = vrot.lane.b32.xlu0 %v1624, 32
        %v1725 = vpop.permute.xlu0 %1724
        %1726 = vrot.lane.b32.xlu0 %v1625, 32
        %v1727 = vpop.permute.xlu0 %1726
        %1728 = vrot.lane.b32.xlu0 %v1626, 32
        %v1729 = vpop.permute.xlu0 %1728
        %1730 = vrot.lane.b32.xlu0 %v1627, 32
        %v1731 = vpop.permute.xlu0 %1730
        %1732 = vrot.lane.b32.xlu0 %v1628, 32
        %v1733 = vpop.permute.xlu0 %1732
        %1734 = vrot.lane.b32.xlu0 %v1629, 32
        %v1735 = vpop.permute.xlu0 %1734
        %1736 = vrot.lane.b32.xlu0 %v1630, 32
        %v1737 = vpop.permute.xlu0 %1736
        %1738 = vrot.lane.b32.xlu0 %v1631, 32
        %v1739 = vpop.permute.xlu0 %1738
        %1740 = vrot.lane.b32.xlu0 %v1632, 32
        %v1741 = vpop.permute.xlu0 %1740
        %1742 = vrot.lane.b32.xlu0 %v1633, 32
        %v1743 = vpop.permute.xlu0 %1742
        %1744 = vrot.lane.b32.xlu0 %v1634, 32
        %v1745 = vpop.permute.xlu0 %1744
        %1746 = vrot.lane.b32.xlu0 %v1635, 32
        %v1747 = vpop.permute.xlu0 %1746
        %v1764 = vsel %vm403, %v1505, %v1653
        %v1765 = vsel %vm403, %v1506, %v1655
        %v1766 = vsel %vm403, %v1507, %v1657
        %v1767 = vsel %vm403, %v1508, %v1659
        %v1768 = vsel %vm403, %v1509, %v1661
        %v1769 = vsel %vm403, %v1510, %v1663
        %v1770 = vsel %vm403, %v1511, %v1665
        %v1771 = vsel %vm403, %v1512, %v1667
        %v1772 = vsel %vm403, %v1513, %v1669
        %v1773 = vsel %vm403, %v1514, %v1671
        %v1774 = vsel %vm403, %v1515, %v1673
        %v1775 = vsel %vm403, %v1516, %v1675
        %v1776 = vsel %vm403, %v1517, %v1677
        %v1777 = vsel %vm403, %v1518, %v1679
        %v1778 = vsel %vm403, %v1519, %v1681
        %v1779 = vsel %vm403, %v1520, %v1683
        %vm1780 = vcmask 261120
        %v1781 = vsel %vm1780, %v1764, %v1717
        %v1782 = vsel %vm1780, %v1765, %v1719
        %v1783 = vsel %vm1780, %v1766, %v1721
        %v1784 = vsel %vm1780, %v1767, %v1723
        %v1785 = vsel %vm1780, %v1768, %v1725
        %v1786 = vsel %vm1780, %v1769, %v1727
        %v1787 = vsel %vm1780, %v1770, %v1729
        %v1788 = vsel %vm1780, %v1771, %v1731
        %v1789 = vsel %vm1780, %v1772, %v1733
        %v1790 = vsel %vm1780, %v1773, %v1735
        %v1791 = vsel %vm1780, %v1774, %v1737
        %v1792 = vsel %vm1780, %v1775, %v1739
        %v1793 = vsel %vm1780, %v1776, %v1741
        %v1794 = vsel %vm1780, %v1777, %v1743
        %v1795 = vsel %vm1780, %v1778, %v1745
        %v1796 = vsel %vm1780, %v1779, %v1747
        %v1797 = vld [vmem:[%s5] sm:$0xff]
        %v1798 = vld [vmem:[%s5 + $0x8] sm:$0xff]
        %v1799 = vld [vmem:[%s5 + $0x10] sm:$0xff]
        %v1800 = vld [vmem:[%s5 + $0x18] sm:$0xff]
        %v1801 = vld [vmem:[%s5 + $0x20] sm:$0xff]
        %v1802 = vld [vmem:[%s5 + $0x28] sm:$0xff]
        %s1803 = sadd.s32 %s1387, 24
        %s1804 = sadd.s32 %s1387, 23
        %s1805 = scalar_lea.vmem [#allocation2], %s1804
        %v1806 = vld [vmem:[%s1805] sm:$0xff]
        %v1807 = vld [vmem:[%s1805 + $0x8] sm:$0xff]
        %v1808 = vld [vmem:[%s1805 + $0x10] sm:$0xff]
        %v1809 = vld [vmem:[%s1805 + $0x18] sm:$0xff]
        %v1810 = vld [vmem:[%s1805 + $0x20] sm:$0xff]
        %v1811 = vld [vmem:[%s1805 + $0x28] sm:$0xff]
        %v1812 = vld [vmem:[%s1805 + $0x30] sm:$0xff]
        %v1813 = vld [vmem:[%s1805 + $0x38] sm:$0xff]
        %v1814 = vld [vmem:[%s1805 + $0x40] sm:$0xff]
        %v1815 = vld [vmem:[%s1805 + $0x48] sm:$0xff]
        %v1816 = vld [vmem:[%s1805 + $0x50] sm:$0xff]
        %v1817 = vld [vmem:[%s1805 + $0x58] sm:$0xff]
        %v1818 = vld [vmem:[%s1805 + $0x60] sm:$0xff]
        %v1819 = vld [vmem:[%s1805 + $0x68] sm:$0xff]
        %v1820 = vld [vmem:[%s1805 + $0x70] sm:$0xff]
        %v1821 = vld [vmem:[%s1805 + $0x78] sm:$0xff]
        %v1822 = vmul.f32 %v1806, %v1428
        %v1823 = vmul.f32 %v1807, %v1433
        %v1824 = vmul.f32 %v1808, %v1438
        %v1825 = vmul.f32 %v1809, %v1443
        %v1826 = vmul.f32 %v1810, %v1448
        %v1827 = vmul.f32 %v1811, %v1453
        %v1828 = vmul.f32 %v1812, %v1458
        %v1829 = vmul.f32 %v1813, %v1463
        %v1830 = vmul.f32 %v1814, %v1468
        %v1831 = vmul.f32 %v1815, %v1473
        %v1832 = vmul.f32 %v1816, %v1478
        %v1833 = vmul.f32 %v1817, %v1483
        %v1834 = vmul.f32 %v1818, %v1488
        %v1835 = vmul.f32 %v1819, %v1493
        %v1836 = vmul.f32 %v1820, %v1498
        %v1837 = vmul.f32 %v1821, %v1503
        %s1838 = scalar_lea.vmem [#allocation2], %s1803
        %v1839 = vld [vmem:[%s1838] sm:$0xff]
        %v1840 = vld [vmem:[%s1838 + $0x8] sm:$0xff]
        %v1841 = vld [vmem:[%s1838 + $0x10] sm:$0xff]
        %v1842 = vld [vmem:[%s1838 + $0x18] sm:$0xff]
        %v1843 = vld [vmem:[%s1838 + $0x20] sm:$0xff]
        %v1844 = vld [vmem:[%s1838 + $0x28] sm:$0xff]
        %v1845 = vld [vmem:[%s1838 + $0x30] sm:$0xff]
        %v1846 = vld [vmem:[%s1838 + $0x38] sm:$0xff]
        %v1847 = vld [vmem:[%s1838 + $0x40] sm:$0xff]
        %v1848 = vld [vmem:[%s1838 + $0x48] sm:$0xff]
        %v1849 = vld [vmem:[%s1838 + $0x50] sm:$0xff]
        %v1850 = vld [vmem:[%s1838 + $0x58] sm:$0xff]
        %v1851 = vld [vmem:[%s1838 + $0x60] sm:$0xff]
        %v1852 = vld [vmem:[%s1838 + $0x68] sm:$0xff]
        %v1853 = vld [vmem:[%s1838 + $0x70] sm:$0xff]
        %v1854 = vld [vmem:[%s1838 + $0x78] sm:$0xff]
        %s1855 = sadd.s32 %s1387, 25
        %s1856 = scalar_lea.vmem [#allocation2], %s1855
        %v1857 = vld [vmem:[%s1856] sm:$0xff]
        %v1858 = vld [vmem:[%s1856 + $0x8] sm:$0xff]
        %v1859 = vld [vmem:[%s1856 + $0x10] sm:$0xff]
        %v1860 = vld [vmem:[%s1856 + $0x18] sm:$0xff]
        %v1861 = vld [vmem:[%s1856 + $0x20] sm:$0xff]
        %v1862 = vld [vmem:[%s1856 + $0x28] sm:$0xff]
        %v1863 = vld [vmem:[%s1856 + $0x30] sm:$0xff]
        %v1864 = vld [vmem:[%s1856 + $0x38] sm:$0xff]
        %v1865 = vld [vmem:[%s1856 + $0x40] sm:$0xff]
        %v1866 = vld [vmem:[%s1856 + $0x48] sm:$0xff]
        %v1867 = vld [vmem:[%s1856 + $0x50] sm:$0xff]
        %v1868 = vld [vmem:[%s1856 + $0x58] sm:$0xff]
        %v1869 = vld [vmem:[%s1856 + $0x60] sm:$0xff]
        %v1870 = vld [vmem:[%s1856 + $0x68] sm:$0xff]
        %v1871 = vld [vmem:[%s1856 + $0x70] sm:$0xff]
        %v1872 = vld [vmem:[%s1856 + $0x78] sm:$0xff]
        %v1873 = vmul.f32 %v1857, %v1558
        %v1874 = vmul.f32 %v1858, %v1562
        %v1875 = vmul.f32 %v1859, %v1566
        %v1876 = vmul.f32 %v1860, %v1570
        %v1877 = vmul.f32 %v1861, %v1574
        %v1878 = vmul.f32 %v1862, %v1578
        %v1879 = vmul.f32 %v1863, %v1582
        %v1880 = vmul.f32 %v1864, %v1586
        %v1881 = vmul.f32 %v1865, %v1590
        %v1882 = vmul.f32 %v1866, %v1594
        %v1883 = vmul.f32 %v1867, %v1598
        %v1884 = vmul.f32 %v1868, %v1602
        %v1885 = vmul.f32 %v1869, %v1606
        %v1886 = vmul.f32 %v1870, %v1610
        %v1887 = vmul.f32 %v1871, %v1614
        %v1888 = vmul.f32 %v1872, %v1618
        %1905 = vrot.lane.b32.xlu0 %v1839, 16
        %v1906 = vpop.permute.xlu0 %1905
        %1907 = vrot.lane.b32.xlu0 %v1840, 16
        %v1908 = vpop.permute.xlu0 %1907
        %1909 = vrot.lane.b32.xlu0 %v1841, 16
        %v1910 = vpop.permute.xlu0 %1909
        %1911 = vrot.lane.b32.xlu0 %v1842, 16
        %v1912 = vpop.permute.xlu0 %1911
        %1913 = vrot.lane.b32.xlu0 %v1843, 16
        %v1914 = vpop.permute.xlu0 %1913
        %1915 = vrot.lane.b32.xlu0 %v1844, 16
        %v1916 = vpop.permute.xlu0 %1915
        %1917 = vrot.lane.b32.xlu0 %v1845, 16
        %v1918 = vpop.permute.xlu0 %1917
        %1919 = vrot.lane.b32.xlu0 %v1846, 16
        %v1920 = vpop.permute.xlu0 %1919
        %1921 = vrot.lane.b32.xlu0 %v1847, 16
        %v1922 = vpop.permute.xlu0 %1921
        %1923 = vrot.lane.b32.xlu0 %v1848, 16
        %v1924 = vpop.permute.xlu0 %1923
        %1925 = vrot.lane.b32.xlu0 %v1849, 16
        %v1926 = vpop.permute.xlu0 %1925
        %1927 = vrot.lane.b32.xlu0 %v1850, 16
        %v1928 = vpop.permute.xlu0 %1927
        %1929 = vrot.lane.b32.xlu0 %v1851, 16
        %v1930 = vpop.permute.xlu0 %1929
        %1931 = vrot.lane.b32.xlu0 %v1852, 16
        %v1932 = vpop.permute.xlu0 %1931
        %1933 = vrot.lane.b32.xlu0 %v1853, 16
        %v1934 = vpop.permute.xlu0 %1933
        %1935 = vrot.lane.b32.xlu0 %v1854, 16
        %v1936 = vpop.permute.xlu0 %1935
        %1969 = vrot.lane.b32.xlu0 %v1873, 32
        %v1970 = vpop.permute.xlu0 %1969
        %1971 = vrot.lane.b32.xlu0 %v1874, 32
        %v1972 = vpop.permute.xlu0 %1971
        %1973 = vrot.lane.b32.xlu0 %v1875, 32
        %v1974 = vpop.permute.xlu0 %1973
        %1975 = vrot.lane.b32.xlu0 %v1876, 32
        %v1976 = vpop.permute.xlu0 %1975
        %1977 = vrot.lane.b32.xlu0 %v1877, 32
        %v1978 = vpop.permute.xlu0 %1977
        %1979 = vrot.lane.b32.xlu0 %v1878, 32
        %v1980 = vpop.permute.xlu0 %1979
        %1981 = vrot.lane.b32.xlu0 %v1879, 32
        %v1982 = vpop.permute.xlu0 %1981
        %1983 = vrot.lane.b32.xlu0 %v1880, 32
        %v1984 = vpop.permute.xlu0 %1983
        %1985 = vrot.lane.b32.xlu0 %v1881, 32
        %v1986 = vpop.permute.xlu0 %1985
        %1987 = vrot.lane.b32.xlu0 %v1882, 32
        %v1988 = vpop.permute.xlu0 %1987
        %1989 = vrot.lane.b32.xlu0 %v1883, 32
        %v1990 = vpop.permute.xlu0 %1989
        %1991 = vrot.lane.b32.xlu0 %v1884, 32
        %v1992 = vpop.permute.xlu0 %1991
        %1993 = vrot.lane.b32.xlu0 %v1885, 32
        %v1994 = vpop.permute.xlu0 %1993
        %1995 = vrot.lane.b32.xlu0 %v1886, 32
        %v1996 = vpop.permute.xlu0 %1995
        %1997 = vrot.lane.b32.xlu0 %v1887, 32
        %v1998 = vpop.permute.xlu0 %1997
        %1999 = vrot.lane.b32.xlu0 %v1888, 32
        %v2000 = vpop.permute.xlu0 %1999
        %v2017 = vsel %vm403, %v1822, %v1906
        %v2018 = vsel %vm403, %v1823, %v1908
        %v2019 = vsel %vm403, %v1824, %v1910
        %v2020 = vsel %vm403, %v1825, %v1912
        %v2021 = vsel %vm403, %v1826, %v1914
        %v2022 = vsel %vm403, %v1827, %v1916
        %v2023 = vsel %vm403, %v1828, %v1918
        %v2024 = vsel %vm403, %v1829, %v1920
        %v2025 = vsel %vm403, %v1830, %v1922
        %v2026 = vsel %vm403, %v1831, %v1924
        %v2027 = vsel %vm403, %v1832, %v1926
        %v2028 = vsel %vm403, %v1833, %v1928
        %v2029 = vsel %vm403, %v1834, %v1930
        %v2030 = vsel %vm403, %v1835, %v1932
        %v2031 = vsel %vm403, %v1836, %v1934
        %v2032 = vsel %vm403, %v1837, %v1936
        %v2033 = vsel %vm1780, %v2017, %v1970
        %v2034 = vsel %vm1780, %v2018, %v1972
        %v2035 = vsel %vm1780, %v2019, %v1974
        %v2036 = vsel %vm1780, %v2020, %v1976
        %v2037 = vsel %vm1780, %v2021, %v1978
        %v2038 = vsel %vm1780, %v2022, %v1980
        %v2039 = vsel %vm1780, %v2023, %v1982
        %v2040 = vsel %vm1780, %v2024, %v1984
        %v2041 = vsel %vm1780, %v2025, %v1986
        %v2042 = vsel %vm1780, %v2026, %v1988
        %v2043 = vsel %vm1780, %v2027, %v1990
        %v2044 = vsel %vm1780, %v2028, %v1992
        %v2045 = vsel %vm1780, %v2029, %v1994
        %v2046 = vsel %vm1780, %v2030, %v1996
        %v2047 = vsel %vm1780, %v2031, %v1998
        %v2048 = vsel %vm1780, %v2032, %v2000
        %v2049 = vld [vmem:[%s5 + $0x30] sm:$0xff]
        %v2050 = vld [vmem:[%s5 + $0x38] sm:$0xff]
        %v2051 = vld [vmem:[%s5 + $0x40] sm:$0xff]
        %v2052 = vld [vmem:[%s5 + $0x48] sm:$0xff]
        %v2053 = vld [vmem:[%s5 + $0x50] sm:$0xff]
        %v2054 = vld [vmem:[%s5 + $0x58] sm:$0xff]
        %vm2055 = vcmask 392192
        %v2057 = vsel %vm2055, %v2033, 0
        %v2060 = vsel %vm2055, %v2034, 0
        %v2063 = vsel %vm2055, %v2035, 0
        %v2066 = vsel %vm2055, %v2036, 0
        %v2069 = vsel %vm2055, %v2037, 0
        %v2072 = vsel %vm2055, %v2038, 0
        %v2075 = vsel %vm2055, %v2039, 0
        %v2078 = vsel %vm2055, %v2040, 0
        %v2081 = vsel %vm2055, %v2041, 0
        %v2084 = vsel %vm2055, %v2042, 0
        %v2087 = vsel %vm2055, %v2043, 0
        %v2090 = vsel %vm2055, %v2044, 0
        %v2093 = vsel %vm2055, %v2045, 0
        %v2096 = vsel %vm2055, %v2046, 0
        %v2099 = vsel %vm2055, %v2047, 0
        %v2102 = vsel %vm2055, %v2048, 0
        %2104 = vmatprep.subr.mxu0 0.0
        %2105 = vmatpush1.msra.mxu0 %v2049
        %2106 = vmatprep.subr.mxu0 0.0
        %2107 = vmatpush1.msra.mxu0 %v2050
        %2108 = vmatprep.subr.mxu0 0.0
        %2109 = vmatpush1.msra.mxu0 %v2051
        %2110 = vmatprep.subr.mxu0 0.0
        %2111 = vmatpush1.msra.mxu0 %v2052
        %2112 = vmatprep.subr.mxu0 0.0
        %2113 = vmatpush1.msra.mxu0 %v2053
        %2114 = vmatprep.subr.mxu0 0.0
        %2115 = vmatpush1.msra.mxu0 %v2054
        %2116 = vmatprep.subr.mxu0 0.0
        %2117 = vmatpush1.msra.mxu0 0.0
        %2118 = vmatprep.subr.mxu0 0.0
        %2119 = vmatpush1.msra.mxu0 0.0
        %2120 = vmatprep.subr.mxu0 0.0
        %2121 = vmatpush1.msra.mxu0 0.0
        %2122 = vmatprep.subr.mxu0 0.0
        %2123 = vmatpush1.msra.mxu0 0.0
        %2124 = vmatprep.subr.mxu0 0.0
        %2125 = vmatpush1.msra.mxu0 0.0
        %2126 = vmatprep.subr.mxu0 0.0
        %2127 = vmatpush1.msra.mxu0 0.0
        %2128 = vmatprep.subr.mxu0 0.0
        %2129 = vmatpush1.msra.mxu0 0.0
        %2130 = vmatprep.subr.mxu0 0.0
        %2131 = vmatpush1.msra.mxu0 0.0
        %2132 = vmatprep.subr.mxu0 0.0
        %2133 = vmatpush1.msra.mxu0 0.0
        %2134 = vmatprep.subr.mxu0 0.0
        %2135 = vmatpush1.msra.mxu0 0.0
        %2136 = vmatprep.subr.mxu0 0.0
        %2137 = vmatpush1.msra.mxu0 0.0
        %2138 = vmatprep.subr.mxu0 0.0
        %2139 = vmatpush1.msra.mxu0 0.0
        %2140 = vmatprep.subr.mxu0 0.0
        %2141 = vmatpush1.msra.mxu0 0.0
        %2142 = vmatprep.subr.mxu0 0.0
        %2143 = vmatpush1.msra.mxu0 0.0
        %2144 = vmatprep.subr.mxu0 0.0
        %2145 = vmatpush1.msra.mxu0 0.0
        %2146 = vmatprep.subr.mxu0 0.0
        %2147 = vmatpush1.msra.mxu0 0.0
        %2148 = vmatprep.subr.mxu0 0.0
        %2149 = vmatpush1.msra.mxu0 0.0
        %2150 = vmatprep.subr.mxu0 0.0
        %2151 = vmatpush1.msra.mxu0 0.0
        %2152 = vmatprep.subr.mxu0 0.0
        %2153 = vmatpush1.msra.mxu0 0.0
        %2154 = vmatprep.subr.mxu0 0.0
        %2155 = vmatpush1.msra.mxu0 0.0
        %2156 = vmatprep.subr.mxu0 0.0
        %2157 = vmatpush1.msra.mxu0 0.0
        %2158 = vmatprep.subr.mxu0 0.0
        %2159 = vmatpush1.msra.mxu0 0.0
        %2160 = vmatprep.subr.mxu0 0.0
        %2161 = vmatpush1.msra.mxu0 0.0
        %2162 = vmatprep.subr.mxu0 0.0
        %2163 = vmatpush1.msra.mxu0 0.0
        %2164 = vmatprep.subr.mxu0 0.0
        %2165 = vmatpush1.msra.mxu0 0.0
        %2166 = vmatprep.subr.mxu0 0.0
        %2167 = vmatpush1.msra.mxu0 0.0
        %2168 = vmatprep.mubr.f32.mxu0 0.0
        %2169 = vmatmul.mubr.f32.gmra.mrb[0].mxu0 %v2057
        %v2170 = vpop.f32.mrb[0].mxu0
        %v2171 = vadd.f32 0.0, %v2170
        %v2172 = vpop.f32.mrb[0].mxu0
        %2173 = vmatprep.mubr.f32.mxu0 0.0
        %2174 = vmatmul.mubr.f32.gmra.mrb[0].mxu0 %v2060
        %v2175 = vpop.f32.mrb[0].mxu0
        %v2176 = vadd.f32 0.0, %v2175
        %v2177 = vpop.f32.mrb[0].mxu0
        %2178 = vmatprep.mubr.f32.mxu0 0.0
        %2179 = vmatmul.mubr.f32.gmra.mrb[0].mxu0 %v2063
        %v2180 = vpop.f32.mrb[0].mxu0
        %v2181 = vadd.f32 0.0, %v2180
        %v2182 = vpop.f32.mrb[0].mxu0
        %2183 = vmatprep.mubr.f32.mxu0 0.0
        %2184 = vmatmul.mubr.f32.gmra.mrb[0].mxu0 %v2066
        %v2185 = vpop.f32.mrb[0].mxu0
        %v2186 = vadd.f32 0.0, %v2185
        %v2187 = vpop.f32.mrb[0].mxu0
        %2188 = vmatprep.mubr.f32.mxu0 0.0
        %2189 = vmatmul.mubr.f32.gmra.mrb[0].mxu0 %v2069
        %v2190 = vpop.f32.mrb[0].mxu0
        %v2191 = vadd.f32 0.0, %v2190
        %v2192 = vpop.f32.mrb[0].mxu0
        %2193 = vmatprep.mubr.f32.mxu0 0.0
        %2194 = vmatmul.mubr.f32.gmra.mrb[0].mxu0 %v2072
        %v2195 = vpop.f32.mrb[0].mxu0
        %v2196 = vadd.f32 0.0, %v2195
        %v2197 = vpop.f32.mrb[0].mxu0
        %2198 = vmatprep.mubr.f32.mxu0 0.0
        %2199 = vmatmul.mubr.f32.gmra.mrb[0].mxu0 %v2075
        %v2200 = vpop.f32.mrb[0].mxu0
        %v2201 = vadd.f32 0.0, %v2200
        %v2202 = vpop.f32.mrb[0].mxu0
        %2203 = vmatprep.mubr.f32.mxu0 0.0
        %2204 = vmatmul.mubr.f32.gmra.mrb[0].mxu0 %v2078
        %v2205 = vpop.f32.mrb[0].mxu0
        %v2206 = vadd.f32 0.0, %v2205
        %v2207 = vpop.f32.mrb[0].mxu0
        %2208 = vmatprep.mubr.f32.mxu0 0.0
        %2209 = vmatmul.mubr.f32.gmra.mrb[0].mxu0 %v2081
        %v2210 = vpop.f32.mrb[0].mxu0
        %v2211 = vadd.f32 0.0, %v2210
        %v2212 = vpop.f32.mrb[0].mxu0
        %2213 = vmatprep.mubr.f32.mxu0 0.0
        %2214 = vmatmul.mubr.f32.gmra.mrb[0].mxu0 %v2084
        %v2215 = vpop.f32.mrb[0].mxu0
        %v2216 = vadd.f32 0.0, %v2215
        %v2217 = vpop.f32.mrb[0].mxu0
        %2218 = vmatprep.mubr.f32.mxu0 0.0
        %2219 = vmatmul.mubr.f32.gmra.mrb[0].mxu0 %v2087
        %v2220 = vpop.f32.mrb[0].mxu0
        %v2221 = vadd.f32 0.0, %v2220
        %v2222 = vpop.f32.mrb[0].mxu0
        %2223 = vmatprep.mubr.f32.mxu0 0.0
        %2224 = vmatmul.mubr.f32.gmra.mrb[0].mxu0 %v2090
        %v2225 = vpop.f32.mrb[0].mxu0
        %v2226 = vadd.f32 0.0, %v2225
        %v2227 = vpop.f32.mrb[0].mxu0
        %2228 = vmatprep.mubr.f32.mxu0 0.0
        %2229 = vmatmul.mubr.f32.gmra.mrb[0].mxu0 %v2093
        %v2230 = vpop.f32.mrb[0].mxu0
        %v2231 = vadd.f32 0.0, %v2230
        %v2232 = vpop.f32.mrb[0].mxu0
        %2233 = vmatprep.mubr.f32.mxu0 0.0
        %2234 = vmatmul.mubr.f32.gmra.mrb[0].mxu0 %v2096
        %v2235 = vpop.f32.mrb[0].mxu0
        %v2236 = vadd.f32 0.0, %v2235
        %v2237 = vpop.f32.mrb[0].mxu0
        %2238 = vmatprep.mubr.f32.mxu0 0.0
        %2239 = vmatmul.mubr.f32.gmra.mrb[0].mxu0 %v2099
        %v2240 = vpop.f32.mrb[0].mxu0
        %v2241 = vadd.f32 0.0, %v2240
        %v2242 = vpop.f32.mrb[0].mxu0
        %2243 = vmatprep.mubr.f32.mxu0 0.0
        %2244 = vmatmul.mubr.f32.gmra.mrb[0].mxu0 %v2102
        %v2245 = vpop.f32.mrb[0].mxu0
        %v2246 = vadd.f32 0.0, %v2245
        %v2247 = vpop.f32.mrb[0].mxu0
        %2248 = vdwg.mxu0
        %v2250 = vsel %vm2055, %v1781, 0
        %v2253 = vsel %vm2055, %v1782, 0
        %v2256 = vsel %vm2055, %v1783, 0
        %v2259 = vsel %vm2055, %v1784, 0
        %v2262 = vsel %vm2055, %v1785, 0
        %v2265 = vsel %vm2055, %v1786, 0
        %v2268 = vsel %vm2055, %v1787, 0
        %v2271 = vsel %vm2055, %v1788, 0
        %v2274 = vsel %vm2055, %v1789, 0
        %v2277 = vsel %vm2055, %v1790, 0
        %v2280 = vsel %vm2055, %v1791, 0
        %v2283 = vsel %vm2055, %v1792, 0
        %v2286 = vsel %vm2055, %v1793, 0
        %v2289 = vsel %vm2055, %v1794, 0
        %v2292 = vsel %vm2055, %v1795, 0
        %v2295 = vsel %vm2055, %v1796, 0
        %2297 = vmatprep.subr.mxu0 0.0
        %2298 = vmatpush1.msra.mxu0 %v1797
        %2299 = vmatprep.subr.mxu0 0.0
        %2300 = vmatpush1.msra.mxu0 %v1798
        %2301 = vmatprep.subr.mxu0 0.0
        %2302 = vmatpush1.msra.mxu0 %v1799
        %2303 = vmatprep.subr.mxu0 0.0
        %2304 = vmatpush1.msra.mxu0 %v1800
        %2305 = vmatprep.subr.mxu0 0.0
        %2306 = vmatpush1.msra.mxu0 %v1801
        %2307 = vmatprep.subr.mxu0 0.0
        %2308 = vmatpush1.msra.mxu0 %v1802
        %2309 = vmatprep.subr.mxu0 0.0
        %2310 = vmatpush1.msra.mxu0 0.0
        %2311 = vmatprep.subr.mxu0 0.0
        %2312 = vmatpush1.msra.mxu0 0.0
        %2313 = vmatprep.subr.mxu0 0.0
        %2314 = vmatpush1.msra.mxu0 0.0
        %2315 = vmatprep.subr.mxu0 0.0
        %2316 = vmatpush1.msra.mxu0 0.0
        %2317 = vmatprep.subr.mxu0 0.0
        %2318 = vmatpush1.msra.mxu0 0.0
        %2319 = vmatprep.subr.mxu0 0.0
        %2320 = vmatpush1.msra.mxu0 0.0
        %2321 = vmatprep.subr.mxu0 0.0
        %2322 = vmatpush1.msra.mxu0 0.0
        %2323 = vmatprep.subr.mxu0 0.0
        %2324 = vmatpush1.msra.mxu0 0.0
        %2325 = vmatprep.subr.mxu0 0.0
        %2326 = vmatpush1.msra.mxu0 0.0
        %2327 = vmatprep.subr.mxu0 0.0
        %2328 = vmatpush1.msra.mxu0 0.0
        %2329 = vmatprep.subr.mxu0 0.0
        %2330 = vmatpush1.msra.mxu0 0.0
        %2331 = vmatprep.subr.mxu0 0.0
        %2332 = vmatpush1.msra.mxu0 0.0
        %2333 = vmatprep.subr.mxu0 0.0
        %2334 = vmatpush1.msra.mxu0 0.0
        %2335 = vmatprep.subr.mxu0 0.0
        %2336 = vmatpush1.msra.mxu0 0.0
        %2337 = vmatprep.subr.mxu0 0.0
        %2338 = vmatpush1.msra.mxu0 0.0
        %2339 = vmatprep.subr.mxu0 0.0
        %2340 = vmatpush1.msra.mxu0 0.0
        %2341 = vmatprep.subr.mxu0 0.0
        %2342 = vmatpush1.msra.mxu0 0.0
        %2343 = vmatprep.subr.mxu0 0.0
        %2344 = vmatpush1.msra.mxu0 0.0
        %2345 = vmatprep.subr.mxu0 0.0
        %2346 = vmatpush1.msra.mxu0 0.0
        %2347 = vmatprep.subr.mxu0 0.0
        %2348 = vmatpush1.msra.mxu0 0.0
        %2349 = vmatprep.subr.mxu0 0.0
        %2350 = vmatpush1.msra.mxu0 0.0
        %2351 = vmatprep.subr.mxu0 0.0
        %2352 = vmatpush1.msra.mxu0 0.0
        %2353 = vmatprep.subr.mxu0 0.0
        %2354 = vmatpush1.msra.mxu0 0.0
        %2355 = vmatprep.subr.mxu0 0.0
        %2356 = vmatpush1.msra.mxu0 0.0
        %2357 = vmatprep.subr.mxu0 0.0
        %2358 = vmatpush1.msra.mxu0 0.0
        %2359 = vmatprep.subr.mxu0 0.0
        %2360 = vmatpush1.msra.mxu0 0.0
        %2361 = vmatprep.mubr.f32.mxu0 0.0
        %2362 = vmatmul.mubr.f32.gmra.mrb[0].mxu0 %v2250
        %v2363 = vpop.f32.mrb[0].mxu0
        %v2364 = vadd.f32 %v2171, %v2363
        %v2365 = vpop.f32.mrb[0].mxu0
        %2366 = vmatprep.mubr.f32.mxu0 0.0
        %2367 = vmatmul.mubr.f32.gmra.mrb[0].mxu0 %v2253
        %v2368 = vpop.f32.mrb[0].mxu0
        %v2369 = vadd.f32 %v2176, %v2368
        %v2370 = vpop.f32.mrb[0].mxu0
        %2371 = vmatprep.mubr.f32.mxu0 0.0
        %2372 = vmatmul.mubr.f32.gmra.mrb[0].mxu0 %v2256
        %v2373 = vpop.f32.mrb[0].mxu0
        %v2374 = vadd.f32 %v2181, %v2373
        %v2375 = vpop.f32.mrb[0].mxu0
        %2376 = vmatprep.mubr.f32.mxu0 0.0
        %2377 = vmatmul.mubr.f32.gmra.mrb[0].mxu0 %v2259
        %v2378 = vpop.f32.mrb[0].mxu0
        %v2379 = vadd.f32 %v2186, %v2378
        %v2380 = vpop.f32.mrb[0].mxu0
        %2381 = vmatprep.mubr.f32.mxu0 0.0
        %2382 = vmatmul.mubr.f32.gmra.mrb[0].mxu0 %v2262
        %v2383 = vpop.f32.mrb[0].mxu0
        %v2384 = vadd.f32 %v2191, %v2383
        %v2385 = vpop.f32.mrb[0].mxu0
        %2386 = vmatprep.mubr.f32.mxu0 0.0
        %2387 = vmatmul.mubr.f32.gmra.mrb[0].mxu0 %v2265
        %v2388 = vpop.f32.mrb[0].mxu0
        %v2389 = vadd.f32 %v2196, %v2388
        %v2390 = vpop.f32.mrb[0].mxu0
        %2391 = vmatprep.mubr.f32.mxu0 0.0
        %2392 = vmatmul.mubr.f32.gmra.mrb[0].mxu0 %v2268
        %v2393 = vpop.f32.mrb[0].mxu0
        %v2394 = vadd.f32 %v2201, %v2393
        %v2395 = vpop.f32.mrb[0].mxu0
        %2396 = vmatprep.mubr.f32.mxu0 0.0
        %2397 = vmatmul.mubr.f32.gmra.mrb[0].mxu0 %v2271
        %v2398 = vpop.f32.mrb[0].mxu0
        %v2399 = vadd.f32 %v2206, %v2398
        %v2400 = vpop.f32.mrb[0].mxu0
        %2401 = vmatprep.mubr.f32.mxu0 0.0
        %2402 = vmatmul.mubr.f32.gmra.mrb[0].mxu0 %v2274
        %v2403 = vpop.f32.mrb[0].mxu0
        %v2404 = vadd.f32 %v2211, %v2403
        %v2405 = vpop.f32.mrb[0].mxu0
        %2406 = vmatprep.mubr.f32.mxu0 0.0
        %2407 = vmatmul.mubr.f32.gmra.mrb[0].mxu0 %v2277
        %v2408 = vpop.f32.mrb[0].mxu0
        %v2409 = vadd.f32 %v2216, %v2408
        %v2410 = vpop.f32.mrb[0].mxu0
        %2411 = vmatprep.mubr.f32.mxu0 0.0
        %2412 = vmatmul.mubr.f32.gmra.mrb[0].mxu0 %v2280
        %v2413 = vpop.f32.mrb[0].mxu0
        %v2414 = vadd.f32 %v2221, %v2413
        %v2415 = vpop.f32.mrb[0].mxu0
        %2416 = vmatprep.mubr.f32.mxu0 0.0
        %2417 = vmatmul.mubr.f32.gmra.mrb[0].mxu0 %v2283
        %v2418 = vpop.f32.mrb[0].mxu0
        %v2419 = vadd.f32 %v2226, %v2418
        %v2420 = vpop.f32.mrb[0].mxu0
        %2421 = vmatprep.mubr.f32.mxu0 0.0
        %2422 = vmatmul.mubr.f32.gmra.mrb[0].mxu0 %v2286
        %v2423 = vpop.f32.mrb[0].mxu0
        %v2424 = vadd.f32 %v2231, %v2423
        %v2425 = vpop.f32.mrb[0].mxu0
        %2426 = vmatprep.mubr.f32.mxu0 0.0
        %2427 = vmatmul.mubr.f32.gmra.mrb[0].mxu0 %v2289
        %v2428 = vpop.f32.mrb[0].mxu0
        %v2429 = vadd.f32 %v2236, %v2428
        %v2430 = vpop.f32.mrb[0].mxu0
        %2431 = vmatprep.mubr.f32.mxu0 0.0
        %2432 = vmatmul.mubr.f32.gmra.mrb[0].mxu0 %v2292
        %v2433 = vpop.f32.mrb[0].mxu0
        %v2434 = vadd.f32 %v2241, %v2433
        %v2435 = vpop.f32.mrb[0].mxu0
        %2436 = vmatprep.mubr.f32.mxu0 0.0
        %2437 = vmatmul.mubr.f32.gmra.mrb[0].mxu0 %v2295
        %v2438 = vpop.f32.mrb[0].mxu0
        %v2439 = vadd.f32 %v2246, %v2438
        %v2440 = vpop.f32.mrb[0].mxu0
        %2441 = vdwg.mxu0
        %s2442 = sadd.s32 %s1387, 40
        %s2443 = sadd.s32 %s1387, 39
        %s2444 = scalar_lea.vmem [#allocation2], %s2443
        %v2445 = vld [vmem:[%s2444] sm:$0xff]
        %v2446 = vld [vmem:[%s2444 + $0x8] sm:$0xff]
        %v2447 = vld [vmem:[%s2444 + $0x10] sm:$0xff]
        %v2448 = vld [vmem:[%s2444 + $0x18] sm:$0xff]
        %v2449 = vld [vmem:[%s2444 + $0x20] sm:$0xff]
        %v2450 = vld [vmem:[%s2444 + $0x28] sm:$0xff]
        %v2451 = vld [vmem:[%s2444 + $0x30] sm:$0xff]
        %v2452 = vld [vmem:[%s2444 + $0x38] sm:$0xff]
        %v2453 = vld [vmem:[%s2444 + $0x40] sm:$0xff]
        %v2454 = vld [vmem:[%s2444 + $0x48] sm:$0xff]
        %v2455 = vld [vmem:[%s2444 + $0x50] sm:$0xff]
        %v2456 = vld [vmem:[%s2444 + $0x58] sm:$0xff]
        %v2457 = vld [vmem:[%s2444 + $0x60] sm:$0xff]
        %v2458 = vld [vmem:[%s2444 + $0x68] sm:$0xff]
        %v2459 = vld [vmem:[%s2444 + $0x70] sm:$0xff]
        %v2460 = vld [vmem:[%s2444 + $0x78] sm:$0xff]
        %v2461 = vmul.f32 %v2445, %v1428
        %v2462 = vmul.f32 %v2446, %v1433
        %v2463 = vmul.f32 %v2447, %v1438
        %v2464 = vmul.f32 %v2448, %v1443
        %v2465 = vmul.f32 %v2449, %v1448
        %v2466 = vmul.f32 %v2450, %v1453
        %v2467 = vmul.f32 %v2451, %v1458
        %v2468 = vmul.f32 %v2452, %v1463
        %v2469 = vmul.f32 %v2453, %v1468
        %v2470 = vmul.f32 %v2454, %v1473
        %v2471 = vmul.f32 %v2455, %v1478
        %v2472 = vmul.f32 %v2456, %v1483
        %v2473 = vmul.f32 %v2457, %v1488
        %v2474 = vmul.f32 %v2458, %v1493
        %v2475 = vmul.f32 %v2459, %v1498
        %v2476 = vmul.f32 %v2460, %v1503
        %s2477 = scalar_lea.vmem [#allocation2], %s2442
        %v2478 = vld [vmem:[%s2477] sm:$0xff]
        %v2479 = vld [vmem:[%s2477 + $0x8] sm:$0xff]
        %v2480 = vld [vmem:[%s2477 + $0x10] sm:$0xff]
        %v2481 = vld [vmem:[%s2477 + $0x18] sm:$0xff]
        %v2482 = vld [vmem:[%s2477 + $0x20] sm:$0xff]
        %v2483 = vld [vmem:[%s2477 + $0x28] sm:$0xff]
        %v2484 = vld [vmem:[%s2477 + $0x30] sm:$0xff]
        %v2485 = vld [vmem:[%s2477 + $0x38] sm:$0xff]
        %v2486 = vld [vmem:[%s2477 + $0x40] sm:$0xff]
        %v2487 = vld [vmem:[%s2477 + $0x48] sm:$0xff]
        %v2488 = vld [vmem:[%s2477 + $0x50] sm:$0xff]
        %v2489 = vld [vmem:[%s2477 + $0x58] sm:$0xff]
        %v2490 = vld [vmem:[%s2477 + $0x60] sm:$0xff]
        %v2491 = vld [vmem:[%s2477 + $0x68] sm:$0xff]
        %v2492 = vld [vmem:[%s2477 + $0x70] sm:$0xff]
        %v2493 = vld [vmem:[%s2477 + $0x78] sm:$0xff]
        %s2494 = sadd.s32 %s1387, 41
        %s2495 = scalar_lea.vmem [#allocation2], %s2494
        %v2496 = vld [vmem:[%s2495] sm:$0xff]
        %v2497 = vld [vmem:[%s2495 + $0x8] sm:$0xff]
        %v2498 = vld [vmem:[%s2495 + $0x10] sm:$0xff]
        %v2499 = vld [vmem:[%s2495 + $0x18] sm:$0xff]
        %v2500 = vld [vmem:[%s2495 + $0x20] sm:$0xff]
        %v2501 = vld [vmem:[%s2495 + $0x28] sm:$0xff]
        %v2502 = vld [vmem:[%s2495 + $0x30] sm:$0xff]
        %v2503 = vld [vmem:[%s2495 + $0x38] sm:$0xff]
        %v2504 = vld [vmem:[%s2495 + $0x40] sm:$0xff]
        %v2505 = vld [vmem:[%s2495 + $0x48] sm:$0xff]
        %v2506 = vld [vmem:[%s2495 + $0x50] sm:$0xff]
        %v2507 = vld [vmem:[%s2495 + $0x58] sm:$0xff]
        %v2508 = vld [vmem:[%s2495 + $0x60] sm:$0xff]
        %v2509 = vld [vmem:[%s2495 + $0x68] sm:$0xff]
        %v2510 = vld [vmem:[%s2495 + $0x70] sm:$0xff]
        %v2511 = vld [vmem:[%s2495 + $0x78] sm:$0xff]
        %v2512 = vmul.f32 %v2496, %v1558
        %v2513 = vmul.f32 %v2497, %v1562
        %v2514 = vmul.f32 %v2498, %v1566
        %v2515 = vmul.f32 %v2499, %v1570
        %v2516 = vmul.f32 %v2500, %v1574
        %v2517 = vmul.f32 %v2501, %v1578
        %v2518 = vmul.f32 %v2502, %v1582
        %v2519 = vmul.f32 %v2503, %v1586
        %v2520 = vmul.f32 %v2504, %v1590
        %v2521 = vmul.f32 %v2505, %v1594
        %v2522 = vmul.f32 %v2506, %v1598
        %v2523 = vmul.f32 %v2507, %v1602
        %v2524 = vmul.f32 %v2508, %v1606
        %v2525 = vmul.f32 %v2509, %v1610
        %v2526 = vmul.f32 %v2510, %v1614
        %v2527 = vmul.f32 %v2511, %v1618
        %2544 = vrot.lane.b32.xlu0 %v2478, 16
        %v2545 = vpop.permute.xlu0 %2544
        %2546 = vrot.lane.b32.xlu0 %v2479, 16
        %v2547 = vpop.permute.xlu0 %2546
        %2548 = vrot.lane.b32.xlu0 %v2480, 16
        %v2549 = vpop.permute.xlu0 %2548
        %2550 = vrot.lane.b32.xlu0 %v2481, 16
        %v2551 = vpop.permute.xlu0 %2550
        %2552 = vrot.lane.b32.xlu0 %v2482, 16
        %v2553 = vpop.permute.xlu0 %2552
        %2554 = vrot.lane.b32.xlu0 %v2483, 16
        %v2555 = vpop.permute.xlu0 %2554
        %2556 = vrot.lane.b32.xlu0 %v2484, 16
        %v2557 = vpop.permute.xlu0 %2556
        %2558 = vrot.lane.b32.xlu0 %v2485, 16
        %v2559 = vpop.permute.xlu0 %2558
        %2560 = vrot.lane.b32.xlu0 %v2486, 16
        %v2561 = vpop.permute.xlu0 %2560
        %2562 = vrot.lane.b32.xlu0 %v2487, 16
        %v2563 = vpop.permute.xlu0 %2562
        %2564 = vrot.lane.b32.xlu0 %v2488, 16
        %v2565 = vpop.permute.xlu0 %2564
        %2566 = vrot.lane.b32.xlu0 %v2489, 16
        %v2567 = vpop.permute.xlu0 %2566
        %2568 = vrot.lane.b32.xlu0 %v2490, 16
        %v2569 = vpop.permute.xlu0 %2568
        %2570 = vrot.lane.b32.xlu0 %v2491, 16
        %v2571 = vpop.permute.xlu0 %2570
        %2572 = vrot.lane.b32.xlu0 %v2492, 16
        %v2573 = vpop.permute.xlu0 %2572
        %2574 = vrot.lane.b32.xlu0 %v2493, 16
        %v2575 = vpop.permute.xlu0 %2574
        %2608 = vrot.lane.b32.xlu0 %v2512, 32
        %v2609 = vpop.permute.xlu0 %2608
        %2610 = vrot.lane.b32.xlu0 %v2513, 32
        %v2611 = vpop.permute.xlu0 %2610
        %2612 = vrot.lane.b32.xlu0 %v2514, 32
        %v2613 = vpop.permute.xlu0 %2612
        %2614 = vrot.lane.b32.xlu0 %v2515, 32
        %v2615 = vpop.permute.xlu0 %2614
        %2616 = vrot.lane.b32.xlu0 %v2516, 32
        %v2617 = vpop.permute.xlu0 %2616
        %2618 = vrot.lane.b32.xlu0 %v2517, 32
        %v2619 = vpop.permute.xlu0 %2618
        %2620 = vrot.lane.b32.xlu0 %v2518, 32
        %v2621 = vpop.permute.xlu0 %2620
        %2622 = vrot.lane.b32.xlu0 %v2519, 32
        %v2623 = vpop.permute.xlu0 %2622
        %2624 = vrot.lane.b32.xlu0 %v2520, 32
        %v2625 = vpop.permute.xlu0 %2624
        %2626 = vrot.lane.b32.xlu0 %v2521, 32
        %v2627 = vpop.permute.xlu0 %2626
        %2628 = vrot.lane.b32.xlu0 %v2522, 32
        %v2629 = vpop.permute.xlu0 %2628
        %2630 = vrot.lane.b32.xlu0 %v2523, 32
        %v2631 = vpop.permute.xlu0 %2630
        %2632 = vrot.lane.b32.xlu0 %v2524, 32
        %v2633 = vpop.permute.xlu0 %2632
        %2634 = vrot.lane.b32.xlu0 %v2525, 32
        %v2635 = vpop.permute.xlu0 %2634
        %2636 = vrot.lane.b32.xlu0 %v2526, 32
        %v2637 = vpop.permute.xlu0 %2636
        %2638 = vrot.lane.b32.xlu0 %v2527, 32
        %v2639 = vpop.permute.xlu0 %2638
        %v2656 = vsel %vm403, %v2461, %v2545
        %v2657 = vsel %vm403, %v2462, %v2547
        %v2658 = vsel %vm403, %v2463, %v2549
        %v2659 = vsel %vm403, %v2464, %v2551
        %v2660 = vsel %vm403, %v2465, %v2553
        %v2661 = vsel %vm403, %v2466, %v2555
        %v2662 = vsel %vm403, %v2467, %v2557
        %v2663 = vsel %vm403, %v2468, %v2559
        %v2664 = vsel %vm403, %v2469, %v2561
        %v2665 = vsel %vm403, %v2470, %v2563
        %v2666 = vsel %vm403, %v2471, %v2565
        %v2667 = vsel %vm403, %v2472, %v2567
        %v2668 = vsel %vm403, %v2473, %v2569
        %v2669 = vsel %vm403, %v2474, %v2571
        %v2670 = vsel %vm403, %v2475, %v2573
        %v2671 = vsel %vm403, %v2476, %v2575
        %v2672 = vsel %vm1780, %v2656, %v2609
        %v2673 = vsel %vm1780, %v2657, %v2611
        %v2674 = vsel %vm1780, %v2658, %v2613
        %v2675 = vsel %vm1780, %v2659, %v2615
        %v2676 = vsel %vm1780, %v2660, %v2617
        %v2677 = vsel %vm1780, %v2661, %v2619
        %v2678 = vsel %vm1780, %v2662, %v2621
        %v2679 = vsel %vm1780, %v2663, %v2623
        %v2680 = vsel %vm1780, %v2664, %v2625
        %v2681 = vsel %vm1780, %v2665, %v2627
        %v2682 = vsel %vm1780, %v2666, %v2629
        %v2683 = vsel %vm1780, %v2667, %v2631
        %v2684 = vsel %vm1780, %v2668, %v2633
        %v2685 = vsel %vm1780, %v2669, %v2635
        %v2686 = vsel %vm1780, %v2670, %v2637
        %v2687 = vsel %vm1780, %v2671, %v2639
        %v2688 = vld [vmem:[%s5 + $0x60] sm:$0xff]
        %v2689 = vld [vmem:[%s5 + $0x68] sm:$0xff]
        %v2690 = vld [vmem:[%s5 + $0x70] sm:$0xff]
        %v2691 = vld [vmem:[%s5 + $0x78] sm:$0xff]
        %v2692 = vld [vmem:[%s5 + $0x80] sm:$0xff]
        %v2693 = vld [vmem:[%s5 + $0x88] sm:$0xff]
        %v2695 = vsel %vm2055, %v2672, 0
        %v2698 = vsel %vm2055, %v2673, 0
        %v2701 = vsel %vm2055, %v2674, 0
        %v2704 = vsel %vm2055, %v2675, 0
        %v2707 = vsel %vm2055, %v2676, 0
        %v2710 = vsel %vm2055, %v2677, 0
        %v2713 = vsel %vm2055, %v2678, 0
        %v2716 = vsel %vm2055, %v2679, 0
        %v2719 = vsel %vm2055, %v2680, 0
        %v2722 = vsel %vm2055, %v2681, 0
        %v2725 = vsel %vm2055, %v2682, 0
        %v2728 = vsel %vm2055, %v2683, 0
        %v2731 = vsel %vm2055, %v2684, 0
        %v2734 = vsel %vm2055, %v2685, 0
        %v2737 = vsel %vm2055, %v2686, 0
        %v2740 = vsel %vm2055, %v2687, 0
        %2742 = vmatprep.subr.mxu0 0.0
        %2743 = vmatpush1.msra.mxu0 %v2688
        %2744 = vmatprep.subr.mxu0 0.0
        %2745 = vmatpush1.msra.mxu0 %v2689
        %2746 = vmatprep.subr.mxu0 0.0
        %2747 = vmatpush1.msra.mxu0 %v2690
        %2748 = vmatprep.subr.mxu0 0.0
        %2749 = vmatpush1.msra.mxu0 %v2691
        %2750 = vmatprep.subr.mxu0 0.0
        %2751 = vmatpush1.msra.mxu0 %v2692
        %2752 = vmatprep.subr.mxu0 0.0
        %2753 = vmatpush1.msra.mxu0 %v2693
        %2754 = vmatprep.subr.mxu0 0.0
        %2755 = vmatpush1.msra.mxu0 0.0
        %2756 = vmatprep.subr.mxu0 0.0
        %2757 = vmatpush1.msra.mxu0 0.0
        %2758 = vmatprep.subr.mxu0 0.0
        %2759 = vmatpush1.msra.mxu0 0.0
        %2760 = vmatprep.subr.mxu0 0.0
        %2761 = vmatpush1.msra.mxu0 0.0
        %2762 = vmatprep.subr.mxu0 0.0
        %2763 = vmatpush1.msra.mxu0 0.0
        %2764 = vmatprep.subr.mxu0 0.0
        %2765 = vmatpush1.msra.mxu0 0.0
        %2766 = vmatprep.subr.mxu0 0.0
        %2767 = vmatpush1.msra.mxu0 0.0
        %2768 = vmatprep.subr.mxu0 0.0
        %2769 = vmatpush1.msra.mxu0 0.0
        %2770 = vmatprep.subr.mxu0 0.0
        %2771 = vmatpush1.msra.mxu0 0.0
        %2772 = vmatprep.subr.mxu0 0.0
        %2773 = vmatpush1.msra.mxu0 0.0
        %2774 = vmatprep.subr.mxu0 0.0
        %2775 = vmatpush1.msra.mxu0 0.0
        %2776 = vmatprep.subr.mxu0 0.0
        %2777 = vmatpush1.msra.mxu0 0.0
        %2778 = vmatprep.subr.mxu0 0.0
        %2779 = vmatpush1.msra.mxu0 0.0
        %2780 = vmatprep.subr.mxu0 0.0
        %2781 = vmatpush1.msra.mxu0 0.0
        %2782 = vmatprep.subr.mxu0 0.0
        %2783 = vmatpush1.msra.mxu0 0.0
        %2784 = vmatprep.subr.mxu0 0.0
        %2785 = vmatpush1.msra.mxu0 0.0
        %2786 = vmatprep.subr.mxu0 0.0
        %2787 = vmatpush1.msra.mxu0 0.0
        %2788 = vmatprep.subr.mxu0 0.0
        %2789 = vmatpush1.msra.mxu0 0.0
        %2790 = vmatprep.subr.mxu0 0.0
        %2791 = vmatpush1.msra.mxu0 0.0
        %2792 = vmatprep.subr.mxu0 0.0
        %2793 = vmatpush1.msra.mxu0 0.0
        %2794 = vmatprep.subr.mxu0 0.0
        %2795 = vmatpush1.msra.mxu0 0.0
        %2796 = vmatprep.subr.mxu0 0.0
        %2797 = vmatpush1.msra.mxu0 0.0
        %2798 = vmatprep.subr.mxu0 0.0
        %2799 = vmatpush1.msra.mxu0 0.0
        %2800 = vmatprep.subr.mxu0 0.0
        %2801 = vmatpush1.msra.mxu0 0.0
        %2802 = vmatprep.subr.mxu0 0.0
        %2803 = vmatpush1.msra.mxu0 0.0
        %2804 = vmatprep.subr.mxu0 0.0
        %2805 = vmatpush1.msra.mxu0 0.0
        %2806 = vmatprep.mubr.f32.mxu0 0.0
        %2807 = vmatmul.mubr.f32.gmra.mrb[0].mxu0 %v2695
        %v2808 = vpop.f32.mrb[0].mxu0
        %v2809 = vadd.f32 0.0, %v2808
        %v2810 = vpop.f32.mrb[0].mxu0
        %2811 = vmatprep.mubr.f32.mxu0 0.0
        %2812 = vmatmul.mubr.f32.gmra.mrb[0].mxu0 %v2698
        %v2813 = vpop.f32.mrb[0].mxu0
        %v2814 = vadd.f32 0.0, %v2813
        %v2815 = vpop.f32.mrb[0].mxu0
        %2816 = vmatprep.mubr.f32.mxu0 0.0
        %2817 = vmatmul.mubr.f32.gmra.mrb[0].mxu0 %v2701
        %v2818 = vpop.f32.mrb[0].mxu0
        %v2819 = vadd.f32 0.0, %v2818
        %v2820 = vpop.f32.mrb[0].mxu0
        %2821 = vmatprep.mubr.f32.mxu0 0.0
        %2822 = vmatmul.mubr.f32.gmra.mrb[0].mxu0 %v2704
        %v2823 = vpop.f32.mrb[0].mxu0
        %v2824 = vadd.f32 0.0, %v2823
        %v2825 = vpop.f32.mrb[0].mxu0
        %2826 = vmatprep.mubr.f32.mxu0 0.0
        %2827 = vmatmul.mubr.f32.gmra.mrb[0].mxu0 %v2707
        %v2828 = vpop.f32.mrb[0].mxu0
        %v2829 = vadd.f32 0.0, %v2828
        %v2830 = vpop.f32.mrb[0].mxu0
        %2831 = vmatprep.mubr.f32.mxu0 0.0
        %2832 = vmatmul.mubr.f32.gmra.mrb[0].mxu0 %v2710
        %v2833 = vpop.f32.mrb[0].mxu0
        %v2834 = vadd.f32 0.0, %v2833
        %v2835 = vpop.f32.mrb[0].mxu0
        %2836 = vmatprep.mubr.f32.mxu0 0.0
        %2837 = vmatmul.mubr.f32.gmra.mrb[0].mxu0 %v2713
        %v2838 = vpop.f32.mrb[0].mxu0
        %v2839 = vadd.f32 0.0, %v2838
        %v2840 = vpop.f32.mrb[0].mxu0
        %2841 = vmatprep.mubr.f32.mxu0 0.0
        %2842 = vmatmul.mubr.f32.gmra.mrb[0].mxu0 %v2716
        %v2843 = vpop.f32.mrb[0].mxu0
        %v2844 = vadd.f32 0.0, %v2843
        %v2845 = vpop.f32.mrb[0].mxu0
        %2846 = vmatprep.mubr.f32.mxu0 0.0
        %2847 = vmatmul.mubr.f32.gmra.mrb[0].mxu0 %v2719
        %v2848 = vpop.f32.mrb[0].mxu0
        %v2849 = vadd.f32 0.0, %v2848
        %v2850 = vpop.f32.mrb[0].mxu0
        %2851 = vmatprep.mubr.f32.mxu0 0.0
        %2852 = vmatmul.mubr.f32.gmra.mrb[0].mxu0 %v2722
        %v2853 = vpop.f32.mrb[0].mxu0
        %v2854 = vadd.f32 0.0, %v2853
        %v2855 = vpop.f32.mrb[0].mxu0
        %2856 = vmatprep.mubr.f32.mxu0 0.0
        %2857 = vmatmul.mubr.f32.gmra.mrb[0].mxu0 %v2725
        %v2858 = vpop.f32.mrb[0].mxu0
        %v2859 = vadd.f32 0.0, %v2858
        %v2860 = vpop.f32.mrb[0].mxu0
        %2861 = vmatprep.mubr.f32.mxu0 0.0
        %2862 = vmatmul.mubr.f32.gmra.mrb[0].mxu0 %v2728
        %v2863 = vpop.f32.mrb[0].mxu0
        %v2864 = vadd.f32 0.0, %v2863
        %v2865 = vpop.f32.mrb[0].mxu0
        %2866 = vmatprep.mubr.f32.mxu0 0.0
        %2867 = vmatmul.mubr.f32.gmra.mrb[0].mxu0 %v2731
        %v2868 = vpop.f32.mrb[0].mxu0
        %v2869 = vadd.f32 0.0, %v2868
        %v2870 = vpop.f32.mrb[0].mxu0
        %2871 = vmatprep.mubr.f32.mxu0 0.0
        %2872 = vmatmul.mubr.f32.gmra.mrb[0].mxu0 %v2734
        %v2873 = vpop.f32.mrb[0].mxu0
        %v2874 = vadd.f32 0.0, %v2873
        %v2875 = vpop.f32.mrb[0].mxu0
        %2876 = vmatprep.mubr.f32.mxu0 0.0
        %2877 = vmatmul.mubr.f32.gmra.mrb[0].mxu0 %v2737
        %v2878 = vpop.f32.mrb[0].mxu0
        %v2879 = vadd.f32 0.0, %v2878
        %v2880 = vpop.f32.mrb[0].mxu0
        %2881 = vmatprep.mubr.f32.mxu0 0.0
        %2882 = vmatmul.mubr.f32.gmra.mrb[0].mxu0 %v2740
        %v2883 = vpop.f32.mrb[0].mxu0
        %v2884 = vadd.f32 0.0, %v2883
        %v2885 = vpop.f32.mrb[0].mxu0
        %2886 = vdwg.mxu0
        %v2887 = vadd.f32 %v2364, %v2809
        %v2888 = vadd.f32 %v2369, %v2814
        %v2889 = vadd.f32 %v2374, %v2819
        %v2890 = vadd.f32 %v2379, %v2824
        %v2891 = vadd.f32 %v2384, %v2829
        %v2892 = vadd.f32 %v2389, %v2834
        %v2893 = vadd.f32 %v2394, %v2839
        %v2894 = vadd.f32 %v2399, %v2844
        %v2895 = vadd.f32 %v2404, %v2849
        %v2896 = vadd.f32 %v2409, %v2854
        %v2897 = vadd.f32 %v2414, %v2859
        %v2898 = vadd.f32 %v2419, %v2864
        %v2899 = vadd.f32 %v2424, %v2869
        %v2900 = vadd.f32 %v2429, %v2874
        %v2901 = vadd.f32 %v2434, %v2879
        %v2902 = vadd.f32 %v2439, %v2884
        %v2904 = vlaneseq
        %v2905 = vshrl.u32 %v2904, 7
        %v2906 = vsub.s32 0, %v2905
        %v2907 = vrot.slane %v1406, %v2906
        %v2909 = vadd.f32 %v2887, %v2907
        %v2910 = vadd.f32 %v2888, %v2907
        %v2911 = vadd.f32 %v2889, %v2907
        %v2912 = vadd.f32 %v2890, %v2907
        %v2913 = vadd.f32 %v2891, %v2907
        %v2914 = vadd.f32 %v2892, %v2907
        %v2915 = vadd.f32 %v2893, %v2907
        %v2916 = vadd.f32 %v2894, %v2907
        %v2917 = vadd.f32 %v2895, %v2907
        %v2918 = vadd.f32 %v2896, %v2907
        %v2919 = vadd.f32 %v2897, %v2907
        %v2920 = vadd.f32 %v2898, %v2907
        %v2921 = vadd.f32 %v2899, %v2907
        %v2922 = vadd.f32 %v2900, %v2907
        %v2923 = vadd.f32 %v2901, %v2907
        %v2924 = vadd.f32 %v2902, %v2907
        %v2925 = vmax.f32 %v2909, 0.0
        %v2926 = vmax.f32 %v2910, 0.0
        %v2927 = vmax.f32 %v2911, 0.0
        %v2928 = vmax.f32 %v2912, 0.0
        %v2929 = vmax.f32 %v2913, 0.0
        %v2930 = vmax.f32 %v2914, 0.0
        %v2931 = vmax.f32 %v2915, 0.0
        %v2932 = vmax.f32 %v2916, 0.0
        %v2933 = vmax.f32 %v2917, 0.0
        %v2934 = vmax.f32 %v2918, 0.0
        %v2935 = vmax.f32 %v2919, 0.0
        %v2936 = vmax.f32 %v2920, 0.0
        %v2937 = vmax.f32 %v2921, 0.0
        %v2938 = vmax.f32 %v2922, 0.0
        %v2939 = vmax.f32 %v2923, 0.0
        %v2940 = vmax.f32 %v2924, 0.0
        %s2941 = scalar_lea.vmem [#allocation3], %s1405
        %2942 = vst.msk [vmem:[%s2941] sm:$0xff] %vm406, %v2925
        %2943 = vst.msk [vmem:[%s2941 + $0x8] sm:$0xff] %vm406, %v2926
        %2944 = vst.msk [vmem:[%s2941 + $0x10] sm:$0xff] %vm406, %v2927
        %2945 = vst.msk [vmem:[%s2941 + $0x18] sm:$0xff] %vm406, %v2928
        %2946 = vst.msk [vmem:[%s2941 + $0x20] sm:$0xff] %vm406, %v2929
        %2947 = vst.msk [vmem:[%s2941 + $0x28] sm:$0xff] %vm406, %v2930
        %2948 = vst.msk [vmem:[%s2941 + $0x30] sm:$0xff] %vm406, %v2931
        %2949 = vst.msk [vmem:[%s2941 + $0x38] sm:$0xff] %vm406, %v2932
        %2950 = vst.msk [vmem:[%s2941 + $0x40] sm:$0xff] %vm406, %v2933
        %2951 = vst.msk [vmem:[%s2941 + $0x48] sm:$0xff] %vm406, %v2934
        %2952 = vst.msk [vmem:[%s2941 + $0x50] sm:$0xff] %vm406, %v2935
        %2953 = vst.msk [vmem:[%s2941 + $0x58] sm:$0xff] %vm406, %v2936
        %2954 = vst.msk [vmem:[%s2941 + $0x60] sm:$0xff] %vm406, %v2937
        %2955 = vst.msk [vmem:[%s2941 + $0x68] sm:$0xff] %vm406, %v2938
        %2956 = vst.msk [vmem:[%s2941 + $0x70] sm:$0xff] %vm406, %v2939
        %2957 = vst.msk [vmem:[%s2941 + $0x78] sm:$0xff] %vm406, %v2940
      $region76: #{tpu_custom_call.1} parent=55 // loop_footer
        %s1384 = sadd.s32 1, %s1380
      $region77: #{tpu_custom_call.1} parent=55 // loop_footer_branch
        %1379 = sbr.rel target = $region73
      $region78: #{tpu_custom_call.1} parent=55 // loop_exit
        _
      // Predicated region
      $region79: #{tpu_custom_call.1} parent=55 // pred_check
        %p2958 = pneg %p1363
      $region80: #{tpu_custom_call.1} parent=55 // pred_check_branch
        %2960 = sbr.rel (%p2958) target = $region82
      $region81: #{tpu_custom_call.1} parent=55 // pred_region
        %2961 = vst.msk [vmem:[#allocation3 + $0x8] sm:$0xff] %vm406, 0.0
        %2962 = vst.msk [vmem:[#allocation3 + $0x10] sm:$0xff] %vm406, 0.0
      $region82: #{tpu_custom_call.1} parent=55 // pred_fallthru
        _
      // Predicated region
      $region83: #{tpu_custom_call.1} parent=55 // pred_check
        %p2963 = pneg %p1371
      $region84: #{tpu_custom_call.1} parent=55 // pred_check_branch
        %2965 = sbr.rel (%p2963) target = $region86
      $region85: #{tpu_custom_call.1} parent=55 // pred_region
        %2966 = vst.msk [vmem:[#allocation3 + $0x98] sm:$0xff] %vm406, 0.0
        %2967 = vst.msk [vmem:[#allocation3 + $0xa0] sm:$0xff] %vm406, 0.0
      $region86: #{tpu_custom_call.1} parent=55 // pred_fallthru
        _
      %v2968 = vld [vmem:[%s2] sm:$0xff]
      %v2969 = vld [vmem:[%s2 + $0x8] sm:$0xff]
      %v2970 = vld [vmem:[%s2 + $0x10] sm:$0xff]
      %v2971 = vld [vmem:[%s2 + $0x18] sm:$0xff]
      %v2972 = vld [vmem:[%s2 + $0x20] sm:$0xff]
      %v2973 = vld [vmem:[%s2 + $0x28] sm:$0xff]
      %v2974 = vld [vmem:[%s2 + $0x30] sm:$0xff]
      %v2975 = vld [vmem:[%s2 + $0x38] sm:$0xff]
      %v2976 = vld [vmem:[%s2 + $0x40] sm:$0xff]
      %v2977 = vld [vmem:[%s2 + $0x48] sm:$0xff]
      %v2978 = vld [vmem:[%s2 + $0x50] sm:$0xff]
      %v2979 = vld [vmem:[%s2 + $0x58] sm:$0xff]
      %v2980 = vld [vmem:[%s2 + $0x60] sm:$0xff]
      %v2981 = vld [vmem:[%s2 + $0x68] sm:$0xff]
      %v2982 = vld [vmem:[%s2 + $0x70] sm:$0xff]
      %v2983 = vld [vmem:[%s2 + $0x78] sm:$0xff]
      %s2984 = sadd.s32 0, 8
      %v2985 = vld [vmem:[%s8] sm:$0x1]
      %s2986 = sadd.s32 0, 7
      %s2987 = scalar_lea.vmem [#allocation3], %s2986
      %v2988 = vld [vmem:[%s2987] sm:$0xff]
      %v2989 = vld [vmem:[%s2987 + $0x8] sm:$0xff]
      %v2990 = vld [vmem:[%s2987 + $0x10] sm:$0xff]
      %v2991 = vld [vmem:[%s2987 + $0x18] sm:$0xff]
      %v2992 = vld [vmem:[%s2987 + $0x20] sm:$0xff]
      %v2993 = vld [vmem:[%s2987 + $0x28] sm:$0xff]
      %v2994 = vld [vmem:[%s2987 + $0x30] sm:$0xff]
      %v2995 = vld [vmem:[%s2987 + $0x38] sm:$0xff]
      %v2996 = vld [vmem:[%s2987 + $0x40] sm:$0xff]
      %v2997 = vld [vmem:[%s2987 + $0x48] sm:$0xff]
      %v2998 = vld [vmem:[%s2987 + $0x50] sm:$0xff]
      %v2999 = vld [vmem:[%s2987 + $0x58] sm:$0xff]
      %v3000 = vld [vmem:[%s2987 + $0x60] sm:$0xff]
      %v3001 = vld [vmem:[%s2987 + $0x68] sm:$0xff]
      %v3002 = vld [vmem:[%s2987 + $0x70] sm:$0xff]
      %v3003 = vld [vmem:[%s2987 + $0x78] sm:$0xff]
      %3005 = vset.pattern.permute.xlu0 4
      %3006 = vperm.xlu0 %3005, %v2968
      %v3007 = vpop.permute.xlu0 %3006
      %3010 = vset.pattern.permute.xlu0 4
      %3011 = vperm.xlu0 %3010, %v2969
      %v3012 = vpop.permute.xlu0 %3011
      %3015 = vset.pattern.permute.xlu0 4
      %3016 = vperm.xlu0 %3015, %v2970
      %v3017 = vpop.permute.xlu0 %3016
      %3020 = vset.pattern.permute.xlu0 4
      %3021 = vperm.xlu0 %3020, %v2971
      %v3022 = vpop.permute.xlu0 %3021
      %3025 = vset.pattern.permute.xlu0 4
      %3026 = vperm.xlu0 %3025, %v2972
      %v3027 = vpop.permute.xlu0 %3026
      %3030 = vset.pattern.permute.xlu0 4
      %3031 = vperm.xlu0 %3030, %v2973
      %v3032 = vpop.permute.xlu0 %3031
      %3035 = vset.pattern.permute.xlu0 4
      %3036 = vperm.xlu0 %3035, %v2974
      %v3037 = vpop.permute.xlu0 %3036
      %3040 = vset.pattern.permute.xlu0 4
      %3041 = vperm.xlu0 %3040, %v2975
      %v3042 = vpop.permute.xlu0 %3041
      %3045 = vset.pattern.permute.xlu0 4
      %3046 = vperm.xlu0 %3045, %v2976
      %v3047 = vpop.permute.xlu0 %3046
      %3050 = vset.pattern.permute.xlu0 4
      %3051 = vperm.xlu0 %3050, %v2977
      %v3052 = vpop.permute.xlu0 %3051
      %3055 = vset.pattern.permute.xlu0 4
      %3056 = vperm.xlu0 %3055, %v2978
      %v3057 = vpop.permute.xlu0 %3056
      %3060 = vset.pattern.permute.xlu0 4
      %3061 = vperm.xlu0 %3060, %v2979
      %v3062 = vpop.permute.xlu0 %3061
      %3065 = vset.pattern.permute.xlu0 4
      %3066 = vperm.xlu0 %3065, %v2980
      %v3067 = vpop.permute.xlu0 %3066
      %3070 = vset.pattern.permute.xlu0 4
      %3071 = vperm.xlu0 %3070, %v2981
      %v3072 = vpop.permute.xlu0 %3071
      %3075 = vset.pattern.permute.xlu0 4
      %3076 = vperm.xlu0 %3075, %v2982
      %v3077 = vpop.permute.xlu0 %3076
      %3080 = vset.pattern.permute.xlu0 4
      %3081 = vperm.xlu0 %3080, %v2983
      %v3082 = vpop.permute.xlu0 %3081
      %v3084 = vmul.f32 %v2988, %v3007
      %v3085 = vmul.f32 %v2989, %v3012
      %v3086 = vmul.f32 %v2990, %v3017
      %v3087 = vmul.f32 %v2991, %v3022
      %v3088 = vmul.f32 %v2992, %v3027
      %v3089 = vmul.f32 %v2993, %v3032
      %v3090 = vmul.f32 %v2994, %v3037
      %v3091 = vmul.f32 %v2995, %v3042
      %v3092 = vmul.f32 %v2996, %v3047
      %v3093 = vmul.f32 %v2997, %v3052
      %v3094 = vmul.f32 %v2998, %v3057
      %v3095 = vmul.f32 %v2999, %v3062
      %v3096 = vmul.f32 %v3000, %v3067
      %v3097 = vmul.f32 %v3001, %v3072
      %v3098 = vmul.f32 %v3002, %v3077
      %v3099 = vmul.f32 %v3003, %v3082
      %s3100 = scalar_lea.vmem [#allocation3], %s2984
      %v3101 = vld [vmem:[%s3100] sm:$0xff]
      %v3102 = vld [vmem:[%s3100 + $0x8] sm:$0xff]
      %v3103 = vld [vmem:[%s3100 + $0x10] sm:$0xff]
      %v3104 = vld [vmem:[%s3100 + $0x18] sm:$0xff]
      %v3105 = vld [vmem:[%s3100 + $0x20] sm:$0xff]
      %v3106 = vld [vmem:[%s3100 + $0x28] sm:$0xff]
      %v3107 = vld [vmem:[%s3100 + $0x30] sm:$0xff]
      %v3108 = vld [vmem:[%s3100 + $0x38] sm:$0xff]
      %v3109 = vld [vmem:[%s3100 + $0x40] sm:$0xff]
      %v3110 = vld [vmem:[%s3100 + $0x48] sm:$0xff]
      %v3111 = vld [vmem:[%s3100 + $0x50] sm:$0xff]
      %v3112 = vld [vmem:[%s3100 + $0x58] sm:$0xff]
      %v3113 = vld [vmem:[%s3100 + $0x60] sm:$0xff]
      %v3114 = vld [vmem:[%s3100 + $0x68] sm:$0xff]
      %v3115 = vld [vmem:[%s3100 + $0x70] sm:$0xff]
      %v3116 = vld [vmem:[%s3100 + $0x78] sm:$0xff]
      %s3117 = sadd.s32 0, 9
      %s3118 = scalar_lea.vmem [#allocation3], %s3117
      %v3119 = vld [vmem:[%s3118] sm:$0xff]
      %v3120 = vld [vmem:[%s3118 + $0x8] sm:$0xff]
      %v3121 = vld [vmem:[%s3118 + $0x10] sm:$0xff]
      %v3122 = vld [vmem:[%s3118 + $0x18] sm:$0xff]
      %v3123 = vld [vmem:[%s3118 + $0x20] sm:$0xff]
      %v3124 = vld [vmem:[%s3118 + $0x28] sm:$0xff]
      %v3125 = vld [vmem:[%s3118 + $0x30] sm:$0xff]
      %v3126 = vld [vmem:[%s3118 + $0x38] sm:$0xff]
      %v3127 = vld [vmem:[%s3118 + $0x40] sm:$0xff]
      %v3128 = vld [vmem:[%s3118 + $0x48] sm:$0xff]
      %v3129 = vld [vmem:[%s3118 + $0x50] sm:$0xff]
      %v3130 = vld [vmem:[%s3118 + $0x58] sm:$0xff]
      %v3131 = vld [vmem:[%s3118 + $0x60] sm:$0xff]
      %v3132 = vld [vmem:[%s3118 + $0x68] sm:$0xff]
      %v3133 = vld [vmem:[%s3118 + $0x70] sm:$0xff]
      %v3134 = vld [vmem:[%s3118 + $0x78] sm:$0xff]
      %3135 = vset.pattern.permute.xlu0 5
      %3136 = vperm.xlu0 %3135, %v2968
      %v3137 = vpop.permute.xlu0 %3136
      %3139 = vset.pattern.permute.xlu0 5
      %3140 = vperm.xlu0 %3139, %v2969
      %v3141 = vpop.permute.xlu0 %3140
      %3143 = vset.pattern.permute.xlu0 5
      %3144 = vperm.xlu0 %3143, %v2970
      %v3145 = vpop.permute.xlu0 %3144
      %3147 = vset.pattern.permute.xlu0 5
      %3148 = vperm.xlu0 %3147, %v2971
      %v3149 = vpop.permute.xlu0 %3148
      %3151 = vset.pattern.permute.xlu0 5
      %3152 = vperm.xlu0 %3151, %v2972
      %v3153 = vpop.permute.xlu0 %3152
      %3155 = vset.pattern.permute.xlu0 5
      %3156 = vperm.xlu0 %3155, %v2973
      %v3157 = vpop.permute.xlu0 %3156
      %3159 = vset.pattern.permute.xlu0 5
      %3160 = vperm.xlu0 %3159, %v2974
      %v3161 = vpop.permute.xlu0 %3160
      %3163 = vset.pattern.permute.xlu0 5
      %3164 = vperm.xlu0 %3163, %v2975
      %v3165 = vpop.permute.xlu0 %3164
      %3167 = vset.pattern.permute.xlu0 5
      %3168 = vperm.xlu0 %3167, %v2976
      %v3169 = vpop.permute.xlu0 %3168
      %3171 = vset.pattern.permute.xlu0 5
      %3172 = vperm.xlu0 %3171, %v2977
      %v3173 = vpop.permute.xlu0 %3172
      %3175 = vset.pattern.permute.xlu0 5
      %3176 = vperm.xlu0 %3175, %v2978
      %v3177 = vpop.permute.xlu0 %3176
      %3179 = vset.pattern.permute.xlu0 5
      %3180 = vperm.xlu0 %3179, %v2979
      %v3181 = vpop.permute.xlu0 %3180
      %3183 = vset.pattern.permute.xlu0 5
      %3184 = vperm.xlu0 %3183, %v2980
      %v3185 = vpop.permute.xlu0 %3184
      %3187 = vset.pattern.permute.xlu0 5
      %3188 = vperm.xlu0 %3187, %v2981
      %v3189 = vpop.permute.xlu0 %3188
      %3191 = vset.pattern.permute.xlu0 5
      %3192 = vperm.xlu0 %3191, %v2982
      %v3193 = vpop.permute.xlu0 %3192
      %3195 = vset.pattern.permute.xlu0 5
      %3196 = vperm.xlu0 %3195, %v2983
      %v3197 = vpop.permute.xlu0 %3196
      %v3199 = vmul.f32 %v3119, %v3137
      %v3200 = vmul.f32 %v3120, %v3141
      %v3201 = vmul.f32 %v3121, %v3145
      %v3202 = vmul.f32 %v3122, %v3149
      %v3203 = vmul.f32 %v3123, %v3153
      %v3204 = vmul.f32 %v3124, %v3157
      %v3205 = vmul.f32 %v3125, %v3161
      %v3206 = vmul.f32 %v3126, %v3165
      %v3207 = vmul.f32 %v3127, %v3169
      %v3208 = vmul.f32 %v3128, %v3173
      %v3209 = vmul.f32 %v3129, %v3177
      %v3210 = vmul.f32 %v3130, %v3181
      %v3211 = vmul.f32 %v3131, %v3185
      %v3212 = vmul.f32 %v3132, %v3189
      %v3213 = vmul.f32 %v3133, %v3193
      %v3214 = vmul.f32 %v3134, %v3197
      %3231 = vrot.lane.b32.xlu0 %v3101, 8
      %v3232 = vpop.permute.xlu0 %3231
      %3233 = vrot.lane.b32.xlu0 %v3102, 8
      %v3234 = vpop.permute.xlu0 %3233
      %3235 = vrot.lane.b32.xlu0 %v3103, 8
      %v3236 = vpop.permute.xlu0 %3235
      %3237 = vrot.lane.b32.xlu0 %v3104, 8
      %v3238 = vpop.permute.xlu0 %3237
      %3239 = vrot.lane.b32.xlu0 %v3105, 8
      %v3240 = vpop.permute.xlu0 %3239
      %3241 = vrot.lane.b32.xlu0 %v3106, 8
      %v3242 = vpop.permute.xlu0 %3241
      %3243 = vrot.lane.b32.xlu0 %v3107, 8
      %v3244 = vpop.permute.xlu0 %3243
      %3245 = vrot.lane.b32.xlu0 %v3108, 8
      %v3246 = vpop.permute.xlu0 %3245
      %3247 = vrot.lane.b32.xlu0 %v3109, 8
      %v3248 = vpop.permute.xlu0 %3247
      %3249 = vrot.lane.b32.xlu0 %v3110, 8
      %v3250 = vpop.permute.xlu0 %3249
      %3251 = vrot.lane.b32.xlu0 %v3111, 8
      %v3252 = vpop.permute.xlu0 %3251
      %3253 = vrot.lane.b32.xlu0 %v3112, 8
      %v3254 = vpop.permute.xlu0 %3253
      %3255 = vrot.lane.b32.xlu0 %v3113, 8
      %v3256 = vpop.permute.xlu0 %3255
      %3257 = vrot.lane.b32.xlu0 %v3114, 8
      %v3258 = vpop.permute.xlu0 %3257
      %3259 = vrot.lane.b32.xlu0 %v3115, 8
      %v3260 = vpop.permute.xlu0 %3259
      %3261 = vrot.lane.b32.xlu0 %v3116, 8
      %v3262 = vpop.permute.xlu0 %3261
      %3295 = vrot.lane.b32.xlu0 %v3199, 16
      %v3296 = vpop.permute.xlu0 %3295
      %3297 = vrot.lane.b32.xlu0 %v3200, 16
      %v3298 = vpop.permute.xlu0 %3297
      %3299 = vrot.lane.b32.xlu0 %v3201, 16
      %v3300 = vpop.permute.xlu0 %3299
      %3301 = vrot.lane.b32.xlu0 %v3202, 16
      %v3302 = vpop.permute.xlu0 %3301
      %3303 = vrot.lane.b32.xlu0 %v3203, 16
      %v3304 = vpop.permute.xlu0 %3303
      %3305 = vrot.lane.b32.xlu0 %v3204, 16
      %v3306 = vpop.permute.xlu0 %3305
      %3307 = vrot.lane.b32.xlu0 %v3205, 16
      %v3308 = vpop.permute.xlu0 %3307
      %3309 = vrot.lane.b32.xlu0 %v3206, 16
      %v3310 = vpop.permute.xlu0 %3309
      %3311 = vrot.lane.b32.xlu0 %v3207, 16
      %v3312 = vpop.permute.xlu0 %3311
      %3313 = vrot.lane.b32.xlu0 %v3208, 16
      %v3314 = vpop.permute.xlu0 %3313
      %3315 = vrot.lane.b32.xlu0 %v3209, 16
      %v3316 = vpop.permute.xlu0 %3315
      %3317 = vrot.lane.b32.xlu0 %v3210, 16
      %v3318 = vpop.permute.xlu0 %3317
      %3319 = vrot.lane.b32.xlu0 %v3211, 16
      %v3320 = vpop.permute.xlu0 %3319
      %3321 = vrot.lane.b32.xlu0 %v3212, 16
      %v3322 = vpop.permute.xlu0 %3321
      %3323 = vrot.lane.b32.xlu0 %v3213, 16
      %v3324 = vpop.permute.xlu0 %3323
      %3325 = vrot.lane.b32.xlu0 %v3214, 16
      %v3326 = vpop.permute.xlu0 %3325
      %v3343 = vsel %vm406, %v3084, %v3232
      %v3344 = vsel %vm406, %v3085, %v3234
      %v3345 = vsel %vm406, %v3086, %v3236
      %v3346 = vsel %vm406, %v3087, %v3238
      %v3347 = vsel %vm406, %v3088, %v3240
      %v3348 = vsel %vm406, %v3089, %v3242
      %v3349 = vsel %vm406, %v3090, %v3244
      %v3350 = vsel %vm406, %v3091, %v3246
      %v3351 = vsel %vm406, %v3092, %v3248
      %v3352 = vsel %vm406, %v3093, %v3250
      %v3353 = vsel %vm406, %v3094, %v3252
      %v3354 = vsel %vm406, %v3095, %v3254
      %v3355 = vsel %vm406, %v3096, %v3256
      %v3356 = vsel %vm406, %v3097, %v3258
      %v3357 = vsel %vm406, %v3098, %v3260
      %v3358 = vsel %vm406, %v3099, %v3262
      %v3359 = vsel %vm403, %v3343, %v3296
      %v3360 = vsel %vm403, %v3344, %v3298
      %v3361 = vsel %vm403, %v3345, %v3300
      %v3362 = vsel %vm403, %v3346, %v3302
      %v3363 = vsel %vm403, %v3347, %v3304
      %v3364 = vsel %vm403, %v3348, %v3306
      %v3365 = vsel %vm403, %v3349, %v3308
      %v3366 = vsel %vm403, %v3350, %v3310
      %v3367 = vsel %vm403, %v3351, %v3312
      %v3368 = vsel %vm403, %v3352, %v3314
      %v3369 = vsel %vm403, %v3353, %v3316
      %v3370 = vsel %vm403, %v3354, %v3318
      %v3371 = vsel %vm403, %v3355, %v3320
      %v3372 = vsel %vm403, %v3356, %v3322
      %v3373 = vsel %vm403, %v3357, %v3324
      %v3374 = vsel %vm403, %v3358, %v3326
      %v3375 = vld [vmem:[%s7] sm:$0xff]
      %v3376 = vld [vmem:[%s7 + $0x8] sm:$0xff]
      %v3377 = vld [vmem:[%s7 + $0x10] sm:$0xff]
      %s3378 = sadd.s32 0, 24
      %s3379 = sadd.s32 0, 23
      %s3380 = scalar_lea.vmem [#allocation3], %s3379
      %v3381 = vld [vmem:[%s3380] sm:$0xff]
      %v3382 = vld [vmem:[%s3380 + $0x8] sm:$0xff]
      %v3383 = vld [vmem:[%s3380 + $0x10] sm:$0xff]
      %v3384 = vld [vmem:[%s3380 + $0x18] sm:$0xff]
      %v3385 = vld [vmem:[%s3380 + $0x20] sm:$0xff]
      %v3386 = vld [vmem:[%s3380 + $0x28] sm:$0xff]
      %v3387 = vld [vmem:[%s3380 + $0x30] sm:$0xff]
      %v3388 = vld [vmem:[%s3380 + $0x38] sm:$0xff]
      %v3389 = vld [vmem:[%s3380 + $0x40] sm:$0xff]
      %v3390 = vld [vmem:[%s3380 + $0x48] sm:$0xff]
      %v3391 = vld [vmem:[%s3380 + $0x50] sm:$0xff]
      %v3392 = vld [vmem:[%s3380 + $0x58] sm:$0xff]
      %v3393 = vld [vmem:[%s3380 + $0x60] sm:$0xff]
      %v3394 = vld [vmem:[%s3380 + $0x68] sm:$0xff]
      %v3395 = vld [vmem:[%s3380 + $0x70] sm:$0xff]
      %v3396 = vld [vmem:[%s3380 + $0x78] sm:$0xff]
      %v3397 = vmul.f32 %v3381, %v3007
      %v3398 = vmul.f32 %v3382, %v3012
      %v3399 = vmul.f32 %v3383, %v3017
      %v3400 = vmul.f32 %v3384, %v3022
      %v3401 = vmul.f32 %v3385, %v3027
      %v3402 = vmul.f32 %v3386, %v3032
      %v3403 = vmul.f32 %v3387, %v3037
      %v3404 = vmul.f32 %v3388, %v3042
      %v3405 = vmul.f32 %v3389, %v3047
      %v3406 = vmul.f32 %v3390, %v3052
      %v3407 = vmul.f32 %v3391, %v3057
      %v3408 = vmul.f32 %v3392, %v3062
      %v3409 = vmul.f32 %v3393, %v3067
      %v3410 = vmul.f32 %v3394, %v3072
      %v3411 = vmul.f32 %v3395, %v3077
      %v3412 = vmul.f32 %v3396, %v3082
      %s3413 = scalar_lea.vmem [#allocation3], %s3378
      %v3414 = vld [vmem:[%s3413] sm:$0xff]
      %v3415 = vld [vmem:[%s3413 + $0x8] sm:$0xff]
      %v3416 = vld [vmem:[%s3413 + $0x10] sm:$0xff]
      %v3417 = vld [vmem:[%s3413 + $0x18] sm:$0xff]
      %v3418 = vld [vmem:[%s3413 + $0x20] sm:$0xff]
      %v3419 = vld [vmem:[%s3413 + $0x28] sm:$0xff]
      %v3420 = vld [vmem:[%s3413 + $0x30] sm:$0xff]
      %v3421 = vld [vmem:[%s3413 + $0x38] sm:$0xff]
      %v3422 = vld [vmem:[%s3413 + $0x40] sm:$0xff]
      %v3423 = vld [vmem:[%s3413 + $0x48] sm:$0xff]
      %v3424 = vld [vmem:[%s3413 + $0x50] sm:$0xff]
      %v3425 = vld [vmem:[%s3413 + $0x58] sm:$0xff]
      %v3426 = vld [vmem:[%s3413 + $0x60] sm:$0xff]
      %v3427 = vld [vmem:[%s3413 + $0x68] sm:$0xff]
      %v3428 = vld [vmem:[%s3413 + $0x70] sm:$0xff]
      %v3429 = vld [vmem:[%s3413 + $0x78] sm:$0xff]
      %s3430 = sadd.s32 0, 25
      %s3431 = scalar_lea.vmem [#allocation3], %s3430
      %v3432 = vld [vmem:[%s3431] sm:$0xff]
      %v3433 = vld [vmem:[%s3431 + $0x8] sm:$0xff]
      %v3434 = vld [vmem:[%s3431 + $0x10] sm:$0xff]
      %v3435 = vld [vmem:[%s3431 + $0x18] sm:$0xff]
      %v3436 = vld [vmem:[%s3431 + $0x20] sm:$0xff]
      %v3437 = vld [vmem:[%s3431 + $0x28] sm:$0xff]
      %v3438 = vld [vmem:[%s3431 + $0x30] sm:$0xff]
      %v3439 = vld [vmem:[%s3431 + $0x38] sm:$0xff]
      %v3440 = vld [vmem:[%s3431 + $0x40] sm:$0xff]
      %v3441 = vld [vmem:[%s3431 + $0x48] sm:$0xff]
      %v3442 = vld [vmem:[%s3431 + $0x50] sm:$0xff]
      %v3443 = vld [vmem:[%s3431 + $0x58] sm:$0xff]
      %v3444 = vld [vmem:[%s3431 + $0x60] sm:$0xff]
      %v3445 = vld [vmem:[%s3431 + $0x68] sm:$0xff]
      %v3446 = vld [vmem:[%s3431 + $0x70] sm:$0xff]
      %v3447 = vld [vmem:[%s3431 + $0x78] sm:$0xff]
      %v3448 = vmul.f32 %v3432, %v3137
      %v3449 = vmul.f32 %v3433, %v3141
      %v3450 = vmul.f32 %v3434, %v3145
      %v3451 = vmul.f32 %v3435, %v3149
      %v3452 = vmul.f32 %v3436, %v3153
      %v3453 = vmul.f32 %v3437, %v3157
      %v3454 = vmul.f32 %v3438, %v3161
      %v3455 = vmul.f32 %v3439, %v3165
      %v3456 = vmul.f32 %v3440, %v3169
      %v3457 = vmul.f32 %v3441, %v3173
      %v3458 = vmul.f32 %v3442, %v3177
      %v3459 = vmul.f32 %v3443, %v3181
      %v3460 = vmul.f32 %v3444, %v3185
      %v3461 = vmul.f32 %v3445, %v3189
      %v3462 = vmul.f32 %v3446, %v3193
      %v3463 = vmul.f32 %v3447, %v3197
      %3480 = vrot.lane.b32.xlu0 %v3414, 8
      %v3481 = vpop.permute.xlu0 %3480
      %3482 = vrot.lane.b32.xlu0 %v3415, 8
      %v3483 = vpop.permute.xlu0 %3482
      %3484 = vrot.lane.b32.xlu0 %v3416, 8
      %v3485 = vpop.permute.xlu0 %3484
      %3486 = vrot.lane.b32.xlu0 %v3417, 8
      %v3487 = vpop.permute.xlu0 %3486
      %3488 = vrot.lane.b32.xlu0 %v3418, 8
      %v3489 = vpop.permute.xlu0 %3488
      %3490 = vrot.lane.b32.xlu0 %v3419, 8
      %v3491 = vpop.permute.xlu0 %3490
      %3492 = vrot.lane.b32.xlu0 %v3420, 8
      %v3493 = vpop.permute.xlu0 %3492
      %3494 = vrot.lane.b32.xlu0 %v3421, 8
      %v3495 = vpop.permute.xlu0 %3494
      %3496 = vrot.lane.b32.xlu0 %v3422, 8
      %v3497 = vpop.permute.xlu0 %3496
      %3498 = vrot.lane.b32.xlu0 %v3423, 8
      %v3499 = vpop.permute.xlu0 %3498
      %3500 = vrot.lane.b32.xlu0 %v3424, 8
      %v3501 = vpop.permute.xlu0 %3500
      %3502 = vrot.lane.b32.xlu0 %v3425, 8
      %v3503 = vpop.permute.xlu0 %3502
      %3504 = vrot.lane.b32.xlu0 %v3426, 8
      %v3505 = vpop.permute.xlu0 %3504
      %3506 = vrot.lane.b32.xlu0 %v3427, 8
      %v3507 = vpop.permute.xlu0 %3506
      %3508 = vrot.lane.b32.xlu0 %v3428, 8
      %v3509 = vpop.permute.xlu0 %3508
      %3510 = vrot.lane.b32.xlu0 %v3429, 8
      %v3511 = vpop.permute.xlu0 %3510
      %3544 = vrot.lane.b32.xlu0 %v3448, 16
      %v3545 = vpop.permute.xlu0 %3544
      %3546 = vrot.lane.b32.xlu0 %v3449, 16
      %v3547 = vpop.permute.xlu0 %3546
      %3548 = vrot.lane.b32.xlu0 %v3450, 16
      %v3549 = vpop.permute.xlu0 %3548
      %3550 = vrot.lane.b32.xlu0 %v3451, 16
      %v3551 = vpop.permute.xlu0 %3550
      %3552 = vrot.lane.b32.xlu0 %v3452, 16
      %v3553 = vpop.permute.xlu0 %3552
      %3554 = vrot.lane.b32.xlu0 %v3453, 16
      %v3555 = vpop.permute.xlu0 %3554
      %3556 = vrot.lane.b32.xlu0 %v3454, 16
      %v3557 = vpop.permute.xlu0 %3556
      %3558 = vrot.lane.b32.xlu0 %v3455, 16
      %v3559 = vpop.permute.xlu0 %3558
      %3560 = vrot.lane.b32.xlu0 %v3456, 16
      %v3561 = vpop.permute.xlu0 %3560
      %3562 = vrot.lane.b32.xlu0 %v3457, 16
      %v3563 = vpop.permute.xlu0 %3562
      %3564 = vrot.lane.b32.xlu0 %v3458, 16
      %v3565 = vpop.permute.xlu0 %3564
      %3566 = vrot.lane.b32.xlu0 %v3459, 16
      %v3567 = vpop.permute.xlu0 %3566
      %3568 = vrot.lane.b32.xlu0 %v3460, 16
      %v3569 = vpop.permute.xlu0 %3568
      %3570 = vrot.lane.b32.xlu0 %v3461, 16
      %v3571 = vpop.permute.xlu0 %3570
      %3572 = vrot.lane.b32.xlu0 %v3462, 16
      %v3573 = vpop.permute.xlu0 %3572
      %3574 = vrot.lane.b32.xlu0 %v3463, 16
      %v3575 = vpop.permute.xlu0 %3574
      %v3592 = vsel %vm406, %v3397, %v3481
      %v3593 = vsel %vm406, %v3398, %v3483
      %v3594 = vsel %vm406, %v3399, %v3485
      %v3595 = vsel %vm406, %v3400, %v3487
      %v3596 = vsel %vm406, %v3401, %v3489
      %v3597 = vsel %vm406, %v3402, %v3491
      %v3598 = vsel %vm406, %v3403, %v3493
      %v3599 = vsel %vm406, %v3404, %v3495
      %v3600 = vsel %vm406, %v3405, %v3497
      %v3601 = vsel %vm406, %v3406, %v3499
      %v3602 = vsel %vm406, %v3407, %v3501
      %v3603 = vsel %vm406, %v3408, %v3503
      %v3604 = vsel %vm406, %v3409, %v3505
      %v3605 = vsel %vm406, %v3410, %v3507
      %v3606 = vsel %vm406, %v3411, %v3509
      %v3607 = vsel %vm406, %v3412, %v3511
      %v3608 = vsel %vm403, %v3592, %v3545
      %v3609 = vsel %vm403, %v3593, %v3547
      %v3610 = vsel %vm403, %v3594, %v3549
      %v3611 = vsel %vm403, %v3595, %v3551
      %v3612 = vsel %vm403, %v3596, %v3553
      %v3613 = vsel %vm403, %v3597, %v3555
      %v3614 = vsel %vm403, %v3598, %v3557
      %v3615 = vsel %vm403, %v3599, %v3559
      %v3616 = vsel %vm403, %v3600, %v3561
      %v3617 = vsel %vm403, %v3601, %v3563
      %v3618 = vsel %vm403, %v3602, %v3565
      %v3619 = vsel %vm403, %v3603, %v3567
      %v3620 = vsel %vm403, %v3604, %v3569
      %v3621 = vsel %vm403, %v3605, %v3571
      %v3622 = vsel %vm403, %v3606, %v3573
      %v3623 = vsel %vm403, %v3607, %v3575
      %v3624 = vld [vmem:[%s7 + $0x18] sm:$0xff]
      %v3625 = vld [vmem:[%s7 + $0x20] sm:$0xff]
      %v3626 = vld [vmem:[%s7 + $0x28] sm:$0xff]
      %vm3627 = vcmask 195584
      %v3629 = vsel %vm3627, %v3608, 0
      %v3632 = vsel %vm3627, %v3609, 0
      %v3635 = vsel %vm3627, %v3610, 0
      %v3638 = vsel %vm3627, %v3611, 0
      %v3641 = vsel %vm3627, %v3612, 0
      %v3644 = vsel %vm3627, %v3613, 0
      %v3647 = vsel %vm3627, %v3614, 0
      %v3650 = vsel %vm3627, %v3615, 0
      %v3653 = vsel %vm3627, %v3616, 0
      %v3656 = vsel %vm3627, %v3617, 0
      %v3659 = vsel %vm3627, %v3618, 0
      %v3662 = vsel %vm3627, %v3619, 0
      %v3665 = vsel %vm3627, %v3620, 0
      %v3668 = vsel %vm3627, %v3621, 0
      %v3671 = vsel %vm3627, %v3622, 0
      %v3674 = vsel %vm3627, %v3623, 0
      %3676 = vmatprep.subr.mxu0 0.0
      %3677 = vmatpush1.msra.mxu0 %v3624
      %3678 = vmatprep.subr.mxu0 0.0
      %3679 = vmatpush1.msra.mxu0 %v3625
      %3680 = vmatprep.subr.mxu0 0.0
      %3681 = vmatpush1.msra.mxu0 %v3626
      %3682 = vmatprep.subr.mxu0 0.0
      %3683 = vmatpush1.msra.mxu0 0.0
      %3684 = vmatprep.subr.mxu0 0.0
      %3685 = vmatpush1.msra.mxu0 0.0
      %3686 = vmatprep.subr.mxu0 0.0
      %3687 = vmatpush1.msra.mxu0 0.0
      %3688 = vmatprep.subr.mxu0 0.0
      %3689 = vmatpush1.msra.mxu0 0.0
      %3690 = vmatprep.subr.mxu0 0.0
      %3691 = vmatpush1.msra.mxu0 0.0
      %3692 = vmatprep.subr.mxu0 0.0
      %3693 = vmatpush1.msra.mxu0 0.0
      %3694 = vmatprep.subr.mxu0 0.0
      %3695 = vmatpush1.msra.mxu0 0.0
      %3696 = vmatprep.subr.mxu0 0.0
      %3697 = vmatpush1.msra.mxu0 0.0
      %3698 = vmatprep.subr.mxu0 0.0
      %3699 = vmatpush1.msra.mxu0 0.0
      %3700 = vmatprep.subr.mxu0 0.0
      %3701 = vmatpush1.msra.mxu0 0.0
      %3702 = vmatprep.subr.mxu0 0.0
      %3703 = vmatpush1.msra.mxu0 0.0
      %3704 = vmatprep.subr.mxu0 0.0
      %3705 = vmatpush1.msra.mxu0 0.0
      %3706 = vmatprep.subr.mxu0 0.0
      %3707 = vmatpush1.msra.mxu0 0.0
      %3708 = vmatprep.subr.mxu0 0.0
      %3709 = vmatpush1.msra.mxu0 0.0
      %3710 = vmatprep.subr.mxu0 0.0
      %3711 = vmatpush1.msra.mxu0 0.0
      %3712 = vmatprep.subr.mxu0 0.0
      %3713 = vmatpush1.msra.mxu0 0.0
      %3714 = vmatprep.subr.mxu0 0.0
      %3715 = vmatpush1.msra.mxu0 0.0
      %3716 = vmatprep.subr.mxu0 0.0
      %3717 = vmatpush1.msra.mxu0 0.0
      %3718 = vmatprep.subr.mxu0 0.0
      %3719 = vmatpush1.msra.mxu0 0.0
      %3720 = vmatprep.subr.mxu0 0.0
      %3721 = vmatpush1.msra.mxu0 0.0
      %3722 = vmatprep.subr.mxu0 0.0
      %3723 = vmatpush1.msra.mxu0 0.0
      %3724 = vmatprep.subr.mxu0 0.0
      %3725 = vmatpush1.msra.mxu0 0.0
      %3726 = vmatprep.subr.mxu0 0.0
      %3727 = vmatpush1.msra.mxu0 0.0
      %3728 = vmatprep.subr.mxu0 0.0
      %3729 = vmatpush1.msra.mxu0 0.0
      %3730 = vmatprep.subr.mxu0 0.0
      %3731 = vmatpush1.msra.mxu0 0.0
      %3732 = vmatprep.subr.mxu0 0.0
      %3733 = vmatpush1.msra.mxu0 0.0
      %3734 = vmatprep.subr.mxu0 0.0
      %3735 = vmatpush1.msra.mxu0 0.0
      %3736 = vmatprep.subr.mxu0 0.0
      %3737 = vmatpush1.msra.mxu0 0.0
      %3738 = vmatprep.subr.mxu0 0.0
      %3739 = vmatpush1.msra.mxu0 0.0
      %3740 = vmatprep.mubr.f32.mxu0 0.0
      %3741 = vmatmul.mubr.f32.gmra.mrb[0].mxu0 %v3629
      %v3742 = vpop.f32.mrb[0].mxu0
      %v3743 = vadd.f32 0.0, %v3742
      %v3744 = vpop.f32.mrb[0].mxu0
      %3745 = vmatprep.mubr.f32.mxu0 0.0
      %3746 = vmatmul.mubr.f32.gmra.mrb[0].mxu0 %v3632
      %v3747 = vpop.f32.mrb[0].mxu0
      %v3748 = vadd.f32 0.0, %v3747
      %v3749 = vpop.f32.mrb[0].mxu0
      %3750 = vmatprep.mubr.f32.mxu0 0.0
      %3751 = vmatmul.mubr.f32.gmra.mrb[0].mxu0 %v3635
      %v3752 = vpop.f32.mrb[0].mxu0
      %v3753 = vadd.f32 0.0, %v3752
      %v3754 = vpop.f32.mrb[0].mxu0
      %3755 = vmatprep.mubr.f32.mxu0 0.0
      %3756 = vmatmul.mubr.f32.gmra.mrb[0].mxu0 %v3638
      %v3757 = vpop.f32.mrb[0].mxu0
      %v3758 = vadd.f32 0.0, %v3757
      %v3759 = vpop.f32.mrb[0].mxu0
      %3760 = vmatprep.mubr.f32.mxu0 0.0
      %3761 = vmatmul.mubr.f32.gmra.mrb[0].mxu0 %v3641
      %v3762 = vpop.f32.mrb[0].mxu0
      %v3763 = vadd.f32 0.0, %v3762
      %v3764 = vpop.f32.mrb[0].mxu0
      %3765 = vmatprep.mubr.f32.mxu0 0.0
      %3766 = vmatmul.mubr.f32.gmra.mrb[0].mxu0 %v3644
      %v3767 = vpop.f32.mrb[0].mxu0
      %v3768 = vadd.f32 0.0, %v3767
      %v3769 = vpop.f32.mrb[0].mxu0
      %3770 = vmatprep.mubr.f32.mxu0 0.0
      %3771 = vmatmul.mubr.f32.gmra.mrb[0].mxu0 %v3647
      %v3772 = vpop.f32.mrb[0].mxu0
      %v3773 = vadd.f32 0.0, %v3772
      %v3774 = vpop.f32.mrb[0].mxu0
      %3775 = vmatprep.mubr.f32.mxu0 0.0
      %3776 = vmatmul.mubr.f32.gmra.mrb[0].mxu0 %v3650
      %v3777 = vpop.f32.mrb[0].mxu0
      %v3778 = vadd.f32 0.0, %v3777
      %v3779 = vpop.f32.mrb[0].mxu0
      %3780 = vmatprep.mubr.f32.mxu0 0.0
      %3781 = vmatmul.mubr.f32.gmra.mrb[0].mxu0 %v3653
      %v3782 = vpop.f32.mrb[0].mxu0
      %v3783 = vadd.f32 0.0, %v3782
      %v3784 = vpop.f32.mrb[0].mxu0
      %3785 = vmatprep.mubr.f32.mxu0 0.0
      %3786 = vmatmul.mubr.f32.gmra.mrb[0].mxu0 %v3656
      %v3787 = vpop.f32.mrb[0].mxu0
      %v3788 = vadd.f32 0.0, %v3787
      %v3789 = vpop.f32.mrb[0].mxu0
      %3790 = vmatprep.mubr.f32.mxu0 0.0
      %3791 = vmatmul.mubr.f32.gmra.mrb[0].mxu0 %v3659
      %v3792 = vpop.f32.mrb[0].mxu0
      %v3793 = vadd.f32 0.0, %v3792
      %v3794 = vpop.f32.mrb[0].mxu0
      %3795 = vmatprep.mubr.f32.mxu0 0.0
      %3796 = vmatmul.mubr.f32.gmra.mrb[0].mxu0 %v3662
      %v3797 = vpop.f32.mrb[0].mxu0
      %v3798 = vadd.f32 0.0, %v3797
      %v3799 = vpop.f32.mrb[0].mxu0
      %3800 = vmatprep.mubr.f32.mxu0 0.0
      %3801 = vmatmul.mubr.f32.gmra.mrb[0].mxu0 %v3665
      %v3802 = vpop.f32.mrb[0].mxu0
      %v3803 = vadd.f32 0.0, %v3802
      %v3804 = vpop.f32.mrb[0].mxu0
      %3805 = vmatprep.mubr.f32.mxu0 0.0
      %3806 = vmatmul.mubr.f32.gmra.mrb[0].mxu0 %v3668
      %v3807 = vpop.f32.mrb[0].mxu0
      %v3808 = vadd.f32 0.0, %v3807
      %v3809 = vpop.f32.mrb[0].mxu0
      %3810 = vmatprep.mubr.f32.mxu0 0.0
      %3811 = vmatmul.mubr.f32.gmra.mrb[0].mxu0 %v3671
      %v3812 = vpop.f32.mrb[0].mxu0
      %v3813 = vadd.f32 0.0, %v3812
      %v3814 = vpop.f32.mrb[0].mxu0
      %3815 = vmatprep.mubr.f32.mxu0 0.0
      %3816 = vmatmul.mubr.f32.gmra.mrb[0].mxu0 %v3674
      %v3817 = vpop.f32.mrb[0].mxu0
      %v3818 = vadd.f32 0.0, %v3817
      %v3819 = vpop.f32.mrb[0].mxu0
      %3820 = vdwg.mxu0
      %v3822 = vsel %vm3627, %v3359, 0
      %v3825 = vsel %vm3627, %v3360, 0
      %v3828 = vsel %vm3627, %v3361, 0
      %v3831 = vsel %vm3627, %v3362, 0
      %v3834 = vsel %vm3627, %v3363, 0
      %v3837 = vsel %vm3627, %v3364, 0
      %v3840 = vsel %vm3627, %v3365, 0
      %v3843 = vsel %vm3627, %v3366, 0
      %v3846 = vsel %vm3627, %v3367, 0
      %v3849 = vsel %vm3627, %v3368, 0
      %v3852 = vsel %vm3627, %v3369, 0
      %v3855 = vsel %vm3627, %v3370, 0
      %v3858 = vsel %vm3627, %v3371, 0
      %v3861 = vsel %vm3627, %v3372, 0
      %v3864 = vsel %vm3627, %v3373, 0
      %v3867 = vsel %vm3627, %v3374, 0
      %3869 = vmatprep.subr.mxu0 0.0
      %3870 = vmatpush1.msra.mxu0 %v3375
      %3871 = vmatprep.subr.mxu0 0.0
      %3872 = vmatpush1.msra.mxu0 %v3376
      %3873 = vmatprep.subr.mxu0 0.0
      %3874 = vmatpush1.msra.mxu0 %v3377
      %3875 = vmatprep.subr.mxu0 0.0
      %3876 = vmatpush1.msra.mxu0 0.0
      %3877 = vmatprep.subr.mxu0 0.0
      %3878 = vmatpush1.msra.mxu0 0.0
      %3879 = vmatprep.subr.mxu0 0.0
      %3880 = vmatpush1.msra.mxu0 0.0
      %3881 = vmatprep.subr.mxu0 0.0
      %3882 = vmatpush1.msra.mxu0 0.0
      %3883 = vmatprep.subr.mxu0 0.0
      %3884 = vmatpush1.msra.mxu0 0.0
      %3885 = vmatprep.subr.mxu0 0.0
      %3886 = vmatpush1.msra.mxu0 0.0
      %3887 = vmatprep.subr.mxu0 0.0
      %3888 = vmatpush1.msra.mxu0 0.0
      %3889 = vmatprep.subr.mxu0 0.0
      %3890 = vmatpush1.msra.mxu0 0.0
      %3891 = vmatprep.subr.mxu0 0.0
      %3892 = vmatpush1.msra.mxu0 0.0
      %3893 = vmatprep.subr.mxu0 0.0
      %3894 = vmatpush1.msra.mxu0 0.0
      %3895 = vmatprep.subr.mxu0 0.0
      %3896 = vmatpush1.msra.mxu0 0.0
      %3897 = vmatprep.subr.mxu0 0.0
      %3898 = vmatpush1.msra.mxu0 0.0
      %3899 = vmatprep.subr.mxu0 0.0
      %3900 = vmatpush1.msra.mxu0 0.0
      %3901 = vmatprep.subr.mxu0 0.0
      %3902 = vmatpush1.msra.mxu0 0.0
      %3903 = vmatprep.subr.mxu0 0.0
      %3904 = vmatpush1.msra.mxu0 0.0
      %3905 = vmatprep.subr.mxu0 0.0
      %3906 = vmatpush1.msra.mxu0 0.0
      %3907 = vmatprep.subr.mxu0 0.0
      %3908 = vmatpush1.msra.mxu0 0.0
      %3909 = vmatprep.subr.mxu0 0.0
      %3910 = vmatpush1.msra.mxu0 0.0
      %3911 = vmatprep.subr.mxu0 0.0
      %3912 = vmatpush1.msra.mxu0 0.0
      %3913 = vmatprep.subr.mxu0 0.0
      %3914 = vmatpush1.msra.mxu0 0.0
      %3915 = vmatprep.subr.mxu0 0.0
      %3916 = vmatpush1.msra.mxu0 0.0
      %3917 = vmatprep.subr.mxu0 0.0
      %3918 = vmatpush1.msra.mxu0 0.0
      %3919 = vmatprep.subr.mxu0 0.0
      %3920 = vmatpush1.msra.mxu0 0.0
      %3921 = vmatprep.subr.mxu0 0.0
      %3922 = vmatpush1.msra.mxu0 0.0
      %3923 = vmatprep.subr.mxu0 0.0
      %3924 = vmatpush1.msra.mxu0 0.0
      %3925 = vmatprep.subr.mxu0 0.0
      %3926 = vmatpush1.msra.mxu0 0.0
      %3927 = vmatprep.subr.mxu0 0.0
      %3928 = vmatpush1.msra.mxu0 0.0
      %3929 = vmatprep.subr.mxu0 0.0
      %3930 = vmatpush1.msra.mxu0 0.0
      %3931 = vmatprep.subr.mxu0 0.0
      %3932 = vmatpush1.msra.mxu0 0.0
      %3933 = vmatprep.mubr.f32.mxu0 0.0
      %3934 = vmatmul.mubr.f32.gmra.mrb[0].mxu0 %v3822
      %v3935 = vpop.f32.mrb[0].mxu0
      %v3936 = vadd.f32 %v3743, %v3935
      %v3937 = vpop.f32.mrb[0].mxu0
      %3938 = vmatprep.mubr.f32.mxu0 0.0
      %3939 = vmatmul.mubr.f32.gmra.mrb[0].mxu0 %v3825
      %v3940 = vpop.f32.mrb[0].mxu0
      %v3941 = vadd.f32 %v3748, %v3940
      %v3942 = vpop.f32.mrb[0].mxu0
      %3943 = vmatprep.mubr.f32.mxu0 0.0
      %3944 = vmatmul.mubr.f32.gmra.mrb[0].mxu0 %v3828
      %v3945 = vpop.f32.mrb[0].mxu0
      %v3946 = vadd.f32 %v3753, %v3945
      %v3947 = vpop.f32.mrb[0].mxu0
      %3948 = vmatprep.mubr.f32.mxu0 0.0
      %3949 = vmatmul.mubr.f32.gmra.mrb[0].mxu0 %v3831
      %v3950 = vpop.f32.mrb[0].mxu0
      %v3951 = vadd.f32 %v3758, %v3950
      %v3952 = vpop.f32.mrb[0].mxu0
      %3953 = vmatprep.mubr.f32.mxu0 0.0
      %3954 = vmatmul.mubr.f32.gmra.mrb[0].mxu0 %v3834
      %v3955 = vpop.f32.mrb[0].mxu0
      %v3956 = vadd.f32 %v3763, %v3955
      %v3957 = vpop.f32.mrb[0].mxu0
      %3958 = vmatprep.mubr.f32.mxu0 0.0
      %3959 = vmatmul.mubr.f32.gmra.mrb[0].mxu0 %v3837
      %v3960 = vpop.f32.mrb[0].mxu0
      %v3961 = vadd.f32 %v3768, %v3960
      %v3962 = vpop.f32.mrb[0].mxu0
      %3963 = vmatprep.mubr.f32.mxu0 0.0
      %3964 = vmatmul.mubr.f32.gmra.mrb[0].mxu0 %v3840
      %v3965 = vpop.f32.mrb[0].mxu0
      %v3966 = vadd.f32 %v3773, %v3965
      %v3967 = vpop.f32.mrb[0].mxu0
      %3968 = vmatprep.mubr.f32.mxu0 0.0
      %3969 = vmatmul.mubr.f32.gmra.mrb[0].mxu0 %v3843
      %v3970 = vpop.f32.mrb[0].mxu0
      %v3971 = vadd.f32 %v3778, %v3970
      %v3972 = vpop.f32.mrb[0].mxu0
      %3973 = vmatprep.mubr.f32.mxu0 0.0
      %3974 = vmatmul.mubr.f32.gmra.mrb[0].mxu0 %v3846
      %v3975 = vpop.f32.mrb[0].mxu0
      %v3976 = vadd.f32 %v3783, %v3975
      %v3977 = vpop.f32.mrb[0].mxu0
      %3978 = vmatprep.mubr.f32.mxu0 0.0
      %3979 = vmatmul.mubr.f32.gmra.mrb[0].mxu0 %v3849
      %v3980 = vpop.f32.mrb[0].mxu0
      %v3981 = vadd.f32 %v3788, %v3980
      %v3982 = vpop.f32.mrb[0].mxu0
      %3983 = vmatprep.mubr.f32.mxu0 0.0
      %3984 = vmatmul.mubr.f32.gmra.mrb[0].mxu0 %v3852
      %v3985 = vpop.f32.mrb[0].mxu0
      %v3986 = vadd.f32 %v3793, %v3985
      %v3987 = vpop.f32.mrb[0].mxu0
      %3988 = vmatprep.mubr.f32.mxu0 0.0
      %3989 = vmatmul.mubr.f32.gmra.mrb[0].mxu0 %v3855
      %v3990 = vpop.f32.mrb[0].mxu0
      %v3991 = vadd.f32 %v3798, %v3990
      %v3992 = vpop.f32.mrb[0].mxu0
      %3993 = vmatprep.mubr.f32.mxu0 0.0
      %3994 = vmatmul.mubr.f32.gmra.mrb[0].mxu0 %v3858
      %v3995 = vpop.f32.mrb[0].mxu0
      %v3996 = vadd.f32 %v3803, %v3995
      %v3997 = vpop.f32.mrb[0].mxu0
      %3998 = vmatprep.mubr.f32.mxu0 0.0
      %3999 = vmatmul.mubr.f32.gmra.mrb[0].mxu0 %v3861
      %v4000 = vpop.f32.mrb[0].mxu0
      %v4001 = vadd.f32 %v3808, %v4000
      %v4002 = vpop.f32.mrb[0].mxu0
      %4003 = vmatprep.mubr.f32.mxu0 0.0
      %4004 = vmatmul.mubr.f32.gmra.mrb[0].mxu0 %v3864
      %v4005 = vpop.f32.mrb[0].mxu0
      %v4006 = vadd.f32 %v3813, %v4005
      %v4007 = vpop.f32.mrb[0].mxu0
      %4008 = vmatprep.mubr.f32.mxu0 0.0
      %4009 = vmatmul.mubr.f32.gmra.mrb[0].mxu0 %v3867
      %v4010 = vpop.f32.mrb[0].mxu0
      %v4011 = vadd.f32 %v3818, %v4010
      %v4012 = vpop.f32.mrb[0].mxu0
      %4013 = vdwg.mxu0
      %s4014 = sadd.s32 0, 40
      %s4015 = sadd.s32 0, 39
      %s4016 = scalar_lea.vmem [#allocation3], %s4015
      %v4017 = vld [vmem:[%s4016] sm:$0xff]
      %v4018 = vld [vmem:[%s4016 + $0x8] sm:$0xff]
      %v4019 = vld [vmem:[%s4016 + $0x10] sm:$0xff]
      %v4020 = vld [vmem:[%s4016 + $0x18] sm:$0xff]
      %v4021 = vld [vmem:[%s4016 + $0x20] sm:$0xff]
      %v4022 = vld [vmem:[%s4016 + $0x28] sm:$0xff]
      %v4023 = vld [vmem:[%s4016 + $0x30] sm:$0xff]
      %v4024 = vld [vmem:[%s4016 + $0x38] sm:$0xff]
      %v4025 = vld [vmem:[%s4016 + $0x40] sm:$0xff]
      %v4026 = vld [vmem:[%s4016 + $0x48] sm:$0xff]
      %v4027 = vld [vmem:[%s4016 + $0x50] sm:$0xff]
      %v4028 = vld [vmem:[%s4016 + $0x58] sm:$0xff]
      %v4029 = vld [vmem:[%s4016 + $0x60] sm:$0xff]
      %v4030 = vld [vmem:[%s4016 + $0x68] sm:$0xff]
      %v4031 = vld [vmem:[%s4016 + $0x70] sm:$0xff]
      %v4032 = vld [vmem:[%s4016 + $0x78] sm:$0xff]
      %v4033 = vmul.f32 %v4017, %v3007
      %v4034 = vmul.f32 %v4018, %v3012
      %v4035 = vmul.f32 %v4019, %v3017
      %v4036 = vmul.f32 %v4020, %v3022
      %v4037 = vmul.f32 %v4021, %v3027
      %v4038 = vmul.f32 %v4022, %v3032
      %v4039 = vmul.f32 %v4023, %v3037
      %v4040 = vmul.f32 %v4024, %v3042
      %v4041 = vmul.f32 %v4025, %v3047
      %v4042 = vmul.f32 %v4026, %v3052
      %v4043 = vmul.f32 %v4027, %v3057
      %v4044 = vmul.f32 %v4028, %v3062
      %v4045 = vmul.f32 %v4029, %v3067
      %v4046 = vmul.f32 %v4030, %v3072
      %v4047 = vmul.f32 %v4031, %v3077
      %v4048 = vmul.f32 %v4032, %v3082
      %s4049 = scalar_lea.vmem [#allocation3], %s4014
      %v4050 = vld [vmem:[%s4049] sm:$0xff]
      %v4051 = vld [vmem:[%s4049 + $0x8] sm:$0xff]
      %v4052 = vld [vmem:[%s4049 + $0x10] sm:$0xff]
      %v4053 = vld [vmem:[%s4049 + $0x18] sm:$0xff]
      %v4054 = vld [vmem:[%s4049 + $0x20] sm:$0xff]
      %v4055 = vld [vmem:[%s4049 + $0x28] sm:$0xff]
      %v4056 = vld [vmem:[%s4049 + $0x30] sm:$0xff]
      %v4057 = vld [vmem:[%s4049 + $0x38] sm:$0xff]
      %v4058 = vld [vmem:[%s4049 + $0x40] sm:$0xff]
      %v4059 = vld [vmem:[%s4049 + $0x48] sm:$0xff]
      %v4060 = vld [vmem:[%s4049 + $0x50] sm:$0xff]
      %v4061 = vld [vmem:[%s4049 + $0x58] sm:$0xff]
      %v4062 = vld [vmem:[%s4049 + $0x60] sm:$0xff]
      %v4063 = vld [vmem:[%s4049 + $0x68] sm:$0xff]
      %v4064 = vld [vmem:[%s4049 + $0x70] sm:$0xff]
      %v4065 = vld [vmem:[%s4049 + $0x78] sm:$0xff]
      %s4066 = sadd.s32 0, 41
      %s4067 = scalar_lea.vmem [#allocation3], %s4066
      %v4068 = vld [vmem:[%s4067] sm:$0xff]
      %v4069 = vld [vmem:[%s4067 + $0x8] sm:$0xff]
      %v4070 = vld [vmem:[%s4067 + $0x10] sm:$0xff]
      %v4071 = vld [vmem:[%s4067 + $0x18] sm:$0xff]
      %v4072 = vld [vmem:[%s4067 + $0x20] sm:$0xff]
      %v4073 = vld [vmem:[%s4067 + $0x28] sm:$0xff]
      %v4074 = vld [vmem:[%s4067 + $0x30] sm:$0xff]
      %v4075 = vld [vmem:[%s4067 + $0x38] sm:$0xff]
      %v4076 = vld [vmem:[%s4067 + $0x40] sm:$0xff]
      %v4077 = vld [vmem:[%s4067 + $0x48] sm:$0xff]
      %v4078 = vld [vmem:[%s4067 + $0x50] sm:$0xff]
      %v4079 = vld [vmem:[%s4067 + $0x58] sm:$0xff]
      %v4080 = vld [vmem:[%s4067 + $0x60] sm:$0xff]
      %v4081 = vld [vmem:[%s4067 + $0x68] sm:$0xff]
      %v4082 = vld [vmem:[%s4067 + $0x70] sm:$0xff]
      %v4083 = vld [vmem:[%s4067 + $0x78] sm:$0xff]
      %v4084 = vmul.f32 %v4068, %v3137
      %v4085 = vmul.f32 %v4069, %v3141
      %v4086 = vmul.f32 %v4070, %v3145
      %v4087 = vmul.f32 %v4071, %v3149
      %v4088 = vmul.f32 %v4072, %v3153
      %v4089 = vmul.f32 %v4073, %v3157
      %v4090 = vmul.f32 %v4074, %v3161
      %v4091 = vmul.f32 %v4075, %v3165
      %v4092 = vmul.f32 %v4076, %v3169
      %v4093 = vmul.f32 %v4077, %v3173
      %v4094 = vmul.f32 %v4078, %v3177
      %v4095 = vmul.f32 %v4079, %v3181
      %v4096 = vmul.f32 %v4080, %v3185
      %v4097 = vmul.f32 %v4081, %v3189
      %v4098 = vmul.f32 %v4082, %v3193
      %v4099 = vmul.f32 %v4083, %v3197
      %4116 = vrot.lane.b32.xlu0 %v4050, 8
      %v4117 = vpop.permute.xlu0 %4116
      %4118 = vrot.lane.b32.xlu0 %v4051, 8
      %v4119 = vpop.permute.xlu0 %4118
      %4120 = vrot.lane.b32.xlu0 %v4052, 8
      %v4121 = vpop.permute.xlu0 %4120
      %4122 = vrot.lane.b32.xlu0 %v4053, 8
      %v4123 = vpop.permute.xlu0 %4122
      %4124 = vrot.lane.b32.xlu0 %v4054, 8
      %v4125 = vpop.permute.xlu0 %4124
      %4126 = vrot.lane.b32.xlu0 %v4055, 8
      %v4127 = vpop.permute.xlu0 %4126
      %4128 = vrot.lane.b32.xlu0 %v4056, 8
      %v4129 = vpop.permute.xlu0 %4128
      %4130 = vrot.lane.b32.xlu0 %v4057, 8
      %v4131 = vpop.permute.xlu0 %4130
      %4132 = vrot.lane.b32.xlu0 %v4058, 8
      %v4133 = vpop.permute.xlu0 %4132
      %4134 = vrot.lane.b32.xlu0 %v4059, 8
      %v4135 = vpop.permute.xlu0 %4134
      %4136 = vrot.lane.b32.xlu0 %v4060, 8
      %v4137 = vpop.permute.xlu0 %4136
      %4138 = vrot.lane.b32.xlu0 %v4061, 8
      %v4139 = vpop.permute.xlu0 %4138
      %4140 = vrot.lane.b32.xlu0 %v4062, 8
      %v4141 = vpop.permute.xlu0 %4140
      %4142 = vrot.lane.b32.xlu0 %v4063, 8
      %v4143 = vpop.permute.xlu0 %4142
      %4144 = vrot.lane.b32.xlu0 %v4064, 8
      %v4145 = vpop.permute.xlu0 %4144
      %4146 = vrot.lane.b32.xlu0 %v4065, 8
      %v4147 = vpop.permute.xlu0 %4146
      %4180 = vrot.lane.b32.xlu0 %v4084, 16
      %v4181 = vpop.permute.xlu0 %4180
      %4182 = vrot.lane.b32.xlu0 %v4085, 16
      %v4183 = vpop.permute.xlu0 %4182
      %4184 = vrot.lane.b32.xlu0 %v4086, 16
      %v4185 = vpop.permute.xlu0 %4184
      %4186 = vrot.lane.b32.xlu0 %v4087, 16
      %v4187 = vpop.permute.xlu0 %4186
      %4188 = vrot.lane.b32.xlu0 %v4088, 16
      %v4189 = vpop.permute.xlu0 %4188
      %4190 = vrot.lane.b32.xlu0 %v4089, 16
      %v4191 = vpop.permute.xlu0 %4190
      %4192 = vrot.lane.b32.xlu0 %v4090, 16
      %v4193 = vpop.permute.xlu0 %4192
      %4194 = vrot.lane.b32.xlu0 %v4091, 16
      %v4195 = vpop.permute.xlu0 %4194
      %4196 = vrot.lane.b32.xlu0 %v4092, 16
      %v4197 = vpop.permute.xlu0 %4196
      %4198 = vrot.lane.b32.xlu0 %v4093, 16
      %v4199 = vpop.permute.xlu0 %4198
      %4200 = vrot.lane.b32.xlu0 %v4094, 16
      %v4201 = vpop.permute.xlu0 %4200
      %4202 = vrot.lane.b32.xlu0 %v4095, 16
      %v4203 = vpop.permute.xlu0 %4202
      %4204 = vrot.lane.b32.xlu0 %v4096, 16
      %v4205 = vpop.permute.xlu0 %4204
      %4206 = vrot.lane.b32.xlu0 %v4097, 16
      %v4207 = vpop.permute.xlu0 %4206
      %4208 = vrot.lane.b32.xlu0 %v4098, 16
      %v4209 = vpop.permute.xlu0 %4208
      %4210 = vrot.lane.b32.xlu0 %v4099, 16
      %v4211 = vpop.permute.xlu0 %4210
      %v4228 = vsel %vm406, %v4033, %v4117
      %v4229 = vsel %vm406, %v4034, %v4119
      %v4230 = vsel %vm406, %v4035, %v4121
      %v4231 = vsel %vm406, %v4036, %v4123
      %v4232 = vsel %vm406, %v4037, %v4125
      %v4233 = vsel %vm406, %v4038, %v4127
      %v4234 = vsel %vm406, %v4039, %v4129
      %v4235 = vsel %vm406, %v4040, %v4131
      %v4236 = vsel %vm406, %v4041, %v4133
      %v4237 = vsel %vm406, %v4042, %v4135
      %v4238 = vsel %vm406, %v4043, %v4137
      %v4239 = vsel %vm406, %v4044, %v4139
      %v4240 = vsel %vm406, %v4045, %v4141
      %v4241 = vsel %vm406, %v4046, %v4143
      %v4242 = vsel %vm406, %v4047, %v4145
      %v4243 = vsel %vm406, %v4048, %v4147
      %v4244 = vsel %vm403, %v4228, %v4181
      %v4245 = vsel %vm403, %v4229, %v4183
      %v4246 = vsel %vm403, %v4230, %v4185
      %v4247 = vsel %vm403, %v4231, %v4187
      %v4248 = vsel %vm403, %v4232, %v4189
      %v4249 = vsel %vm403, %v4233, %v4191
      %v4250 = vsel %vm403, %v4234, %v4193
      %v4251 = vsel %vm403, %v4235, %v4195
      %v4252 = vsel %vm403, %v4236, %v4197
      %v4253 = vsel %vm403, %v4237, %v4199
      %v4254 = vsel %vm403, %v4238, %v4201
      %v4255 = vsel %vm403, %v4239, %v4203
      %v4256 = vsel %vm403, %v4240, %v4205
      %v4257 = vsel %vm403, %v4241, %v4207
      %v4258 = vsel %vm403, %v4242, %v4209
      %v4259 = vsel %vm403, %v4243, %v4211
      %v4260 = vld [vmem:[%s7 + $0x30] sm:$0xff]
      %v4261 = vld [vmem:[%s7 + $0x38] sm:$0xff]
      %v4262 = vld [vmem:[%s7 + $0x40] sm:$0xff]
      %v4264 = vsel %vm3627, %v4244, 0
      %v4267 = vsel %vm3627, %v4245, 0
      %v4270 = vsel %vm3627, %v4246, 0
      %v4273 = vsel %vm3627, %v4247, 0
      %v4276 = vsel %vm3627, %v4248, 0
      %v4279 = vsel %vm3627, %v4249, 0
      %v4282 = vsel %vm3627, %v4250, 0
      %v4285 = vsel %vm3627, %v4251, 0
      %v4288 = vsel %vm3627, %v4252, 0
      %v4291 = vsel %vm3627, %v4253, 0
      %v4294 = vsel %vm3627, %v4254, 0
      %v4297 = vsel %vm3627, %v4255, 0
      %v4300 = vsel %vm3627, %v4256, 0
      %v4303 = vsel %vm3627, %v4257, 0
      %v4306 = vsel %vm3627, %v4258, 0
      %v4309 = vsel %vm3627, %v4259, 0
      %4311 = vmatprep.subr.mxu0 0.0
      %4312 = vmatpush1.msra.mxu0 %v4260
      %4313 = vmatprep.subr.mxu0 0.0
      %4314 = vmatpush1.msra.mxu0 %v4261
      %4315 = vmatprep.subr.mxu0 0.0
      %4316 = vmatpush1.msra.mxu0 %v4262
      %4317 = vmatprep.subr.mxu0 0.0
      %4318 = vmatpush1.msra.mxu0 0.0
      %4319 = vmatprep.subr.mxu0 0.0
      %4320 = vmatpush1.msra.mxu0 0.0
      %4321 = vmatprep.subr.mxu0 0.0
      %4322 = vmatpush1.msra.mxu0 0.0
      %4323 = vmatprep.subr.mxu0 0.0
      %4324 = vmatpush1.msra.mxu0 0.0
      %4325 = vmatprep.subr.mxu0 0.0
      %4326 = vmatpush1.msra.mxu0 0.0
      %4327 = vmatprep.subr.mxu0 0.0
      %4328 = vmatpush1.msra.mxu0 0.0
      %4329 = vmatprep.subr.mxu0 0.0
      %4330 = vmatpush1.msra.mxu0 0.0
      %4331 = vmatprep.subr.mxu0 0.0
      %4332 = vmatpush1.msra.mxu0 0.0
      %4333 = vmatprep.subr.mxu0 0.0
      %4334 = vmatpush1.msra.mxu0 0.0
      %4335 = vmatprep.subr.mxu0 0.0
      %4336 = vmatpush1.msra.mxu0 0.0
      %4337 = vmatprep.subr.mxu0 0.0
      %4338 = vmatpush1.msra.mxu0 0.0
      %4339 = vmatprep.subr.mxu0 0.0
      %4340 = vmatpush1.msra.mxu0 0.0
      %4341 = vmatprep.subr.mxu0 0.0
      %4342 = vmatpush1.msra.mxu0 0.0
      %4343 = vmatprep.subr.mxu0 0.0
      %4344 = vmatpush1.msra.mxu0 0.0
      %4345 = vmatprep.subr.mxu0 0.0
      %4346 = vmatpush1.msra.mxu0 0.0
      %4347 = vmatprep.subr.mxu0 0.0
      %4348 = vmatpush1.msra.mxu0 0.0
      %4349 = vmatprep.subr.mxu0 0.0
      %4350 = vmatpush1.msra.mxu0 0.0
      %4351 = vmatprep.subr.mxu0 0.0
      %4352 = vmatpush1.msra.mxu0 0.0
      %4353 = vmatprep.subr.mxu0 0.0
      %4354 = vmatpush1.msra.mxu0 0.0
      %4355 = vmatprep.subr.mxu0 0.0
      %4356 = vmatpush1.msra.mxu0 0.0
      %4357 = vmatprep.subr.mxu0 0.0
      %4358 = vmatpush1.msra.mxu0 0.0
      %4359 = vmatprep.subr.mxu0 0.0
      %4360 = vmatpush1.msra.mxu0 0.0
      %4361 = vmatprep.subr.mxu0 0.0
      %4362 = vmatpush1.msra.mxu0 0.0
      %4363 = vmatprep.subr.mxu0 0.0
      %4364 = vmatpush1.msra.mxu0 0.0
      %4365 = vmatprep.subr.mxu0 0.0
      %4366 = vmatpush1.msra.mxu0 0.0
      %4367 = vmatprep.subr.mxu0 0.0
      %4368 = vmatpush1.msra.mxu0 0.0
      %4369 = vmatprep.subr.mxu0 0.0
      %4370 = vmatpush1.msra.mxu0 0.0
      %4371 = vmatprep.subr.mxu0 0.0
      %4372 = vmatpush1.msra.mxu0 0.0
      %4373 = vmatprep.subr.mxu0 0.0
      %4374 = vmatpush1.msra.mxu0 0.0
      %4375 = vmatprep.mubr.f32.mxu0 0.0
      %4376 = vmatmul.mubr.f32.gmra.mrb[0].mxu0 %v4264
      %v4377 = vpop.f32.mrb[0].mxu0
      %v4378 = vadd.f32 0.0, %v4377
      %v4379 = vpop.f32.mrb[0].mxu0
      %4380 = vmatprep.mubr.f32.mxu0 0.0
      %4381 = vmatmul.mubr.f32.gmra.mrb[0].mxu0 %v4267
      %v4382 = vpop.f32.mrb[0].mxu0
      %v4383 = vadd.f32 0.0, %v4382
      %v4384 = vpop.f32.mrb[0].mxu0
      %4385 = vmatprep.mubr.f32.mxu0 0.0
      %4386 = vmatmul.mubr.f32.gmra.mrb[0].mxu0 %v4270
      %v4387 = vpop.f32.mrb[0].mxu0
      %v4388 = vadd.f32 0.0, %v4387
      %v4389 = vpop.f32.mrb[0].mxu0
      %4390 = vmatprep.mubr.f32.mxu0 0.0
      %4391 = vmatmul.mubr.f32.gmra.mrb[0].mxu0 %v4273
      %v4392 = vpop.f32.mrb[0].mxu0
      %v4393 = vadd.f32 0.0, %v4392
      %v4394 = vpop.f32.mrb[0].mxu0
      %4395 = vmatprep.mubr.f32.mxu0 0.0
      %4396 = vmatmul.mubr.f32.gmra.mrb[0].mxu0 %v4276
      %v4397 = vpop.f32.mrb[0].mxu0
      %v4398 = vadd.f32 0.0, %v4397
      %v4399 = vpop.f32.mrb[0].mxu0
      %4400 = vmatprep.mubr.f32.mxu0 0.0
      %4401 = vmatmul.mubr.f32.gmra.mrb[0].mxu0 %v4279
      %v4402 = vpop.f32.mrb[0].mxu0
      %v4403 = vadd.f32 0.0, %v4402
      %v4404 = vpop.f32.mrb[0].mxu0
      %4405 = vmatprep.mubr.f32.mxu0 0.0
      %4406 = vmatmul.mubr.f32.gmra.mrb[0].mxu0 %v4282
      %v4407 = vpop.f32.mrb[0].mxu0
      %v4408 = vadd.f32 0.0, %v4407
      %v4409 = vpop.f32.mrb[0].mxu0
      %4410 = vmatprep.mubr.f32.mxu0 0.0
      %4411 = vmatmul.mubr.f32.gmra.mrb[0].mxu0 %v4285
      %v4412 = vpop.f32.mrb[0].mxu0
      %v4413 = vadd.f32 0.0, %v4412
      %v4414 = vpop.f32.mrb[0].mxu0
      %4415 = vmatprep.mubr.f32.mxu0 0.0
      %4416 = vmatmul.mubr.f32.gmra.mrb[0].mxu0 %v4288
      %v4417 = vpop.f32.mrb[0].mxu0
      %v4418 = vadd.f32 0.0, %v4417
      %v4419 = vpop.f32.mrb[0].mxu0
      %4420 = vmatprep.mubr.f32.mxu0 0.0
      %4421 = vmatmul.mubr.f32.gmra.mrb[0].mxu0 %v4291
      %v4422 = vpop.f32.mrb[0].mxu0
      %v4423 = vadd.f32 0.0, %v4422
      %v4424 = vpop.f32.mrb[0].mxu0
      %4425 = vmatprep.mubr.f32.mxu0 0.0
      %4426 = vmatmul.mubr.f32.gmra.mrb[0].mxu0 %v4294
      %v4427 = vpop.f32.mrb[0].mxu0
      %v4428 = vadd.f32 0.0, %v4427
      %v4429 = vpop.f32.mrb[0].mxu0
      %4430 = vmatprep.mubr.f32.mxu0 0.0
      %4431 = vmatmul.mubr.f32.gmra.mrb[0].mxu0 %v4297
      %v4432 = vpop.f32.mrb[0].mxu0
      %v4433 = vadd.f32 0.0, %v4432
      %v4434 = vpop.f32.mrb[0].mxu0
      %4435 = vmatprep.mubr.f32.mxu0 0.0
      %4436 = vmatmul.mubr.f32.gmra.mrb[0].mxu0 %v4300
      %v4437 = vpop.f32.mrb[0].mxu0
      %v4438 = vadd.f32 0.0, %v4437
      %v4439 = vpop.f32.mrb[0].mxu0
      %4440 = vmatprep.mubr.f32.mxu0 0.0
      %4441 = vmatmul.mubr.f32.gmra.mrb[0].mxu0 %v4303
      %v4442 = vpop.f32.mrb[0].mxu0
      %v4443 = vadd.f32 0.0, %v4442
      %v4444 = vpop.f32.mrb[0].mxu0
      %4445 = vmatprep.mubr.f32.mxu0 0.0
      %4446 = vmatmul.mubr.f32.gmra.mrb[0].mxu0 %v4306
      %v4447 = vpop.f32.mrb[0].mxu0
      %v4448 = vadd.f32 0.0, %v4447
      %v4449 = vpop.f32.mrb[0].mxu0
      %4450 = vmatprep.mubr.f32.mxu0 0.0
      %4451 = vmatmul.mubr.f32.gmra.mrb[0].mxu0 %v4309
      %v4452 = vpop.f32.mrb[0].mxu0
      %v4453 = vadd.f32 0.0, %v4452
      %v4454 = vpop.f32.mrb[0].mxu0
      %4455 = vdwg.mxu0
      %v4456 = vadd.f32 %v3936, %v4378
      %v4457 = vadd.f32 %v3941, %v4383
      %v4458 = vadd.f32 %v3946, %v4388
      %v4459 = vadd.f32 %v3951, %v4393
      %v4460 = vadd.f32 %v3956, %v4398
      %v4461 = vadd.f32 %v3961, %v4403
      %v4462 = vadd.f32 %v3966, %v4408
      %v4463 = vadd.f32 %v3971, %v4413
      %v4464 = vadd.f32 %v3976, %v4418
      %v4465 = vadd.f32 %v3981, %v4423
      %v4466 = vadd.f32 %v3986, %v4428
      %v4467 = vadd.f32 %v3991, %v4433
      %v4468 = vadd.f32 %v3996, %v4438
      %v4469 = vadd.f32 %v4001, %v4443
      %v4470 = vadd.f32 %v4006, %v4448
      %v4471 = vadd.f32 %v4011, %v4453
      %v4473 = vlaneseq
      %v4474 = vshrl.u32 %v4473, 7
      %v4475 = vsub.s32 0, %v4474
      %v4476 = vrot.slane %v2985, %v4475
      %v4478 = vadd.f32 %v4456, %v4476
      %v4479 = vadd.f32 %v4457, %v4476
      %v4480 = vadd.f32 %v4458, %v4476
      %v4481 = vadd.f32 %v4459, %v4476
      %v4482 = vadd.f32 %v4460, %v4476
      %v4483 = vadd.f32 %v4461, %v4476
      %v4484 = vadd.f32 %v4462, %v4476
      %v4485 = vadd.f32 %v4463, %v4476
      %v4486 = vadd.f32 %v4464, %v4476
      %v4487 = vadd.f32 %v4465, %v4476
      %v4488 = vadd.f32 %v4466, %v4476
      %v4489 = vadd.f32 %v4467, %v4476
      %v4490 = vadd.f32 %v4468, %v4476
      %v4491 = vadd.f32 %v4469, %v4476
      %v4492 = vadd.f32 %v4470, %v4476
      %v4493 = vadd.f32 %v4471, %v4476
      %v4494 = vmax.f32 %v4478, 0.0
      %v4495 = vmax.f32 %v4479, 0.0
      %v4496 = vmax.f32 %v4480, 0.0
      %v4497 = vmax.f32 %v4481, 0.0
      %v4498 = vmax.f32 %v4482, 0.0
      %v4499 = vmax.f32 %v4483, 0.0
      %v4500 = vmax.f32 %v4484, 0.0
      %v4501 = vmax.f32 %v4485, 0.0
      %v4502 = vmax.f32 %v4486, 0.0
      %v4503 = vmax.f32 %v4487, 0.0
      %v4504 = vmax.f32 %v4488, 0.0
      %v4505 = vmax.f32 %v4489, 0.0
      %v4506 = vmax.f32 %v4490, 0.0
      %v4507 = vmax.f32 %v4491, 0.0
      %v4508 = vmax.f32 %v4492, 0.0
      %v4509 = vmax.f32 %v4493, 0.0
      %4510 = vst.msk [vmem:[%s402] sm:$0xff] %vm406, %v4494
      %4511 = vst.msk [vmem:[%s402 + $0x8] sm:$0xff] %vm406, %v4495
      %4512 = vst.msk [vmem:[%s402 + $0x10] sm:$0xff] %vm406, %v4496
      %4513 = vst.msk [vmem:[%s402 + $0x18] sm:$0xff] %vm406, %v4497
      %4514 = vst.msk [vmem:[%s402 + $0x20] sm:$0xff] %vm406, %v4498
      %4515 = vst.msk [vmem:[%s402 + $0x28] sm:$0xff] %vm406, %v4499
      %4516 = vst.msk [vmem:[%s402 + $0x30] sm:$0xff] %vm406, %v4500
      %4517 = vst.msk [vmem:[%s402 + $0x38] sm:$0xff] %vm406, %v4501
      %4518 = vst.msk [vmem:[%s402 + $0x40] sm:$0xff] %vm406, %v4502
      %4519 = vst.msk [vmem:[%s402 + $0x48] sm:$0xff] %vm406, %v4503
      %4520 = vst.msk [vmem:[%s402 + $0x50] sm:$0xff] %vm406, %v4504
      %4521 = vst.msk [vmem:[%s402 + $0x58] sm:$0xff] %vm406, %v4505
      %4522 = vst.msk [vmem:[%s402 + $0x60] sm:$0xff] %vm406, %v4506
      %4523 = vst.msk [vmem:[%s402 + $0x68] sm:$0xff] %vm406, %v4507
      %4524 = vst.msk [vmem:[%s402 + $0x70] sm:$0xff] %vm406, %v4508
      %4525 = vst.msk [vmem:[%s402 + $0x78] sm:$0xff] %vm406, %v4509
      %p4526 = scmp.lt.s32.totalorder %s24, 1
      %s4527 = scalar_select %p4526, %s24, 1
      %p4528 = scmp.lt.s32.totalorder %s25, 1
      %s4529 = scalar_select %p4528, %s25, 1
      %s4530 = smul.addr %s4529, 16
      %s4531 = smul.addr %s4527, 32
      %s4532 = sadd.s32 %s4530, %s4531
      %s4533 = smul.addr %s4532, 8
      %s4534 = scalar_lea.vmem %s9, %s4533
      // Predicated region
      $region87: #{tpu_custom_call.1} parent=55 // pred_check
        %p4535 = pneg %p255
      $region88: #{tpu_custom_call.1} parent=55 // pred_check_branch
        %4537 = sbr.rel (%p4535) target = $region90
      $region89: #{tpu_custom_call.1} parent=55 // pred_region
        _
      $region90: #{tpu_custom_call.1} parent=55 // pred_fallthru
        _
    $region56: #{tpu_custom_call.1} parent=5 // pred_fallthru
      _
    %p4538 = scmp.le.s32.totalorder 2, %s15
    // Predicated region
    $region91: #{tpu_custom_call.1} parent=5 // pred_check
      %p4539 = pneg %p4538
    $region92: #{tpu_custom_call.1} parent=5 // pred_check_branch
      %4541 = sbr.rel (%p4539) target = $region94
    $region93: #{tpu_custom_call.1} parent=5 // pred_region
      %s4542 = ssub.s32 %s15, 2
      // Predicated region
      $region95: #{tpu_custom_call.1} parent=93 // pred_check
        %p4543 = pneg %p261
      $region96: #{tpu_custom_call.1} parent=93 // pred_check_branch
        %4545 = sbr.rel (%p4543) target = $region98
      $region97: #{tpu_custom_call.1} parent=93 // pred_region
        %p4546 = scmp.lt.s32.totalorder %s26, 1
        %s4547 = scalar_select %p4546, %s26, 1
        %p4548 = scmp.lt.s32.totalorder %s27, 1
        %s4549 = scalar_select %p4548, %s27, 1
        %s4550 = smul.addr %s4549, 16
        %s4551 = smul.addr %s4547, 32
        %s4552 = sadd.s32 %s4550, %s4551
        %s4553 = smul.addr %s4552, 8
        %s4554 = scalar_lea.vmem %s9, %s4553
      $region98: #{tpu_custom_call.1} parent=93 // pred_fallthru
        _
    $region94: #{tpu_custom_call.1} parent=5 // pred_fallthru
      _
  $region6: #{tpu_custom_call.1} parent=0 // loop_footer
    %s19 = sadd.s32 1, %s15
  $region7: #{tpu_custom_call.1} parent=0 // loop_footer_branch
    %14 = sbr.rel target = $region3
  $region8: #{tpu_custom_call.1} parent=0 // loop_exit
    _

</llo_original>
